<compile_context>
chip_gen: v7x
topology: tpu7x:2x2x1
jax: 0.10.0
libtpu: 0.0.40
codegen_flags: <defaults>
</compile_context>

<pallas_src>
import functools
import math

import jax
import jax.numpy as jnp
from jax.experimental import pallas as pl
from jax.experimental.pallas import tpu as pltpu


# ----------------------------------------------------------------------------
# Single fused forward kernel.
# ----------------------------------------------------------------------------
def _fused_forward_kernel(
    # activations
    vx_ref, ax_ref,
    # visual encoder / bottleneck
    venc_w, venc_b, venc_g, venc_bt,
    vbot_w, vbot_b, vbot_g, vbot_bt,
    # audio encoder / bottleneck
    aenc_w, aenc_b, aenc_g, aenc_bt,
    abot_w, abot_b, abot_g, abot_bt,
    # cross attention (all weights pre-transposed to [Din, Dout])
    wq_ref, wk_ref, wv_ref, bq_ref, bk_ref, bv_ref, wo_ref, bo_ref,
    # fusion (weight pre-split into the vz half and the attn half)
    wf1_ref, wf2_ref, bf_ref, gf_ref, bft_ref,
    # decoders
    vd_w1, vd_b1, vd_w2, vd_b2,
    ad_w1, ad_b1, ad_w2, ad_b2,
    md_w1, md_b1, md_w2, md_b2,
    # outputs
    vz_ref, az_ref, mz_ref, vs_ref, as_ref, ms_ref,
    *, num_heads, B, Sv, Sa):

    f32 = jnp.float32

    def lin(x, w_ref, b_ref):
        # weights are [Din, Dout] -> native MXU [M,K] x [K,N], no in-kernel transpose
        return jnp.dot(x, w_ref[...], preferred_element_type=f32) + b_ref[...]

    def ln(y, g_ref, b_ref):
        mean = jnp.mean(y, axis=-1, keepdims=True)
        var = jnp.mean(jnp.square(y - mean), axis=-1, keepdims=True)
        return (y - mean) * jax.lax.rsqrt(var + 1e-5) * g_ref[...] + b_ref[...]

    # ---- encoders: Linear -> LayerNorm -> ReLU -> Dropout(eval); bottleneck: Linear -> LN
    vh = jnp.maximum(ln(lin(vx_ref[...], venc_w, venc_b), venc_g, venc_bt), 0.0)
    vz = ln(lin(vh, vbot_w, vbot_b), vbot_g, vbot_bt)                    # [Nv, E]
    ah = jnp.maximum(ln(lin(ax_ref[...], aenc_w, aenc_b), aenc_g, aenc_bt), 0.0)
    az = ln(lin(ah, abot_w, abot_b), abot_g, abot_bt)                    # [Na, E]
    vz_ref[...] = vz
    az_ref[...] = az

    # ---- cross multi-head attention (query=vz, key=value=az); attn dropout eval=identity
    E = vz.shape[-1]
    dh = E // num_heads
    scale = 1.0 / math.sqrt(dh)
    q3 = lin(vz, wq_ref, bq_ref).reshape(B, Sv, E)
    k3 = lin(az, wk_ref, bk_ref).reshape(B, Sa, E)
    v3 = lin(az, wv_ref, bv_ref).reshape(B, Sa, E)
    wo_t = wo_ref[...]                                                   # [E, E]
    attn3 = None
    for h in range(num_heads):                 # static unroll; heads are static lane slices
        lo = h * dh
        qh = q3[:, :, lo:lo + dh] * scale                                # [B, Sv, dh]
        kh = k3[:, :, lo:lo + dh]                                        # [B, Sa, dh]
        vvh = v3[:, :, lo:lo + dh]                                       # [B, Sa, dh]
        s = jnp.einsum('bqd,bkd->bqk', qh, kh, preferred_element_type=f32)
        s = s - jnp.max(s, axis=-1, keepdims=True)
        p = jnp.exp(s)
        p = p * pl.reciprocal(jnp.sum(p, axis=-1, keepdims=True), approx=True)
        oh = jnp.einsum('bqk,bkd->bqd', p, vvh, preferred_element_type=f32)  # [B, Sv, dh]
        # fold this head's slice of the output projection in directly (no lane concat)
        wo_h = jnp.broadcast_to(wo_t[lo:lo + dh, :][None, :, :], (B, dh, E))
        contrib = jnp.einsum('bqd,bde->bqe', oh, wo_h, preferred_element_type=f32)
        attn3 = contrib if attn3 is None else attn3 + contrib
    attn = attn3.reshape(B * Sv, E) + bo_ref[...]                        # [Nv, E]

    # ---- fusion: Linear(cat[vz, attn]) == vz @ Wf1 + attn @ Wf2 ; LN ; ReLU ; Dropout(eval)
    mz = (jnp.dot(vz, wf1_ref[...], preferred_element_type=f32)
          + jnp.dot(attn, wf2_ref[...], preferred_element_type=f32) + bf_ref[...])
    mz = jnp.maximum(ln(mz, gf_ref, bft_ref), 0.0)
    mz_ref[...] = mz

    # ---- decoders: Linear -> ReLU -> Linear(H -> 1) as a lane reduction
    def dec(x, w1_ref, b1_ref, w2_ref, b2_ref):
        hdd = jnp.maximum(jnp.dot(x, w1_ref[...], preferred_element_type=f32) + b1_ref[...], 0.0)
        return jnp.sum(hdd * w2_ref[...], axis=-1, keepdims=True) + b2_ref[...]

    vs_ref[...] = dec(vz, vd_w1, vd_b1, vd_w2, vd_b2)
    as_ref[...] = dec(az, ad_w1, ad_b1, ad_w2, ad_b2)
    ms_ref[...] = dec(mz, md_w1, md_b1, md_w2, md_b2)


# ----------------------------------------------------------------------------
# Parameters: PyTorch-layout init + one-time repack into kernel layout.
# ----------------------------------------------------------------------------
def init_params(key, visual_dim=1024, audio_dim=128, hidden_dim=256, bottleneck_dim=128):
    keys = iter(jax.random.split(key, 64))

    def lin(out_d, in_d):
        bound = 1.0 / math.sqrt(in_d)
        w = jax.random.uniform(next(keys), (out_d, in_d), jnp.float32, -bound, bound)
        b = jax.random.uniform(next(keys), (out_d,), jnp.float32, -bound, bound)
        return w, b

    def ln(d):
        return jnp.ones((d,), jnp.float32), jnp.zeros((d,), jnp.float32)

    def lin_ln(out_d, in_d):
        w, b = lin(out_d, in_d)
        g, beta = ln(out_d)
        return (w, b, g, beta)

    p = {}
    p['v_enc'] = lin_ln(hidden_dim, visual_dim)
    p['v_bot'] = lin_ln(bottleneck_dim, hidden_dim)
    p['a_enc'] = lin_ln(hidden_dim, audio_dim)
    p['a_bot'] = lin_ln(bottleneck_dim, hidden_dim)
    p['fusion'] = lin_ln(bottleneck_dim, bottleneck_dim * 2)

    wq, bq = lin(bottleneck_dim, bottleneck_dim)
    wk, bk = lin(bottleneck_dim, bottleneck_dim)
    wv, bv = lin(bottleneck_dim, bottleneck_dim)
    wo, bo = lin(bottleneck_dim, bottleneck_dim)
    p['mha'] = (wq, wk, wv, bq, bk, bv, wo, bo)

    def dec():
        w1, b1 = lin(hidden_dim, bottleneck_dim)
        w2, b2 = lin(1, hidden_dim)
        return (w1, b1, w2, b2)

    p['v_dec'] = dec()
    p['a_dec'] = dec()
    p['m_dec'] = dec()
    return p


def pack_params(p):
    """One-time repack into kernel layout:
       - dense weights transposed to [Din, Dout] (feed MXU natively, no in-kernel .T)
       - biases / LayerNorm params reshaped to [1, D]
       - fusion weight split into the vz half and the attn half
       - decoder head weight kept as a [1, H] row, its bias as [1, 1]."""
    def T(w):
        return jnp.asarray(w).T

    def row(b):
        return jnp.asarray(b).reshape(1, -1)

    venc_w, venc_b, venc_g, venc_bt = p['v_enc']
    vbot_w, vbot_b, vbot_g, vbot_bt = p['v_bot']
    aenc_w, aenc_b, aenc_g, aenc_bt = p['a_enc']
    abot_w, abot_b, abot_g, abot_bt = p['a_bot']
    wq, wk, wv, bq, bk, bv, wo, bo = p['mha']
    wf, bf, gf, bft = p['fusion']
    E = wf.shape[0]

    kp = {}
    kp['v_enc'] = (T(venc_w), row(venc_b), row(venc_g), row(venc_bt))
    kp['v_bot'] = (T(vbot_w), row(vbot_b), row(vbot_g), row(vbot_bt))
    kp['a_enc'] = (T(aenc_w), row(aenc_b), row(aenc_g), row(aenc_bt))
    kp['a_bot'] = (T(abot_w), row(abot_b), row(abot_g), row(abot_bt))
    kp['mha'] = (T(wq), T(wk), T(wv), row(bq), row(bk), row(bv), T(wo), row(bo))
    kp['fusion'] = (T(wf[:, :E]), T(wf[:, E:]), row(bf), row(gf), row(bft))

    def dec(name):
        w1, b1, w2, b2 = p[name]
        return (T(w1), row(b1), jnp.asarray(w2).reshape(1, -1), jnp.asarray(b2).reshape(1, 1))

    kp['v_dec'] = dec('v_dec')
    kp['a_dec'] = dec('a_dec')
    kp['m_dec'] = dec('m_dec')
    return kp


# ----------------------------------------------------------------------------
# Forward pass: one pallas_call, everything VMEM-resident.
# ----------------------------------------------------------------------------
def forward(kp, visual, audio, *, num_heads=4):
    B, Sv, Dv = visual.shape
    _, Sa, Da = audio.shape
    Nv, Na = B * Sv, B * Sa
    E = kp['v_bot'][0].shape[1]

    vx = visual.reshape(Nv, Dv)
    ax = audio.reshape(Na, Da)

    weight_args = (list(kp['v_enc']) + list(kp['v_bot'])
                   + list(kp['a_enc']) + list(kp['a_bot'])
                   + list(kp['mha']) + list(kp['fusion'])
                   + list(kp['v_dec']) + list(kp['a_dec']) + list(kp['m_dec']))
    args = [vx, ax] + weight_args

    def vmem():
        return pl.BlockSpec(memory_space=pltpu.MemorySpace.VMEM)

    out_shape = (
        jax.ShapeDtypeStruct((Nv, E), jnp.float32),   # vz latent
        jax.ShapeDtypeStruct((Na, E), jnp.float32),   # az latent
        jax.ShapeDtypeStruct((Nv, E), jnp.float32),   # mz latent
        jax.ShapeDtypeStruct((Nv, 1), jnp.float32),   # visual score
        jax.ShapeDtypeStruct((Na, 1), jnp.float32),   # audio score
        jax.ShapeDtypeStruct((Nv, 1), jnp.float32),   # multi score
    )

    vz, az, mz, vs, a_s, ms = pl.pallas_call(
        functools.partial(_fused_forward_kernel, num_heads=num_heads, B=B, Sv=Sv, Sa=Sa),
        out_shape=out_shape,
        in_specs=[vmem() for _ in args],
        out_specs=tuple(vmem() for _ in out_shape),
    )(*args)

    scores = {'visual': vs.reshape(B, Sv),
              'audio': a_s.reshape(B, Sa),
              'multi': ms.reshape(B, Sv)}
    latents = {'visual': vz.reshape(B, Sv, E),
               'audio': az.reshape(B, Sa, E),
               'multi': mz.reshape(B, Sv, E)}
    return scores, latents


if __name__ == "__main__":
    key = jax.random.PRNGKey(0)
    k_params, k_vis, k_aud = jax.random.split(key, 3)

    B, Sv, Sa = 2, 8, 16
    visual_dim, audio_dim = 1024, 128

    params = init_params(k_params, visual_dim=visual_dim, audio_dim=audio_dim)
    packed = pack_params(params)          # one-time weight repack (transposes live here)
    visual = jax.random.normal(k_vis, (B, Sv, visual_dim), jnp.float32)
    audio = jax.random.normal(k_aud, (B, Sa, audio_dim), jnp.float32)

    fwd = jax.jit(functools.partial(forward, num_heads=4))
    scores, latents = fwd(packed, visual, audio)
    jax.block_until_ready((scores, latents))

    assert scores['visual'].shape == (B, Sv)
    assert scores['audio'].shape == (B, Sa)
    assert scores['multi'].shape == (B, Sv)
    assert latents['visual'].shape == (B, Sv, 128)
    assert latents['audio'].shape == (B, Sa, 128)
    assert latents['multi'].shape == (B, Sv, 128)
    print("KERNEL_OK")
</pallas_src>

<mosaic_0001>
module attributes {stable_mosaic.version = 11 : i64} {
  func.func @_fused_forward_kernel(%arg0: memref<16x1024xf32, #tpu.memory_space<vmem>>, %arg1: memref<32x128xf32, #tpu.memory_space<vmem>>, %arg2: memref<1024x256xf32, #tpu.memory_space<vmem>>, %arg3: memref<1x256xf32, #tpu.memory_space<vmem>>, %arg4: memref<1x256xf32, #tpu.memory_space<vmem>>, %arg5: memref<1x256xf32, #tpu.memory_space<vmem>>, %arg6: memref<256x128xf32, #tpu.memory_space<vmem>>, %arg7: memref<1x128xf32, #tpu.memory_space<vmem>>, %arg8: memref<1x128xf32, #tpu.memory_space<vmem>>, %arg9: memref<1x128xf32, #tpu.memory_space<vmem>>, %arg10: memref<128x256xf32, #tpu.memory_space<vmem>>, %arg11: memref<1x256xf32, #tpu.memory_space<vmem>>, %arg12: memref<1x256xf32, #tpu.memory_space<vmem>>, %arg13: memref<1x256xf32, #tpu.memory_space<vmem>>, %arg14: memref<256x128xf32, #tpu.memory_space<vmem>>, %arg15: memref<1x128xf32, #tpu.memory_space<vmem>>, %arg16: memref<1x128xf32, #tpu.memory_space<vmem>>, %arg17: memref<1x128xf32, #tpu.memory_space<vmem>>, %arg18: memref<128x128xf32, #tpu.memory_space<vmem>>, %arg19: memref<128x128xf32, #tpu.memory_space<vmem>>, %arg20: memref<128x128xf32, #tpu.memory_space<vmem>>, %arg21: memref<1x128xf32, #tpu.memory_space<vmem>>, %arg22: memref<1x128xf32, #tpu.memory_space<vmem>>, %arg23: memref<1x128xf32, #tpu.memory_space<vmem>>, %arg24: memref<128x128xf32, #tpu.memory_space<vmem>>, %arg25: memref<1x128xf32, #tpu.memory_space<vmem>>, %arg26: memref<128x128xf32, #tpu.memory_space<vmem>>, %arg27: memref<128x128xf32, #tpu.memory_space<vmem>>, %arg28: memref<1x128xf32, #tpu.memory_space<vmem>>, %arg29: memref<1x128xf32, #tpu.memory_space<vmem>>, %arg30: memref<1x128xf32, #tpu.memory_space<vmem>>, %arg31: memref<128x256xf32, #tpu.memory_space<vmem>>, %arg32: memref<1x256xf32, #tpu.memory_space<vmem>>, %arg33: memref<1x256xf32, #tpu.memory_space<vmem>>, %arg34: memref<1x1xf32, #tpu.memory_space<vmem>>, %arg35: memref<128x256xf32, #tpu.memory_space<vmem>>, %arg36: memref<1x256xf32, #tpu.memory_space<vmem>>, %arg37: memref<1x256xf32, #tpu.memory_space<vmem>>, %arg38: memref<1x1xf32, #tpu.memory_space<vmem>>, %arg39: memref<128x256xf32, #tpu.memory_space<vmem>>, %arg40: memref<1x256xf32, #tpu.memory_space<vmem>>, %arg41: memref<1x256xf32, #tpu.memory_space<vmem>>, %arg42: memref<1x1xf32, #tpu.memory_space<vmem>>, %arg43: memref<16x128xf32, #tpu.memory_space<vmem>>, %arg44: memref<32x128xf32, #tpu.memory_space<vmem>>, %arg45: memref<16x128xf32, #tpu.memory_space<vmem>>, %arg46: memref<16x1xf32, #tpu.memory_space<vmem>>, %arg47: memref<32x1xf32, #tpu.memory_space<vmem>>, %arg48: memref<16x1xf32, #tpu.memory_space<vmem>>) attributes {dimension_semantics = [], scalar_prefetch = 0 : i64, scratch_operands = 0 : i64, tpu.core_type = #tpu.core_type<tc>} {
    %c0 = arith.constant 0 : index
    %c0_0 = arith.constant 0 : index
    %0 = vector.load %arg0[%c0, %c0_0] : memref<16x1024xf32, #tpu.memory_space<vmem>>, vector<16x1024xf32>
    %c0_1 = arith.constant 0 : index
    %c0_2 = arith.constant 0 : index
    %1 = vector.load %arg2[%c0_1, %c0_2] : memref<1024x256xf32, #tpu.memory_space<vmem>>, vector<1024x256xf32>
    %cst = arith.constant dense<0.000000e+00> : vector<16x256xf32>
    %2 = tpu.matmul %0, %1, %cst {dimension_numbers = #tpu.dot_dimension_numbers<[1], [0], [0], [1], [0, 0, 1, 1], [], []>} : vector<16x1024xf32>, vector<1024x256xf32>, vector<16x256xf32> -> vector<16x256xf32>
    %c0_3 = arith.constant 0 : index
    %c0_4 = arith.constant 0 : index
    %3 = vector.load %arg3[%c0_3, %c0_4] : memref<1x256xf32, #tpu.memory_space<vmem>>, vector<1x256xf32>
    %4 = vector.broadcast %3 : vector<1x256xf32> to vector<16x256xf32>
    %5 = arith.addf %2, %4 : vector<16x256xf32>
    %cst_5 = arith.constant dense<0.000000e+00> : vector<16xf32>
    %6 = vector.multi_reduction <add>, %5, %cst_5 [1] : vector<16x256xf32> to vector<16xf32>
    %7 = vector.shape_cast %6 : vector<16xf32> to vector<16x1xf32>
    %cst_6 = arith.constant 2.560000e+02 : f32
    %8 = vector.broadcast %cst_6 : f32 to vector<16x1xf32>
    %9 = arith.divf %7, %8 : vector<16x1xf32>
    %10 = vector.broadcast %9 : vector<16x1xf32> to vector<16x256xf32>
    %11 = arith.subf %5, %10 : vector<16x256xf32>
    %12 = arith.mulf %11, %11 : vector<16x256xf32>
    %cst_7 = arith.constant dense<0.000000e+00> : vector<16xf32>
    %13 = vector.multi_reduction <add>, %12, %cst_7 [1] : vector<16x256xf32> to vector<16xf32>
    %14 = vector.shape_cast %13 : vector<16xf32> to vector<16x1xf32>
    %cst_8 = arith.constant 2.560000e+02 : f32
    %15 = vector.broadcast %cst_8 : f32 to vector<16x1xf32>
    %16 = arith.divf %14, %15 : vector<16x1xf32>
    %17 = vector.broadcast %9 : vector<16x1xf32> to vector<16x256xf32>
    %18 = arith.subf %5, %17 : vector<16x256xf32>
    %cst_9 = arith.constant 9.99999974E-6 : f32
    %19 = vector.broadcast %cst_9 : f32 to vector<16x1xf32>
    %20 = arith.addf %16, %19 : vector<16x1xf32>
    %21 = math.rsqrt %20 : vector<16x1xf32>
    %22 = vector.broadcast %21 : vector<16x1xf32> to vector<16x256xf32>
    %23 = arith.mulf %18, %22 : vector<16x256xf32>
    %c0_10 = arith.constant 0 : index
    %c0_11 = arith.constant 0 : index
    %24 = vector.load %arg4[%c0_10, %c0_11] : memref<1x256xf32, #tpu.memory_space<vmem>>, vector<1x256xf32>
    %25 = vector.broadcast %24 : vector<1x256xf32> to vector<16x256xf32>
    %26 = arith.mulf %23, %25 : vector<16x256xf32>
    %c0_12 = arith.constant 0 : index
    %c0_13 = arith.constant 0 : index
    %27 = vector.load %arg5[%c0_12, %c0_13] : memref<1x256xf32, #tpu.memory_space<vmem>>, vector<1x256xf32>
    %28 = vector.broadcast %27 : vector<1x256xf32> to vector<16x256xf32>
    %29 = arith.addf %26, %28 : vector<16x256xf32>
    %cst_14 = arith.constant 0.000000e+00 : f32
    %30 = vector.broadcast %cst_14 : f32 to vector<16x256xf32>
    %31 = arith.maximumf %29, %30 : vector<16x256xf32>
    %c0_15 = arith.constant 0 : index
    %c0_16 = arith.constant 0 : index
    %32 = vector.load %arg6[%c0_15, %c0_16] : memref<256x128xf32, #tpu.memory_space<vmem>>, vector<256x128xf32>
    %cst_17 = arith.constant dense<0.000000e+00> : vector<16x128xf32>
    %33 = tpu.matmul %31, %32, %cst_17 {dimension_numbers = #tpu.dot_dimension_numbers<[1], [0], [0], [1], [0, 0, 1, 1], [], []>} : vector<16x256xf32>, vector<256x128xf32>, vector<16x128xf32> -> vector<16x128xf32>
    %c0_18 = arith.constant 0 : index
    %c0_19 = arith.constant 0 : index
    %34 = vector.load %arg7[%c0_18, %c0_19] : memref<1x128xf32, #tpu.memory_space<vmem>>, vector<1x128xf32>
    %35 = vector.broadcast %34 : vector<1x128xf32> to vector<16x128xf32>
    %36 = arith.addf %33, %35 : vector<16x128xf32>
    %cst_20 = arith.constant dense<0.000000e+00> : vector<16xf32>
    %37 = vector.multi_reduction <add>, %36, %cst_20 [1] : vector<16x128xf32> to vector<16xf32>
    %38 = vector.shape_cast %37 : vector<16xf32> to vector<16x1xf32>
    %cst_21 = arith.constant 1.280000e+02 : f32
    %39 = vector.broadcast %cst_21 : f32 to vector<16x1xf32>
    %40 = arith.divf %38, %39 : vector<16x1xf32>
    %41 = vector.broadcast %40 : vector<16x1xf32> to vector<16x128xf32>
    %42 = arith.subf %36, %41 : vector<16x128xf32>
    %43 = arith.mulf %42, %42 : vector<16x128xf32>
    %cst_22 = arith.constant dense<0.000000e+00> : vector<16xf32>
    %44 = vector.multi_reduction <add>, %43, %cst_22 [1] : vector<16x128xf32> to vector<16xf32>
    %45 = vector.shape_cast %44 : vector<16xf32> to vector<16x1xf32>
    %cst_23 = arith.constant 1.280000e+02 : f32
    %46 = vector.broadcast %cst_23 : f32 to vector<16x1xf32>
    %47 = arith.divf %45, %46 : vector<16x1xf32>
    %48 = vector.broadcast %40 : vector<16x1xf32> to vector<16x128xf32>
    %49 = arith.subf %36, %48 : vector<16x128xf32>
    %cst_24 = arith.constant 9.99999974E-6 : f32
    %50 = vector.broadcast %cst_24 : f32 to vector<16x1xf32>
    %51 = arith.addf %47, %50 : vector<16x1xf32>
    %52 = math.rsqrt %51 : vector<16x1xf32>
    %53 = vector.broadcast %52 : vector<16x1xf32> to vector<16x128xf32>
    %54 = arith.mulf %49, %53 : vector<16x128xf32>
    %c0_25 = arith.constant 0 : index
    %c0_26 = arith.constant 0 : index
    %55 = vector.load %arg8[%c0_25, %c0_26] : memref<1x128xf32, #tpu.memory_space<vmem>>, vector<1x128xf32>
    %56 = vector.broadcast %55 : vector<1x128xf32> to vector<16x128xf32>
    %57 = arith.mulf %54, %56 : vector<16x128xf32>
    %c0_27 = arith.constant 0 : index
    %c0_28 = arith.constant 0 : index
    %58 = vector.load %arg9[%c0_27, %c0_28] : memref<1x128xf32, #tpu.memory_space<vmem>>, vector<1x128xf32>
    %59 = vector.broadcast %58 : vector<1x128xf32> to vector<16x128xf32>
    %60 = arith.addf %57, %59 : vector<16x128xf32>
    %c0_29 = arith.constant 0 : index
    %c0_30 = arith.constant 0 : index
    %61 = vector.load %arg1[%c0_29, %c0_30] : memref<32x128xf32, #tpu.memory_space<vmem>>, vector<32x128xf32>
    %c0_31 = arith.constant 0 : index
    %c0_32 = arith.constant 0 : index
    %62 = vector.load %arg10[%c0_31, %c0_32] : memref<128x256xf32, #tpu.memory_space<vmem>>, vector<128x256xf32>
    %cst_33 = arith.constant dense<0.000000e+00> : vector<32x256xf32>
    %63 = tpu.matmul %61, %62, %cst_33 {dimension_numbers = #tpu.dot_dimension_numbers<[1], [0], [0], [1], [0, 0, 1, 1], [], []>} : vector<32x128xf32>, vector<128x256xf32>, vector<32x256xf32> -> vector<32x256xf32>
    %c0_34 = arith.constant 0 : index
    %c0_35 = arith.constant 0 : index
    %64 = vector.load %arg11[%c0_34, %c0_35] : memref<1x256xf32, #tpu.memory_space<vmem>>, vector<1x256xf32>
    %65 = vector.broadcast %64 : vector<1x256xf32> to vector<32x256xf32>
    %66 = arith.addf %63, %65 : vector<32x256xf32>
    %cst_36 = arith.constant dense<0.000000e+00> : vector<32xf32>
    %67 = vector.multi_reduction <add>, %66, %cst_36 [1] : vector<32x256xf32> to vector<32xf32>
    %68 = vector.shape_cast %67 : vector<32xf32> to vector<32x1xf32>
    %cst_37 = arith.constant 2.560000e+02 : f32
    %69 = vector.broadcast %cst_37 : f32 to vector<32x1xf32>
    %70 = arith.divf %68, %69 : vector<32x1xf32>
    %71 = vector.broadcast %70 : vector<32x1xf32> to vector<32x256xf32>
    %72 = arith.subf %66, %71 : vector<32x256xf32>
    %73 = arith.mulf %72, %72 : vector<32x256xf32>
    %cst_38 = arith.constant dense<0.000000e+00> : vector<32xf32>
    %74 = vector.multi_reduction <add>, %73, %cst_38 [1] : vector<32x256xf32> to vector<32xf32>
    %75 = vector.shape_cast %74 : vector<32xf32> to vector<32x1xf32>
    %cst_39 = arith.constant 2.560000e+02 : f32
    %76 = vector.broadcast %cst_39 : f32 to vector<32x1xf32>
    %77 = arith.divf %75, %76 : vector<32x1xf32>
    %78 = vector.broadcast %70 : vector<32x1xf32> to vector<32x256xf32>
    %79 = arith.subf %66, %78 : vector<32x256xf32>
    %cst_40 = arith.constant 9.99999974E-6 : f32
    %80 = vector.broadcast %cst_40 : f32 to vector<32x1xf32>
    %81 = arith.addf %77, %80 : vector<32x1xf32>
    %82 = math.rsqrt %81 : vector<32x1xf32>
    %83 = vector.broadcast %82 : vector<32x1xf32> to vector<32x256xf32>
    %84 = arith.mulf %79, %83 : vector<32x256xf32>
    %c0_41 = arith.constant 0 : index
    %c0_42 = arith.constant 0 : index
    %85 = vector.load %arg12[%c0_41, %c0_42] : memref<1x256xf32, #tpu.memory_space<vmem>>, vector<1x256xf32>
    %86 = vector.broadcast %85 : vector<1x256xf32> to vector<32x256xf32>
    %87 = arith.mulf %84, %86 : vector<32x256xf32>
    %c0_43 = arith.constant 0 : index
    %c0_44 = arith.constant 0 : index
    %88 = vector.load %arg13[%c0_43, %c0_44] : memref<1x256xf32, #tpu.memory_space<vmem>>, vector<1x256xf32>
    %89 = vector.broadcast %88 : vector<1x256xf32> to vector<32x256xf32>
    %90 = arith.addf %87, %89 : vector<32x256xf32>
    %cst_45 = arith.constant 0.000000e+00 : f32
    %91 = vector.broadcast %cst_45 : f32 to vector<32x256xf32>
    %92 = arith.maximumf %90, %91 : vector<32x256xf32>
    %c0_46 = arith.constant 0 : index
    %c0_47 = arith.constant 0 : index
    %93 = vector.load %arg14[%c0_46, %c0_47] : memref<256x128xf32, #tpu.memory_space<vmem>>, vector<256x128xf32>
    %cst_48 = arith.constant dense<0.000000e+00> : vector<32x128xf32>
    %94 = tpu.matmul %92, %93, %cst_48 {dimension_numbers = #tpu.dot_dimension_numbers<[1], [0], [0], [1], [0, 0, 1, 1], [], []>} : vector<32x256xf32>, vector<256x128xf32>, vector<32x128xf32> -> vector<32x128xf32>
    %c0_49 = arith.constant 0 : index
    %c0_50 = arith.constant 0 : index
    %95 = vector.load %arg15[%c0_49, %c0_50] : memref<1x128xf32, #tpu.memory_space<vmem>>, vector<1x128xf32>
    %96 = vector.broadcast %95 : vector<1x128xf32> to vector<32x128xf32>
    %97 = arith.addf %94, %96 : vector<32x128xf32>
    %cst_51 = arith.constant dense<0.000000e+00> : vector<32xf32>
    %98 = vector.multi_reduction <add>, %97, %cst_51 [1] : vector<32x128xf32> to vector<32xf32>
    %99 = vector.shape_cast %98 : vector<32xf32> to vector<32x1xf32>
    %cst_52 = arith.constant 1.280000e+02 : f32
    %100 = vector.broadcast %cst_52 : f32 to vector<32x1xf32>
    %101 = arith.divf %99, %100 : vector<32x1xf32>
    %102 = vector.broadcast %101 : vector<32x1xf32> to vector<32x128xf32>
    %103 = arith.subf %97, %102 : vector<32x128xf32>
    %104 = arith.mulf %103, %103 : vector<32x128xf32>
    %cst_53 = arith.constant dense<0.000000e+00> : vector<32xf32>
    %105 = vector.multi_reduction <add>, %104, %cst_53 [1] : vector<32x128xf32> to vector<32xf32>
    %106 = vector.shape_cast %105 : vector<32xf32> to vector<32x1xf32>
    %cst_54 = arith.constant 1.280000e+02 : f32
    %107 = vector.broadcast %cst_54 : f32 to vector<32x1xf32>
    %108 = arith.divf %106, %107 : vector<32x1xf32>
    %109 = vector.broadcast %101 : vector<32x1xf32> to vector<32x128xf32>
    %110 = arith.subf %97, %109 : vector<32x128xf32>
    %cst_55 = arith.constant 9.99999974E-6 : f32
    %111 = vector.broadcast %cst_55 : f32 to vector<32x1xf32>
    %112 = arith.addf %108, %111 : vector<32x1xf32>
    %113 = math.rsqrt %112 : vector<32x1xf32>
    %114 = vector.broadcast %113 : vector<32x1xf32> to vector<32x128xf32>
    %115 = arith.mulf %110, %114 : vector<32x128xf32>
    %c0_56 = arith.constant 0 : index
    %c0_57 = arith.constant 0 : index
    %116 = vector.load %arg16[%c0_56, %c0_57] : memref<1x128xf32, #tpu.memory_space<vmem>>, vector<1x128xf32>
    %117 = vector.broadcast %116 : vector<1x128xf32> to vector<32x128xf32>
    %118 = arith.mulf %115, %117 : vector<32x128xf32>
    %c0_58 = arith.constant 0 : index
    %c0_59 = arith.constant 0 : index
    %119 = vector.load %arg17[%c0_58, %c0_59] : memref<1x128xf32, #tpu.memory_space<vmem>>, vector<1x128xf32>
    %120 = vector.broadcast %119 : vector<1x128xf32> to vector<32x128xf32>
    %121 = arith.addf %118, %120 : vector<32x128xf32>
    %c0_60 = arith.constant 0 : index
    %c0_61 = arith.constant 0 : index
    %122 = vector.load %arg43[%c0_60, %c0_61] : memref<16x128xf32, #tpu.memory_space<vmem>>, vector<16x128xf32>
    tpu.vector_store %arg43[%c0_60, %c0_61], %60 {strides = array<i32>} : memref<16x128xf32, #tpu.memory_space<vmem>>, vector<16x128xf32>,
    %c0_62 = arith.constant 0 : index
    %c0_63 = arith.constant 0 : index
    %123 = vector.load %arg44[%c0_62, %c0_63] : memref<32x128xf32, #tpu.memory_space<vmem>>, vector<32x128xf32>
    tpu.vector_store %arg44[%c0_62, %c0_63], %121 {strides = array<i32>} : memref<32x128xf32, #tpu.memory_space<vmem>>, vector<32x128xf32>,
    %c0_64 = arith.constant 0 : index
    %c0_65 = arith.constant 0 : index
    %124 = vector.load %arg18[%c0_64, %c0_65] : memref<128x128xf32, #tpu.memory_space<vmem>>, vector<128x128xf32>
    %cst_66 = arith.constant dense<0.000000e+00> : vector<16x128xf32>
    %125 = tpu.matmul %60, %124, %cst_66 {dimension_numbers = #tpu.dot_dimension_numbers<[1], [0], [0], [1], [0, 0, 1, 1], [], []>} : vector<16x128xf32>, vector<128x128xf32>, vector<16x128xf32> -> vector<16x128xf32>
    %c0_67 = arith.constant 0 : index
    %c0_68 = arith.constant 0 : index
    %126 = vector.load %arg21[%c0_67, %c0_68] : memref<1x128xf32, #tpu.memory_space<vmem>>, vector<1x128xf32>
    %127 = vector.broadcast %126 : vector<1x128xf32> to vector<16x128xf32>
    %128 = arith.addf %125, %127 : vector<16x128xf32>
    %129 = vector.shape_cast %128 : vector<16x128xf32> to vector<2x8x128xf32>
    %c0_69 = arith.constant 0 : index
    %c0_70 = arith.constant 0 : index
    %130 = vector.load %arg19[%c0_69, %c0_70] : memref<128x128xf32, #tpu.memory_space<vmem>>, vector<128x128xf32>
    %cst_71 = arith.constant dense<0.000000e+00> : vector<32x128xf32>
    %131 = tpu.matmul %121, %130, %cst_71 {dimension_numbers = #tpu.dot_dimension_numbers<[1], [0], [0], [1], [0, 0, 1, 1], [], []>} : vector<32x128xf32>, vector<128x128xf32>, vector<32x128xf32> -> vector<32x128xf32>
    %c0_72 = arith.constant 0 : index
    %c0_73 = arith.constant 0 : index
    %132 = vector.load %arg22[%c0_72, %c0_73] : memref<1x128xf32, #tpu.memory_space<vmem>>, vector<1x128xf32>
    %133 = vector.broadcast %132 : vector<1x128xf32> to vector<32x128xf32>
    %134 = arith.addf %131, %133 : vector<32x128xf32>
    %135 = vector.shape_cast %134 : vector<32x128xf32> to vector<2x16x128xf32>
    %c0_74 = arith.constant 0 : index
    %c0_75 = arith.constant 0 : index
    %136 = vector.load %arg20[%c0_74, %c0_75] : memref<128x128xf32, #tpu.memory_space<vmem>>, vector<128x128xf32>
    %cst_76 = arith.constant dense<0.000000e+00> : vector<32x128xf32>
    %137 = tpu.matmul %121, %136, %cst_76 {dimension_numbers = #tpu.dot_dimension_numbers<[1], [0], [0], [1], [0, 0, 1, 1], [], []>} : vector<32x128xf32>, vector<128x128xf32>, vector<32x128xf32> -> vector<32x128xf32>
    %c0_77 = arith.constant 0 : index
    %c0_78 = arith.constant 0 : index
    %138 = vector.load %arg23[%c0_77, %c0_78] : memref<1x128xf32, #tpu.memory_space<vmem>>, vector<1x128xf32>
    %139 = vector.broadcast %138 : vector<1x128xf32> to vector<32x128xf32>
    %140 = arith.addf %137, %139 : vector<32x128xf32>
    %141 = vector.shape_cast %140 : vector<32x128xf32> to vector<2x16x128xf32>
    %c0_79 = arith.constant 0 : index
    %c0_80 = arith.constant 0 : index
    %142 = vector.load %arg24[%c0_79, %c0_80] : memref<128x128xf32, #tpu.memory_space<vmem>>, vector<128x128xf32>
    %143 = vector.extract_strided_slice %129 {offsets = [0, 0, 0], sizes = [2, 8, 32], strides = [1, 1, 1]} : vector<2x8x128xf32> to vector<2x8x32xf32>
    %cst_81 = arith.constant 0.176776692 : f32
    %144 = vector.broadcast %cst_81 : f32 to vector<2x8x32xf32>
    %145 = arith.mulf %143, %144 : vector<2x8x32xf32>
    %146 = vector.extract_strided_slice %135 {offsets = [0, 0, 0], sizes = [2, 16, 32], strides = [1, 1, 1]} : vector<2x16x128xf32> to vector<2x16x32xf32>
    %147 = vector.extract_strided_slice %141 {offsets = [0, 0, 0], sizes = [2, 16, 32], strides = [1, 1, 1]} : vector<2x16x128xf32> to vector<2x16x32xf32>
    "tpu.trace_start"() <{level = 10 : i32, message = "bqd,bkd->bqk"}> : () -> ()
    %cst_82 = arith.constant dense<0.000000e+00> : vector<2x8x16xf32>
    %148 = tpu.matmul %145, %146, %cst_82 {dimension_numbers = #tpu.dot_dimension_numbers<[2], [2], [1], [1], [0, 0, 0, 1, 1, 1], [0], [0]>} : vector<2x8x32xf32>, vector<2x16x32xf32>, vector<2x8x16xf32> -> vector<2x8x16xf32>
    "tpu.trace_stop"() : () -> ()
    %cst_83 = arith.constant dense<0xFF800000> : vector<2x8xf32>
    %149 = vector.multi_reduction <maximumf>, %148, %cst_83 [2] : vector<2x8x16xf32> to vector<2x8xf32>
    %150 = vector.shape_cast %149 : vector<2x8xf32> to vector<2x8x1xf32>
    %151 = vector.broadcast %150 : vector<2x8x1xf32> to vector<2x8x16xf32>
    %152 = arith.subf %148, %151 : vector<2x8x16xf32>
    %153 = math.exp %152 : vector<2x8x16xf32>
    %cst_84 = arith.constant dense<0.000000e+00> : vector<2x8xf32>
    %154 = vector.multi_reduction <add>, %153, %cst_84 [2] : vector<2x8x16xf32> to vector<2x8xf32>
    %155 = vector.shape_cast %154 : vector<2x8xf32> to vector<2x8x1xf32>
    %156 = tpu.reciprocal %155 {approx = true} : vector<2x8x1xf32> -> vector<2x8x1xf32>
    %157 = vector.broadcast %156 : vector<2x8x1xf32> to vector<2x8x16xf32>
    %158 = arith.mulf %153, %157 : vector<2x8x16xf32>
    "tpu.trace_start"() <{level = 10 : i32, message = "bqk,bkd->bqd"}> : () -> ()
    %cst_85 = arith.constant dense<0.000000e+00> : vector<2x8x32xf32>
    %159 = tpu.matmul %158, %147, %cst_85 {dimension_numbers = #tpu.dot_dimension_numbers<[2], [1], [1], [2], [0, 0, 0, 1, 1, 2], [0], [0]>} : vector<2x8x16xf32>, vector<2x16x32xf32>, vector<2x8x32xf32> -> vector<2x8x32xf32>
    "tpu.trace_stop"() : () -> ()
    %160 = vector.extract_strided_slice %142 {offsets = [0, 0], sizes = [32, 128], strides = [1, 1]} : vector<128x128xf32> to vector<32x128xf32>
    %161 = vector.shape_cast %160 : vector<32x128xf32> to vector<1x32x128xf32>
    %162 = vector.shape_cast %161 : vector<1x32x128xf32> to vector<1x32x128xf32>
    %163 = vector.broadcast %162 : vector<1x32x128xf32> to vector<2x32x128xf32>
    "tpu.trace_start"() <{level = 10 : i32, message = "bqd,bde->bqe"}> : () -> ()
    %cst_86 = arith.constant dense<0.000000e+00> : vector<2x8x128xf32>
    %164 = tpu.matmul %159, %163, %cst_86 {dimension_numbers = #tpu.dot_dimension_numbers<[2], [1], [1], [2], [0, 0, 0, 1, 1, 2], [0], [0]>} : vector<2x8x32xf32>, vector<2x32x128xf32>, vector<2x8x128xf32> -> vector<2x8x128xf32>
    "tpu.trace_stop"() : () -> ()
    %165 = vector.extract_strided_slice %129 {offsets = [0, 0, 32], sizes = [2, 8, 32], strides = [1, 1, 1]} : vector<2x8x128xf32> to vector<2x8x32xf32>
    %cst_87 = arith.constant 0.176776692 : f32
    %166 = vector.broadcast %cst_87 : f32 to vector<2x8x32xf32>
    %167 = arith.mulf %165, %166 : vector<2x8x32xf32>
    %168 = vector.extract_strided_slice %135 {offsets = [0, 0, 32], sizes = [2, 16, 32], strides = [1, 1, 1]} : vector<2x16x128xf32> to vector<2x16x32xf32>
    %169 = vector.extract_strided_slice %141 {offsets = [0, 0, 32], sizes = [2, 16, 32], strides = [1, 1, 1]} : vector<2x16x128xf32> to vector<2x16x32xf32>
    "tpu.trace_start"() <{level = 10 : i32, message = "bqd,bkd->bqk"}> : () -> ()
    %cst_88 = arith.constant dense<0.000000e+00> : vector<2x8x16xf32>
    %170 = tpu.matmul %167, %168, %cst_88 {dimension_numbers = #tpu.dot_dimension_numbers<[2], [2], [1], [1], [0, 0, 0, 1, 1, 1], [0], [0]>} : vector<2x8x32xf32>, vector<2x16x32xf32>, vector<2x8x16xf32> -> vector<2x8x16xf32>
    "tpu.trace_stop"() : () -> ()
    %cst_89 = arith.constant dense<0xFF800000> : vector<2x8xf32>
    %171 = vector.multi_reduction <maximumf>, %170, %cst_89 [2] : vector<2x8x16xf32> to vector<2x8xf32>
    %172 = vector.shape_cast %171 : vector<2x8xf32> to vector<2x8x1xf32>
    %173 = vector.broadcast %172 : vector<2x8x1xf32> to vector<2x8x16xf32>
    %174 = arith.subf %170, %173 : vector<2x8x16xf32>
    %175 = math.exp %174 : vector<2x8x16xf32>
    %cst_90 = arith.constant dense<0.000000e+00> : vector<2x8xf32>
    %176 = vector.multi_reduction <add>, %175, %cst_90 [2] : vector<2x8x16xf32> to vector<2x8xf32>
    %177 = vector.shape_cast %176 : vector<2x8xf32> to vector<2x8x1xf32>
    %178 = tpu.reciprocal %177 {approx = true} : vector<2x8x1xf32> -> vector<2x8x1xf32>
    %179 = vector.broadcast %178 : vector<2x8x1xf32> to vector<2x8x16xf32>
    %180 = arith.mulf %175, %179 : vector<2x8x16xf32>
    "tpu.trace_start"() <{level = 10 : i32, message = "bqk,bkd->bqd"}> : () -> ()
    %cst_91 = arith.constant dense<0.000000e+00> : vector<2x8x32xf32>
    %181 = tpu.matmul %180, %169, %cst_91 {dimension_numbers = #tpu.dot_dimension_numbers<[2], [1], [1], [2], [0, 0, 0, 1, 1, 2], [0], [0]>} : vector<2x8x16xf32>, vector<2x16x32xf32>, vector<2x8x32xf32> -> vector<2x8x32xf32>
    "tpu.trace_stop"() : () -> ()
    %182 = vector.extract_strided_slice %142 {offsets = [32, 0], sizes = [32, 128], strides = [1, 1]} : vector<128x128xf32> to vector<32x128xf32>
    %183 = vector.shape_cast %182 : vector<32x128xf32> to vector<1x32x128xf32>
    %184 = vector.shape_cast %183 : vector<1x32x128xf32> to vector<1x32x128xf32>
    %185 = vector.broadcast %184 : vector<1x32x128xf32> to vector<2x32x128xf32>
    "tpu.trace_start"() <{level = 10 : i32, message = "bqd,bde->bqe"}> : () -> ()
    %cst_92 = arith.constant dense<0.000000e+00> : vector<2x8x128xf32>
    %186 = tpu.matmul %181, %185, %cst_92 {dimension_numbers = #tpu.dot_dimension_numbers<[2], [1], [1], [2], [0, 0, 0, 1, 1, 2], [0], [0]>} : vector<2x8x32xf32>, vector<2x32x128xf32>, vector<2x8x128xf32> -> vector<2x8x128xf32>
    "tpu.trace_stop"() : () -> ()
    %187 = arith.addf %164, %186 : vector<2x8x128xf32>
    %188 = vector.extract_strided_slice %129 {offsets = [0, 0, 64], sizes = [2, 8, 32], strides = [1, 1, 1]} : vector<2x8x128xf32> to vector<2x8x32xf32>
    %cst_93 = arith.constant 0.176776692 : f32
    %189 = vector.broadcast %cst_93 : f32 to vector<2x8x32xf32>
    %190 = arith.mulf %188, %189 : vector<2x8x32xf32>
    %191 = vector.extract_strided_slice %135 {offsets = [0, 0, 64], sizes = [2, 16, 32], strides = [1, 1, 1]} : vector<2x16x128xf32> to vector<2x16x32xf32>
    %192 = vector.extract_strided_slice %141 {offsets = [0, 0, 64], sizes = [2, 16, 32], strides = [1, 1, 1]} : vector<2x16x128xf32> to vector<2x16x32xf32>
    "tpu.trace_start"() <{level = 10 : i32, message = "bqd,bkd->bqk"}> : () -> ()
    %cst_94 = arith.constant dense<0.000000e+00> : vector<2x8x16xf32>
    %193 = tpu.matmul %190, %191, %cst_94 {dimension_numbers = #tpu.dot_dimension_numbers<[2], [2], [1], [1], [0, 0, 0, 1, 1, 1], [0], [0]>} : vector<2x8x32xf32>, vector<2x16x32xf32>, vector<2x8x16xf32> -> vector<2x8x16xf32>
    "tpu.trace_stop"() : () -> ()
    %cst_95 = arith.constant dense<0xFF800000> : vector<2x8xf32>
    %194 = vector.multi_reduction <maximumf>, %193, %cst_95 [2] : vector<2x8x16xf32> to vector<2x8xf32>
    %195 = vector.shape_cast %194 : vector<2x8xf32> to vector<2x8x1xf32>
    %196 = vector.broadcast %195 : vector<2x8x1xf32> to vector<2x8x16xf32>
    %197 = arith.subf %193, %196 : vector<2x8x16xf32>
    %198 = math.exp %197 : vector<2x8x16xf32>
    %cst_96 = arith.constant dense<0.000000e+00> : vector<2x8xf32>
    %199 = vector.multi_reduction <add>, %198, %cst_96 [2] : vector<2x8x16xf32> to vector<2x8xf32>
    %200 = vector.shape_cast %199 : vector<2x8xf32> to vector<2x8x1xf32>
    %201 = tpu.reciprocal %200 {approx = true} : vector<2x8x1xf32> -> vector<2x8x1xf32>
    %202 = vector.broadcast %201 : vector<2x8x1xf32> to vector<2x8x16xf32>
    %203 = arith.mulf %198, %202 : vector<2x8x16xf32>
    "tpu.trace_start"() <{level = 10 : i32, message = "bqk,bkd->bqd"}> : () -> ()
    %cst_97 = arith.constant dense<0.000000e+00> : vector<2x8x32xf32>
    %204 = tpu.matmul %203, %192, %cst_97 {dimension_numbers = #tpu.dot_dimension_numbers<[2], [1], [1], [2], [0, 0, 0, 1, 1, 2], [0], [0]>} : vector<2x8x16xf32>, vector<2x16x32xf32>, vector<2x8x32xf32> -> vector<2x8x32xf32>
    "tpu.trace_stop"() : () -> ()
    %205 = vector.extract_strided_slice %142 {offsets = [64, 0], sizes = [32, 128], strides = [1, 1]} : vector<128x128xf32> to vector<32x128xf32>
    %206 = vector.shape_cast %205 : vector<32x128xf32> to vector<1x32x128xf32>
    %207 = vector.shape_cast %206 : vector<1x32x128xf32> to vector<1x32x128xf32>
    %208 = vector.broadcast %207 : vector<1x32x128xf32> to vector<2x32x128xf32>
    "tpu.trace_start"() <{level = 10 : i32, message = "bqd,bde->bqe"}> : () -> ()
    %cst_98 = arith.constant dense<0.000000e+00> : vector<2x8x128xf32>
    %209 = tpu.matmul %204, %208, %cst_98 {dimension_numbers = #tpu.dot_dimension_numbers<[2], [1], [1], [2], [0, 0, 0, 1, 1, 2], [0], [0]>} : vector<2x8x32xf32>, vector<2x32x128xf32>, vector<2x8x128xf32> -> vector<2x8x128xf32>
    "tpu.trace_stop"() : () -> ()
    %210 = arith.addf %187, %209 : vector<2x8x128xf32>
    %211 = vector.extract_strided_slice %129 {offsets = [0, 0, 96], sizes = [2, 8, 32], strides = [1, 1, 1]} : vector<2x8x128xf32> to vector<2x8x32xf32>
    %cst_99 = arith.constant 0.176776692 : f32
    %212 = vector.broadcast %cst_99 : f32 to vector<2x8x32xf32>
    %213 = arith.mulf %211, %212 : vector<2x8x32xf32>
    %214 = vector.extract_strided_slice %135 {offsets = [0, 0, 96], sizes = [2, 16, 32], strides = [1, 1, 1]} : vector<2x16x128xf32> to vector<2x16x32xf32>
    %215 = vector.extract_strided_slice %141 {offsets = [0, 0, 96], sizes = [2, 16, 32], strides = [1, 1, 1]} : vector<2x16x128xf32> to vector<2x16x32xf32>
    "tpu.trace_start"() <{level = 10 : i32, message = "bqd,bkd->bqk"}> : () -> ()
    %cst_100 = arith.constant dense<0.000000e+00> : vector<2x8x16xf32>
    %216 = tpu.matmul %213, %214, %cst_100 {dimension_numbers = #tpu.dot_dimension_numbers<[2], [2], [1], [1], [0, 0, 0, 1, 1, 1], [0], [0]>} : vector<2x8x32xf32>, vector<2x16x32xf32>, vector<2x8x16xf32> -> vector<2x8x16xf32>
    "tpu.trace_stop"() : () -> ()
    %cst_101 = arith.constant dense<0xFF800000> : vector<2x8xf32>
    %217 = vector.multi_reduction <maximumf>, %216, %cst_101 [2] : vector<2x8x16xf32> to vector<2x8xf32>
    %218 = vector.shape_cast %217 : vector<2x8xf32> to vector<2x8x1xf32>
    %219 = vector.broadcast %218 : vector<2x8x1xf32> to vector<2x8x16xf32>
    %220 = arith.subf %216, %219 : vector<2x8x16xf32>
    %221 = math.exp %220 : vector<2x8x16xf32>
    %cst_102 = arith.constant dense<0.000000e+00> : vector<2x8xf32>
    %222 = vector.multi_reduction <add>, %221, %cst_102 [2] : vector<2x8x16xf32> to vector<2x8xf32>
    %223 = vector.shape_cast %222 : vector<2x8xf32> to vector<2x8x1xf32>
    %224 = tpu.reciprocal %223 {approx = true} : vector<2x8x1xf32> -> vector<2x8x1xf32>
    %225 = vector.broadcast %224 : vector<2x8x1xf32> to vector<2x8x16xf32>
    %226 = arith.mulf %221, %225 : vector<2x8x16xf32>
    "tpu.trace_start"() <{level = 10 : i32, message = "bqk,bkd->bqd"}> : () -> ()
    %cst_103 = arith.constant dense<0.000000e+00> : vector<2x8x32xf32>
    %227 = tpu.matmul %226, %215, %cst_103 {dimension_numbers = #tpu.dot_dimension_numbers<[2], [1], [1], [2], [0, 0, 0, 1, 1, 2], [0], [0]>} : vector<2x8x16xf32>, vector<2x16x32xf32>, vector<2x8x32xf32> -> vector<2x8x32xf32>
    "tpu.trace_stop"() : () -> ()
    %228 = vector.extract_strided_slice %142 {offsets = [96, 0], sizes = [32, 128], strides = [1, 1]} : vector<128x128xf32> to vector<32x128xf32>
    %229 = vector.shape_cast %228 : vector<32x128xf32> to vector<1x32x128xf32>
    %230 = vector.shape_cast %229 : vector<1x32x128xf32> to vector<1x32x128xf32>
    %231 = vector.broadcast %230 : vector<1x32x128xf32> to vector<2x32x128xf32>
    "tpu.trace_start"() <{level = 10 : i32, message = "bqd,bde->bqe"}> : () -> ()
    %cst_104 = arith.constant dense<0.000000e+00> : vector<2x8x128xf32>
    %232 = tpu.matmul %227, %231, %cst_104 {dimension_numbers = #tpu.dot_dimension_numbers<[2], [1], [1], [2], [0, 0, 0, 1, 1, 2], [0], [0]>} : vector<2x8x32xf32>, vector<2x32x128xf32>, vector<2x8x128xf32> -> vector<2x8x128xf32>
    "tpu.trace_stop"() : () -> ()
    %233 = arith.addf %210, %232 : vector<2x8x128xf32>
    %234 = vector.shape_cast %233 : vector<2x8x128xf32> to vector<16x128xf32>
    %c0_105 = arith.constant 0 : index
    %c0_106 = arith.constant 0 : index
    %235 = vector.load %arg25[%c0_105, %c0_106] : memref<1x128xf32, #tpu.memory_space<vmem>>, vector<1x128xf32>
    %236 = vector.broadcast %235 : vector<1x128xf32> to vector<16x128xf32>
    %237 = arith.addf %234, %236 : vector<16x128xf32>
    %c0_107 = arith.constant 0 : index
    %c0_108 = arith.constant 0 : index
    %238 = vector.load %arg26[%c0_107, %c0_108] : memref<128x128xf32, #tpu.memory_space<vmem>>, vector<128x128xf32>
    %cst_109 = arith.constant dense<0.000000e+00> : vector<16x128xf32>
    %239 = tpu.matmul %60, %238, %cst_109 {dimension_numbers = #tpu.dot_dimension_numbers<[1], [0], [0], [1], [0, 0, 1, 1], [], []>} : vector<16x128xf32>, vector<128x128xf32>, vector<16x128xf32> -> vector<16x128xf32>
    %c0_110 = arith.constant 0 : index
    %c0_111 = arith.constant 0 : index
    %240 = vector.load %arg27[%c0_110, %c0_111] : memref<128x128xf32, #tpu.memory_space<vmem>>, vector<128x128xf32>
    %cst_112 = arith.constant dense<0.000000e+00> : vector<16x128xf32>
    %241 = tpu.matmul %237, %240, %cst_112 {dimension_numbers = #tpu.dot_dimension_numbers<[1], [0], [0], [1], [0, 0, 1, 1], [], []>} : vector<16x128xf32>, vector<128x128xf32>, vector<16x128xf32> -> vector<16x128xf32>
    %242 = arith.addf %239, %241 : vector<16x128xf32>
    %c0_113 = arith.constant 0 : index
    %c0_114 = arith.constant 0 : index
    %243 = vector.load %arg28[%c0_113, %c0_114] : memref<1x128xf32, #tpu.memory_space<vmem>>, vector<1x128xf32>
    %244 = vector.broadcast %243 : vector<1x128xf32> to vector<16x128xf32>
    %245 = arith.addf %242, %244 : vector<16x128xf32>
    %cst_115 = arith.constant dense<0.000000e+00> : vector<16xf32>
    %246 = vector.multi_reduction <add>, %245, %cst_115 [1] : vector<16x128xf32> to vector<16xf32>
    %247 = vector.shape_cast %246 : vector<16xf32> to vector<16x1xf32>
    %cst_116 = arith.constant 1.280000e+02 : f32
    %248 = vector.broadcast %cst_116 : f32 to vector<16x1xf32>
    %249 = arith.divf %247, %248 : vector<16x1xf32>
    %250 = vector.broadcast %249 : vector<16x1xf32> to vector<16x128xf32>
    %251 = arith.subf %245, %250 : vector<16x128xf32>
    %252 = arith.mulf %251, %251 : vector<16x128xf32>
    %cst_117 = arith.constant dense<0.000000e+00> : vector<16xf32>
    %253 = vector.multi_reduction <add>, %252, %cst_117 [1] : vector<16x128xf32> to vector<16xf32>
    %254 = vector.shape_cast %253 : vector<16xf32> to vector<16x1xf32>
    %cst_118 = arith.constant 1.280000e+02 : f32
    %255 = vector.broadcast %cst_118 : f32 to vector<16x1xf32>
    %256 = arith.divf %254, %255 : vector<16x1xf32>
    %257 = vector.broadcast %249 : vector<16x1xf32> to vector<16x128xf32>
    %258 = arith.subf %245, %257 : vector<16x128xf32>
    %cst_119 = arith.constant 9.99999974E-6 : f32
    %259 = vector.broadcast %cst_119 : f32 to vector<16x1xf32>
    %260 = arith.addf %256, %259 : vector<16x1xf32>
    %261 = math.rsqrt %260 : vector<16x1xf32>
    %262 = vector.broadcast %261 : vector<16x1xf32> to vector<16x128xf32>
    %263 = arith.mulf %258, %262 : vector<16x128xf32>
    %c0_120 = arith.constant 0 : index
    %c0_121 = arith.constant 0 : index
    %264 = vector.load %arg29[%c0_120, %c0_121] : memref<1x128xf32, #tpu.memory_space<vmem>>, vector<1x128xf32>
    %265 = vector.broadcast %264 : vector<1x128xf32> to vector<16x128xf32>
    %266 = arith.mulf %263, %265 : vector<16x128xf32>
    %c0_122 = arith.constant 0 : index
    %c0_123 = arith.constant 0 : index
    %267 = vector.load %arg30[%c0_122, %c0_123] : memref<1x128xf32, #tpu.memory_space<vmem>>, vector<1x128xf32>
    %268 = vector.broadcast %267 : vector<1x128xf32> to vector<16x128xf32>
    %269 = arith.addf %266, %268 : vector<16x128xf32>
    %cst_124 = arith.constant 0.000000e+00 : f32
    %270 = vector.broadcast %cst_124 : f32 to vector<16x128xf32>
    %271 = arith.maximumf %269, %270 : vector<16x128xf32>
    %c0_125 = arith.constant 0 : index
    %c0_126 = arith.constant 0 : index
    %272 = vector.load %arg45[%c0_125, %c0_126] : memref<16x128xf32, #tpu.memory_space<vmem>>, vector<16x128xf32>
    tpu.vector_store %arg45[%c0_125, %c0_126], %271 {strides = array<i32>} : memref<16x128xf32, #tpu.memory_space<vmem>>, vector<16x128xf32>,
    %c0_127 = arith.constant 0 : index
    %c0_128 = arith.constant 0 : index
    %273 = vector.load %arg31[%c0_127, %c0_128] : memref<128x256xf32, #tpu.memory_space<vmem>>, vector<128x256xf32>
    %cst_129 = arith.constant dense<0.000000e+00> : vector<16x256xf32>
    %274 = tpu.matmul %60, %273, %cst_129 {dimension_numbers = #tpu.dot_dimension_numbers<[1], [0], [0], [1], [0, 0, 1, 1], [], []>} : vector<16x128xf32>, vector<128x256xf32>, vector<16x256xf32> -> vector<16x256xf32>
    %c0_130 = arith.constant 0 : index
    %c0_131 = arith.constant 0 : index
    %275 = vector.load %arg32[%c0_130, %c0_131] : memref<1x256xf32, #tpu.memory_space<vmem>>, vector<1x256xf32>
    %276 = vector.broadcast %275 : vector<1x256xf32> to vector<16x256xf32>
    %277 = arith.addf %274, %276 : vector<16x256xf32>
    %cst_132 = arith.constant 0.000000e+00 : f32
    %278 = vector.broadcast %cst_132 : f32 to vector<16x256xf32>
    %279 = arith.maximumf %277, %278 : vector<16x256xf32>
    %c0_133 = arith.constant 0 : index
    %c0_134 = arith.constant 0 : index
    %280 = vector.load %arg33[%c0_133, %c0_134] : memref<1x256xf32, #tpu.memory_space<vmem>>, vector<1x256xf32>
    %281 = vector.broadcast %280 : vector<1x256xf32> to vector<16x256xf32>
    %282 = arith.mulf %279, %281 : vector<16x256xf32>
    %cst_135 = arith.constant dense<0.000000e+00> : vector<16xf32>
    %283 = vector.multi_reduction <add>, %282, %cst_135 [1] : vector<16x256xf32> to vector<16xf32>
    %284 = vector.shape_cast %283 : vector<16xf32> to vector<16x1xf32>
    %c0_136 = arith.constant 0 : index
    %c0_137 = arith.constant 0 : index
    %285 = vector.load %arg34[%c0_136, %c0_137] : memref<1x1xf32, #tpu.memory_space<vmem>>, vector<1x1xf32>
    %286 = vector.broadcast %285 : vector<1x1xf32> to vector<16x1xf32>
    %287 = arith.addf %284, %286 : vector<16x1xf32>
    %c0_138 = arith.constant 0 : index
    %c0_139 = arith.constant 0 : index
    %288 = vector.load %arg46[%c0_138, %c0_139] : memref<16x1xf32, #tpu.memory_space<vmem>>, vector<16x1xf32>
    tpu.vector_store %arg46[%c0_138, %c0_139], %287 {strides = array<i32>} : memref<16x1xf32, #tpu.memory_space<vmem>>, vector<16x1xf32>,
    %c0_140 = arith.constant 0 : index
    %c0_141 = arith.constant 0 : index
    %289 = vector.load %arg35[%c0_140, %c0_141] : memref<128x256xf32, #tpu.memory_space<vmem>>, vector<128x256xf32>
    %cst_142 = arith.constant dense<0.000000e+00> : vector<32x256xf32>
    %290 = tpu.matmul %121, %289, %cst_142 {dimension_numbers = #tpu.dot_dimension_numbers<[1], [0], [0], [1], [0, 0, 1, 1], [], []>} : vector<32x128xf32>, vector<128x256xf32>, vector<32x256xf32> -> vector<32x256xf32>
    %c0_143 = arith.constant 0 : index
    %c0_144 = arith.constant 0 : index
    %291 = vector.load %arg36[%c0_143, %c0_144] : memref<1x256xf32, #tpu.memory_space<vmem>>, vector<1x256xf32>
    %292 = vector.broadcast %291 : vector<1x256xf32> to vector<32x256xf32>
    %293 = arith.addf %290, %292 : vector<32x256xf32>
    %cst_145 = arith.constant 0.000000e+00 : f32
    %294 = vector.broadcast %cst_145 : f32 to vector<32x256xf32>
    %295 = arith.maximumf %293, %294 : vector<32x256xf32>
    %c0_146 = arith.constant 0 : index
    %c0_147 = arith.constant 0 : index
    %296 = vector.load %arg37[%c0_146, %c0_147] : memref<1x256xf32, #tpu.memory_space<vmem>>, vector<1x256xf32>
    %297 = vector.broadcast %296 : vector<1x256xf32> to vector<32x256xf32>
    %298 = arith.mulf %295, %297 : vector<32x256xf32>
    %cst_148 = arith.constant dense<0.000000e+00> : vector<32xf32>
    %299 = vector.multi_reduction <add>, %298, %cst_148 [1] : vector<32x256xf32> to vector<32xf32>
    %300 = vector.shape_cast %299 : vector<32xf32> to vector<32x1xf32>
    %c0_149 = arith.constant 0 : index
    %c0_150 = arith.constant 0 : index
    %301 = vector.load %arg38[%c0_149, %c0_150] : memref<1x1xf32, #tpu.memory_space<vmem>>, vector<1x1xf32>
    %302 = vector.broadcast %301 : vector<1x1xf32> to vector<32x1xf32>
    %303 = arith.addf %300, %302 : vector<32x1xf32>
    %c0_151 = arith.constant 0 : index
    %c0_152 = arith.constant 0 : index
    %304 = vector.load %arg47[%c0_151, %c0_152] : memref<32x1xf32, #tpu.memory_space<vmem>>, vector<32x1xf32>
    tpu.vector_store %arg47[%c0_151, %c0_152], %303 {strides = array<i32>} : memref<32x1xf32, #tpu.memory_space<vmem>>, vector<32x1xf32>,
    %c0_153 = arith.constant 0 : index
    %c0_154 = arith.constant 0 : index
    %305 = vector.load %arg39[%c0_153, %c0_154] : memref<128x256xf32, #tpu.memory_space<vmem>>, vector<128x256xf32>
    %cst_155 = arith.constant dense<0.000000e+00> : vector<16x256xf32>
    %306 = tpu.matmul %271, %305, %cst_155 {dimension_numbers = #tpu.dot_dimension_numbers<[1], [0], [0], [1], [0, 0, 1, 1], [], []>} : vector<16x128xf32>, vector<128x256xf32>, vector<16x256xf32> -> vector<16x256xf32>
    %c0_156 = arith.constant 0 : index
    %c0_157 = arith.constant 0 : index
    %307 = vector.load %arg40[%c0_156, %c0_157] : memref<1x256xf32, #tpu.memory_space<vmem>>, vector<1x256xf32>
    %308 = vector.broadcast %307 : vector<1x256xf32> to vector<16x256xf32>
    %309 = arith.addf %306, %308 : vector<16x256xf32>
    %cst_158 = arith.constant 0.000000e+00 : f32
    %310 = vector.broadcast %cst_158 : f32 to vector<16x256xf32>
    %311 = arith.maximumf %309, %310 : vector<16x256xf32>
    %c0_159 = arith.constant 0 : index
    %c0_160 = arith.constant 0 : index
    %312 = vector.load %arg41[%c0_159, %c0_160] : memref<1x256xf32, #tpu.memory_space<vmem>>, vector<1x256xf32>
    %313 = vector.broadcast %312 : vector<1x256xf32> to vector<16x256xf32>
    %314 = arith.mulf %311, %313 : vector<16x256xf32>
    %cst_161 = arith.constant dense<0.000000e+00> : vector<16xf32>
    %315 = vector.multi_reduction <add>, %314, %cst_161 [1] : vector<16x256xf32> to vector<16xf32>
    %316 = vector.shape_cast %315 : vector<16xf32> to vector<16x1xf32>
    %c0_162 = arith.constant 0 : index
    %c0_163 = arith.constant 0 : index
    %317 = vector.load %arg42[%c0_162, %c0_163] : memref<1x1xf32, #tpu.memory_space<vmem>>, vector<1x1xf32>
    %318 = vector.broadcast %317 : vector<1x1xf32> to vector<16x1xf32>
    %319 = arith.addf %316, %318 : vector<16x1xf32>
    %c0_164 = arith.constant 0 : index
    %c0_165 = arith.constant 0 : index
    %320 = vector.load %arg48[%c0_164, %c0_165] : memref<16x1xf32, #tpu.memory_space<vmem>>, vector<16x1xf32>
    tpu.vector_store %arg48[%c0_164, %c0_165], %319 {strides = array<i32>} : memref<16x1xf32, #tpu.memory_space<vmem>>, vector<16x1xf32>,
    return
  }
}

</mosaic_0001>

<llo_original>
// kernel: forward.1
$region0: #{forward.1}
  #allocation0 [shape = 'u32[]', space=smem, size = 0x4, offset = 0x4, fixed_abs, tag = 'smem constant byte address 0x4 - core index']
  #allocation1 [shape = 'u32[144,128]{1,0:T(1,128)}', space=vmem, size = 0x12000, scoped, tag = 'internal scratch']
  #allocation2 [shape = 'f32[1,1]{1,0:T(1,128)S(1)}', space=vmem, size = 0x200, scoped, tag = 'scoped memory for forward.1']
  #allocation3 [shape = 'f32[1,1]{1,0:T(1,128)S(1)}', space=vmem, size = 0x200, scoped, tag = 'scoped memory for forward.1']
  #allocation4 [shape = 'f32[1,1]{1,0:T(1,128)S(1)}', space=vmem, size = 0x200, scoped, tag = 'scoped memory for forward.1']
  %s0 = inlined_call_operand.smem [shape: u32[49], index: -1, kind: input, shape index: {}]
  %s1 = sld [smem:[%s0]]
  %s2 = scalar_lea.smem %s0, 1
  %s3 = sld [smem:[%s2]]
  %s4 = scalar_lea.smem %s0, 2
  %s5 = sld [smem:[%s4]]
  %s6 = scalar_lea.smem %s0, 3
  %s7 = sld [smem:[%s6]]
  %s8 = scalar_lea.smem %s0, 4
  %s9 = sld [smem:[%s8]]
  %s10 = scalar_lea.smem %s0, 5
  %s11 = sld [smem:[%s10]]
  %s12 = scalar_lea.smem %s0, 6
  %s13 = sld [smem:[%s12]]
  %s14 = scalar_lea.smem %s0, 7
  %s15 = sld [smem:[%s14]]
  %s16 = scalar_lea.smem %s0, 8
  %s17 = sld [smem:[%s16]]
  %s18 = scalar_lea.smem %s0, 9
  %s19 = sld [smem:[%s18]]
  %s20 = scalar_lea.smem %s0, 10
  %s21 = sld [smem:[%s20]]
  %s22 = scalar_lea.smem %s0, 11
  %s23 = sld [smem:[%s22]]
  %s24 = scalar_lea.smem %s0, 12
  %s25 = sld [smem:[%s24]]
  %s26 = scalar_lea.smem %s0, 13
  %s27 = sld [smem:[%s26]]
  %s28 = scalar_lea.smem %s0, 14
  %s29 = sld [smem:[%s28]]
  %s30 = scalar_lea.smem %s0, 15
  %s31 = sld [smem:[%s30]]
  %s32 = scalar_lea.smem %s0, 16
  %s33 = sld [smem:[%s32]]
  %s34 = scalar_lea.smem %s0, 17
  %s35 = sld [smem:[%s34]]
  %s36 = scalar_lea.smem %s0, 18
  %s37 = sld [smem:[%s36]]
  %s38 = scalar_lea.smem %s0, 19
  %s39 = sld [smem:[%s38]]
  %s40 = scalar_lea.smem %s0, 20
  %s41 = sld [smem:[%s40]]
  %s42 = scalar_lea.smem %s0, 21
  %s43 = sld [smem:[%s42]]
  %s44 = scalar_lea.smem %s0, 22
  %s45 = sld [smem:[%s44]]
  %s46 = scalar_lea.smem %s0, 23
  %s47 = sld [smem:[%s46]]
  %s48 = scalar_lea.smem %s0, 24
  %s49 = sld [smem:[%s48]]
  %s50 = scalar_lea.smem %s0, 25
  %s51 = sld [smem:[%s50]]
  %s52 = scalar_lea.smem %s0, 26
  %s53 = sld [smem:[%s52]]
  %s54 = scalar_lea.smem %s0, 27
  %s55 = sld [smem:[%s54]]
  %s56 = scalar_lea.smem %s0, 28
  %s57 = sld [smem:[%s56]]
  %s58 = scalar_lea.smem %s0, 29
  %s59 = sld [smem:[%s58]]
  %s60 = scalar_lea.smem %s0, 30
  %s61 = sld [smem:[%s60]]
  %s62 = scalar_lea.smem %s0, 31
  %s63 = sld [smem:[%s62]]
  %s64 = scalar_lea.smem %s0, 32
  %s65 = sld [smem:[%s64]]
  %s66 = scalar_lea.smem %s0, 33
  %s67 = sld [smem:[%s66]]
  %s68 = scalar_lea.smem %s0, 34
  %s69 = sld [smem:[%s68]]
  %s70 = scalar_lea.smem %s0, 35
  %s71 = sld [smem:[%s70]]
  %s72 = scalar_lea.smem %s0, 36
  %s73 = sld [smem:[%s72]]
  %s74 = scalar_lea.smem %s0, 37
  %s75 = sld [smem:[%s74]]
  %s76 = scalar_lea.smem %s0, 38
  %s77 = sld [smem:[%s76]]
  %s78 = scalar_lea.smem %s0, 39
  %s79 = sld [smem:[%s78]]
  %s80 = scalar_lea.smem %s0, 40
  %s81 = sld [smem:[%s80]]
  %s82 = scalar_lea.smem %s0, 41
  %s83 = sld [smem:[%s82]]
  %s84 = scalar_lea.smem %s0, 42
  %s85 = sld [smem:[%s84]]
  %s86 = scalar_lea.smem %s0, 43
  %s87 = sld [smem:[%s86]]
  %s88 = scalar_lea.smem %s0, 44
  %s89 = sld [smem:[%s88]]
  %s90 = scalar_lea.smem %s0, 45
  %s91 = sld [smem:[%s90]]
  %s92 = scalar_lea.smem %s0, 46
  %s93 = sld [smem:[%s92]]
  %s94 = scalar_lea.smem %s0, 47
  %s95 = sld [smem:[%s94]]
  %s96 = scalar_lea.smem %s0, 48
  %s97 = sld [smem:[%s96]]
  %98 = xla_tuple %s87, %s89, %s91, %s93, %s95, %s97
  %s99 = sld [smem:[#allocation0]]
  $region370: #{forward.1} parent=0
    _
  %s101 = ssub.s32 1, %s99
  %s102 = scalar_select 0, %s101, %s99
  %v103 = vstv %s69
  %104 = vst [vmem:[#allocation2] sm:$0x1] %v103
  %v105 = vstv %s77
  %106 = vst [vmem:[#allocation3] sm:$0x1] %v105
  %v107 = vstv %s85
  %108 = vst [vmem:[#allocation4] sm:$0x1] %v107
  $region1: #{forward.1} parent=0
    #allocation5 [shape = 'u8[1048576]{0}', space=vmem, size = 0x100000, scoped, tag = 'input window, operand 2, single buffered']
    #allocation6 [shape = 's32[1]{0}', space=sflag, size = 0x4, scoped, tag = 'scoped memory for forward.1']
    #allocation7 [shape = 's32[1]{0}', space=sflag, size = 0x4, scoped, tag = 'scoped memory for forward.1']
    #allocation8 [shape = 'u8[1024]{0}', space=vmem, size = 0x400, scoped, tag = 'input window, operand 4, single buffered']
    #allocation9 [shape = 's32[1]{0}', space=sflag, size = 0x4, scoped, tag = 'scoped memory for forward.1']
    #allocation10 [shape = 'u8[1024]{0}', space=vmem, size = 0x400, scoped, tag = 'input window, operand 5, single buffered']
    #allocation11 [shape = 'u8[131072]{0}', space=vmem, size = 0x20000, scoped, tag = 'input window, operand 6, single buffered']
    #allocation12 [shape = 's32[1]{0}', space=sflag, size = 0x4, scoped, tag = 'scoped memory for forward.1']
    #allocation13 [shape = 'u8[512]{0}', space=vmem, size = 0x400, scoped, tag = 'input window, operand 7, single buffered']
    #allocation14 [shape = 'u8[512]{0}', space=vmem, size = 0x400, scoped, tag = 'input window, operand 8, single buffered']
    #allocation15 [shape = 's32[1]{0}', space=sflag, size = 0x4, scoped, tag = 'scoped memory for forward.1']
    #allocation16 [shape = 'u8[512]{0}', space=vmem, size = 0x400, scoped, tag = 'input window, operand 9, single buffered']
    #allocation17 [shape = 'u8[131072]{0}', space=vmem, size = 0x20000, scoped, tag = 'input window, operand 10, single buffered']
    #allocation18 [shape = 's32[1]{0}', space=sflag, size = 0x4, scoped, tag = 'scoped memory for forward.1']
    #allocation19 [shape = 'u8[1024]{0}', space=vmem, size = 0x400, scoped, tag = 'input window, operand 11, single buffered']
    #allocation20 [shape = 'u8[1024]{0}', space=vmem, size = 0x400, scoped, tag = 'input window, operand 12, single buffered']
    #allocation21 [shape = 's32[1]{0}', space=sflag, size = 0x4, scoped, tag = 'scoped memory for forward.1']
    #allocation22 [shape = 'u8[1024]{0}', space=vmem, size = 0x400, scoped, tag = 'input window, operand 13, single buffered']
    #allocation23 [shape = 'u8[131072]{0}', space=vmem, size = 0x20000, scoped, tag = 'input window, operand 14, single buffered']
    #allocation24 [shape = 's32[1]{0}', space=sflag, size = 0x4, scoped, tag = 'scoped memory for forward.1']
    #allocation25 [shape = 'u8[512]{0}', space=vmem, size = 0x400, scoped, tag = 'input window, operand 15, single buffered']
    #allocation26 [shape = 'u8[512]{0}', space=vmem, size = 0x400, scoped, tag = 'input window, operand 16, single buffered']
    #allocation27 [shape = 's32[1]{0}', space=sflag, size = 0x4, scoped, tag = 'scoped memory for forward.1']
    #allocation28 [shape = 'u8[512]{0}', space=vmem, size = 0x400, scoped, tag = 'input window, operand 17, single buffered']
    #allocation29 [shape = 'u8[65536]{0}', space=vmem, size = 0x10000, scoped, tag = 'input window, operand 18, single buffered']
    #allocation30 [shape = 's32[1]{0}', space=sflag, size = 0x4, scoped, tag = 'scoped memory for forward.1']
    #allocation31 [shape = 'u8[65536]{0}', space=vmem, size = 0x10000, scoped, tag = 'input window, operand 19, single buffered']
    #allocation32 [shape = 'u8[65536]{0}', space=vmem, size = 0x10000, scoped, tag = 'input window, operand 20, single buffered']
    #allocation33 [shape = 's32[1]{0}', space=sflag, size = 0x4, scoped, tag = 'scoped memory for forward.1']
    #allocation34 [shape = 'u8[512]{0}', space=vmem, size = 0x400, scoped, tag = 'input window, operand 21, single buffered']
    #allocation35 [shape = 'u8[512]{0}', space=vmem, size = 0x400, scoped, tag = 'input window, operand 22, single buffered']
    #allocation36 [shape = 's32[1]{0}', space=sflag, size = 0x4, scoped, tag = 'scoped memory for forward.1']
    #allocation37 [shape = 'u8[512]{0}', space=vmem, size = 0x400, scoped, tag = 'input window, operand 23, single buffered']
    #allocation38 [shape = 'u8[65536]{0}', space=vmem, size = 0x10000, scoped, tag = 'input window, operand 24, single buffered']
    #allocation39 [shape = 's32[1]{0}', space=sflag, size = 0x4, scoped, tag = 'scoped memory for forward.1']
    #allocation40 [shape = 'u8[512]{0}', space=vmem, size = 0x400, scoped, tag = 'input window, operand 25, single buffered']
    #allocation41 [shape = 'u8[65536]{0}', space=vmem, size = 0x10000, scoped, tag = 'input window, operand 26, single buffered']
    #allocation42 [shape = 's32[1]{0}', space=sflag, size = 0x4, scoped, tag = 'scoped memory for forward.1']
    #allocation43 [shape = 'u8[65536]{0}', space=vmem, size = 0x10000, scoped, tag = 'input window, operand 27, single buffered']
    #allocation44 [shape = 'u8[512]{0}', space=vmem, size = 0x400, scoped, tag = 'input window, operand 28, single buffered']
    #allocation45 [shape = 's32[1]{0}', space=sflag, size = 0x4, scoped, tag = 'scoped memory for forward.1']
    #allocation46 [shape = 'u8[512]{0}', space=vmem, size = 0x400, scoped, tag = 'input window, operand 29, single buffered']
    #allocation47 [shape = 'u8[512]{0}', space=vmem, size = 0x400, scoped, tag = 'input window, operand 30, single buffered']
    #allocation48 [shape = 's32[1]{0}', space=sflag, size = 0x4, scoped, tag = 'scoped memory for forward.1']
    #allocation49 [shape = 'u8[131072]{0}', space=vmem, size = 0x20000, scoped, tag = 'input window, operand 31, single buffered']
    #allocation50 [shape = 'u8[1024]{0}', space=vmem, size = 0x400, scoped, tag = 'input window, operand 32, single buffered']
    #allocation51 [shape = 's32[1]{0}', space=sflag, size = 0x4, scoped, tag = 'scoped memory for forward.1']
    #allocation52 [shape = 'u8[1024]{0}', space=vmem, size = 0x400, scoped, tag = 'input window, operand 33, single buffered']
    #allocation53 [shape = 'u8[131072]{0}', space=vmem, size = 0x20000, scoped, tag = 'input window, operand 35, single buffered']
    #allocation54 [shape = 's32[1]{0}', space=sflag, size = 0x4, scoped, tag = 'scoped memory for forward.1']
    #allocation55 [shape = 'u8[1024]{0}', space=vmem, size = 0x400, scoped, tag = 'input window, operand 36, single buffered']
    #allocation56 [shape = 'u8[1024]{0}', space=vmem, size = 0x400, scoped, tag = 'input window, operand 37, single buffered']
    #allocation57 [shape = 's32[1]{0}', space=sflag, size = 0x4, scoped, tag = 'scoped memory for forward.1']
    #allocation58 [shape = 'u8[131072]{0}', space=vmem, size = 0x20000, scoped, tag = 'input window, operand 39, single buffered']
    #allocation59 [shape = 'u8[1024]{0}', space=vmem, size = 0x400, scoped, tag = 'input window, operand 40, single buffered']
    #allocation60 [shape = 's32[1]{0}', space=sflag, size = 0x4, scoped, tag = 'scoped memory for forward.1']
    #allocation61 [shape = 'u8[1024]{0}', space=vmem, size = 0x400, scoped, tag = 'input window, operand 41, single buffered']
    #allocation62 [shape = 'u8[8192]{0}', space=vmem, size = 0x2000, scoped, tag = 'output window, operand 0, single buffered']
    #allocation63 [shape = 'u8[16384]{0}', space=vmem, size = 0x4000, scoped, tag = 'output window, operand 1, single buffered']
    #allocation64 [shape = 's32[1]{0}', space=sflag, size = 0x4, scoped, tag = 'scoped memory for forward.1']
    #allocation65 [shape = 'u8[8192]{0}', space=vmem, size = 0x2000, scoped, tag = 'output window, operand 2, single buffered']
    %109 = vsyncpa [#allocation6], 0
    %110 = vsyncpa [#allocation9], 0
    %111 = vsyncpa [#allocation12], 0
    %112 = vsyncpa [#allocation15], 0
    %113 = vsyncpa [#allocation18], 0
    %114 = vsyncpa [#allocation21], 0
    %115 = vsyncpa [#allocation24], 0
    %116 = vsyncpa [#allocation27], 0
    %117 = vsyncpa [#allocation30], 0
    %118 = vsyncpa [#allocation33], 0
    %119 = vsyncpa [#allocation36], 0
    %120 = vsyncpa [#allocation39], 0
    %121 = vsyncpa [#allocation42], 0
    %122 = vsyncpa [#allocation45], 0
    %123 = vsyncpa [#allocation48], 0
    %124 = vsyncpa [#allocation51], 0
    %125 = vsyncpa [#allocation54], 0
    %126 = vsyncpa [#allocation57], 0
    %127 = vsyncpa [#allocation60], 0
    %128 = vsyncpa [#allocation7], 0
    %129 = vsyncpa [#allocation64], 0
    // Predicated region
    $region2: #{forward.1} parent=1 // pred_check
      _
    $region3: #{forward.1} parent=1 // pred_check_branch
      %131 = sbr.rel (0) target = $region5
    $region4: #{forward.1} parent=1 // pred_region
      _
    $region5: #{forward.1} parent=1 // pred_fallthru
      _
    // Predicated region
    $region6: #{forward.1} parent=1 // pred_check
      _
    $region7: #{forward.1} parent=1 // pred_check_branch
      %133 = sbr.rel (0) target = $region9
    $region8: #{forward.1} parent=1 // pred_region
      _
    $region9: #{forward.1} parent=1 // pred_fallthru
      _
    // Predicated region
    $region10: #{forward.1} parent=1 // pred_check
      _
    $region11: #{forward.1} parent=1 // pred_check_branch
      %135 = sbr.rel (0) target = $region13
    $region12: #{forward.1} parent=1 // pred_region
      %s137 = ssub.s32 32768, 32768
      %138 = vsyncadd [#allocation6], %s137
      %s139 = sshll.u32 [#allocation5], 4
      %s140 = int_to_ptr.vmem [resolvable:$true] %s139
      %145 = dma.hbm_to_vmem [thread:$0]  %s5, 32768, %s140, [#allocation6], 256, 256, 16
    $region13: #{forward.1} parent=1 // pred_fallthru
      _
    // Predicated region
    $region14: #{forward.1} parent=1 // pred_check
      _
    $region15: #{forward.1} parent=1 // pred_check_branch
      %147 = sbr.rel (0) target = $region17
    $region16: #{forward.1} parent=1 // pred_region
      _
    $region17: #{forward.1} parent=1 // pred_fallthru
      _
    // Predicated region
    $region18: #{forward.1} parent=1 // pred_check
      _
    $region19: #{forward.1} parent=1 // pred_check_branch
      %149 = sbr.rel (0) target = $region21
    $region20: #{forward.1} parent=1 // pred_region
      %s151 = ssub.s32 32, 32
      %152 = vsyncadd [#allocation9], %s151
      %s154 = sshll.u32 [#allocation8], 4
      %s155 = int_to_ptr.vmem [resolvable:$true] %s154
      %157 = dma.hbm_to_vmem [thread:$0]  %s9, 32, %s155, [#allocation9]
    $region21: #{forward.1} parent=1 // pred_fallthru
      _
    // Predicated region
    $region22: #{forward.1} parent=1 // pred_check
      _
    $region23: #{forward.1} parent=1 // pred_check_branch
      %159 = sbr.rel (0) target = $region25
    $region24: #{forward.1} parent=1 // pred_region
      %s161 = ssub.s32 32, 32
      %162 = vsyncadd [#allocation9], %s161
      %s164 = sshll.u32 [#allocation10], 4
      %s165 = int_to_ptr.vmem [resolvable:$true] %s164
      %167 = dma.hbm_to_vmem [thread:$0]  %s11, 32, %s165, [#allocation9]
    $region25: #{forward.1} parent=1 // pred_fallthru
      _
    // Predicated region
    $region26: #{forward.1} parent=1 // pred_check
      _
    $region27: #{forward.1} parent=1 // pred_check_branch
      %169 = sbr.rel (0) target = $region29
    $region28: #{forward.1} parent=1 // pred_region
      %s171 = ssub.s32 4096, 4096
      %172 = vsyncadd [#allocation12], %s171
      %s173 = sshll.u32 [#allocation11], 4
      %s174 = int_to_ptr.vmem [resolvable:$true] %s173
      %179 = dma.hbm_to_vmem [thread:$0]  %s13, 4096, %s174, [#allocation12], 128, 128, 8
    $region29: #{forward.1} parent=1 // pred_fallthru
      _
    // Predicated region
    $region30: #{forward.1} parent=1 // pred_check
      _
    $region31: #{forward.1} parent=1 // pred_check_branch
      %181 = sbr.rel (0) target = $region33
    $region32: #{forward.1} parent=1 // pred_region
      %s183 = ssub.s32 16, 16
      %184 = vsyncadd [#allocation12], %s183
      %s186 = sshll.u32 [#allocation13], 4
      %s187 = int_to_ptr.vmem [resolvable:$true] %s186
      %189 = dma.hbm_to_vmem [thread:$0]  %s15, 16, %s187, [#allocation12]
    $region33: #{forward.1} parent=1 // pred_fallthru
      _
    // Predicated region
    $region34: #{forward.1} parent=1 // pred_check
      _
    $region35: #{forward.1} parent=1 // pred_check_branch
      %191 = sbr.rel (0) target = $region37
    $region36: #{forward.1} parent=1 // pred_region
      %s193 = ssub.s32 16, 16
      %194 = vsyncadd [#allocation15], %s193
      %s196 = sshll.u32 [#allocation14], 4
      %s197 = int_to_ptr.vmem [resolvable:$true] %s196
      %199 = dma.hbm_to_vmem [thread:$0]  %s17, 16, %s197, [#allocation15]
    $region37: #{forward.1} parent=1 // pred_fallthru
      _
    // Predicated region
    $region38: #{forward.1} parent=1 // pred_check
      _
    $region39: #{forward.1} parent=1 // pred_check_branch
      %201 = sbr.rel (0) target = $region41
    $region40: #{forward.1} parent=1 // pred_region
      %s203 = ssub.s32 16, 16
      %204 = vsyncadd [#allocation15], %s203
      %s206 = sshll.u32 [#allocation16], 4
      %s207 = int_to_ptr.vmem [resolvable:$true] %s206
      %209 = dma.hbm_to_vmem [thread:$0]  %s19, 16, %s207, [#allocation15]
    $region41: #{forward.1} parent=1 // pred_fallthru
      _
    // Predicated region
    $region42: #{forward.1} parent=1 // pred_check
      _
    $region43: #{forward.1} parent=1 // pred_check_branch
      %211 = sbr.rel (0) target = $region45
    $region44: #{forward.1} parent=1 // pred_region
      %s213 = ssub.s32 4096, 4096
      %214 = vsyncadd [#allocation18], %s213
      %s215 = sshll.u32 [#allocation17], 4
      %s216 = int_to_ptr.vmem [resolvable:$true] %s215
      %221 = dma.hbm_to_vmem [thread:$0]  %s21, 4096, %s216, [#allocation18], 256, 256, 16
    $region45: #{forward.1} parent=1 // pred_fallthru
      _
    // Predicated region
    $region46: #{forward.1} parent=1 // pred_check
      _
    $region47: #{forward.1} parent=1 // pred_check_branch
      %223 = sbr.rel (0) target = $region49
    $region48: #{forward.1} parent=1 // pred_region
      %s225 = ssub.s32 32, 32
      %226 = vsyncadd [#allocation18], %s225
      %s228 = sshll.u32 [#allocation19], 4
      %s229 = int_to_ptr.vmem [resolvable:$true] %s228
      %231 = dma.hbm_to_vmem [thread:$0]  %s23, 32, %s229, [#allocation18]
    $region49: #{forward.1} parent=1 // pred_fallthru
      _
    // Predicated region
    $region50: #{forward.1} parent=1 // pred_check
      _
    $region51: #{forward.1} parent=1 // pred_check_branch
      %233 = sbr.rel (0) target = $region53
    $region52: #{forward.1} parent=1 // pred_region
      %s235 = ssub.s32 32, 32
      %236 = vsyncadd [#allocation21], %s235
      %s238 = sshll.u32 [#allocation20], 4
      %s239 = int_to_ptr.vmem [resolvable:$true] %s238
      %241 = dma.hbm_to_vmem [thread:$0]  %s25, 32, %s239, [#allocation21]
    $region53: #{forward.1} parent=1 // pred_fallthru
      _
    // Predicated region
    $region54: #{forward.1} parent=1 // pred_check
      _
    $region55: #{forward.1} parent=1 // pred_check_branch
      %243 = sbr.rel (0) target = $region57
    $region56: #{forward.1} parent=1 // pred_region
      %s245 = ssub.s32 32, 32
      %246 = vsyncadd [#allocation21], %s245
      %s248 = sshll.u32 [#allocation22], 4
      %s249 = int_to_ptr.vmem [resolvable:$true] %s248
      %251 = dma.hbm_to_vmem [thread:$0]  %s27, 32, %s249, [#allocation21]
    $region57: #{forward.1} parent=1 // pred_fallthru
      _
    // Predicated region
    $region58: #{forward.1} parent=1 // pred_check
      _
    $region59: #{forward.1} parent=1 // pred_check_branch
      %253 = sbr.rel (0) target = $region61
    $region60: #{forward.1} parent=1 // pred_region
      %s255 = ssub.s32 4096, 4096
      %256 = vsyncadd [#allocation24], %s255
      %s257 = sshll.u32 [#allocation23], 4
      %s258 = int_to_ptr.vmem [resolvable:$true] %s257
      %263 = dma.hbm_to_vmem [thread:$0]  %s29, 4096, %s258, [#allocation24], 128, 128, 8
    $region61: #{forward.1} parent=1 // pred_fallthru
      _
    // Predicated region
    $region62: #{forward.1} parent=1 // pred_check
      _
    $region63: #{forward.1} parent=1 // pred_check_branch
      %265 = sbr.rel (0) target = $region65
    $region64: #{forward.1} parent=1 // pred_region
      %s267 = ssub.s32 16, 16
      %268 = vsyncadd [#allocation24], %s267
      %s270 = sshll.u32 [#allocation25], 4
      %s271 = int_to_ptr.vmem [resolvable:$true] %s270
      %273 = dma.hbm_to_vmem [thread:$0]  %s31, 16, %s271, [#allocation24]
    $region65: #{forward.1} parent=1 // pred_fallthru
      _
    // Predicated region
    $region66: #{forward.1} parent=1 // pred_check
      _
    $region67: #{forward.1} parent=1 // pred_check_branch
      %275 = sbr.rel (0) target = $region69
    $region68: #{forward.1} parent=1 // pred_region
      %s277 = ssub.s32 16, 16
      %278 = vsyncadd [#allocation27], %s277
      %s280 = sshll.u32 [#allocation26], 4
      %s281 = int_to_ptr.vmem [resolvable:$true] %s280
      %283 = dma.hbm_to_vmem [thread:$0]  %s33, 16, %s281, [#allocation27]
    $region69: #{forward.1} parent=1 // pred_fallthru
      _
    // Predicated region
    $region70: #{forward.1} parent=1 // pred_check
      _
    $region71: #{forward.1} parent=1 // pred_check_branch
      %285 = sbr.rel (0) target = $region73
    $region72: #{forward.1} parent=1 // pred_region
      %s287 = ssub.s32 16, 16
      %288 = vsyncadd [#allocation27], %s287
      %s290 = sshll.u32 [#allocation28], 4
      %s291 = int_to_ptr.vmem [resolvable:$true] %s290
      %293 = dma.hbm_to_vmem [thread:$0]  %s35, 16, %s291, [#allocation27]
    $region73: #{forward.1} parent=1 // pred_fallthru
      _
    // Predicated region
    $region74: #{forward.1} parent=1 // pred_check
      _
    $region75: #{forward.1} parent=1 // pred_check_branch
      %295 = sbr.rel (0) target = $region77
    $region76: #{forward.1} parent=1 // pred_region
      %s297 = ssub.s32 2048, 2048
      %298 = vsyncadd [#allocation30], %s297
      %s299 = sshll.u32 [#allocation29], 4
      %s300 = int_to_ptr.vmem [resolvable:$true] %s299
      %305 = dma.hbm_to_vmem [thread:$0]  %s37, 2048, %s300, [#allocation30], 128, 128, 8
    $region77: #{forward.1} parent=1 // pred_fallthru
      _
    // Predicated region
    $region78: #{forward.1} parent=1 // pred_check
      _
    $region79: #{forward.1} parent=1 // pred_check_branch
      %307 = sbr.rel (0) target = $region81
    $region80: #{forward.1} parent=1 // pred_region
      %s309 = ssub.s32 2048, 2048
      %310 = vsyncadd [#allocation30], %s309
      %s311 = sshll.u32 [#allocation31], 4
      %s312 = int_to_ptr.vmem [resolvable:$true] %s311
      %317 = dma.hbm_to_vmem [thread:$0]  %s39, 2048, %s312, [#allocation30], 128, 128, 8
    $region81: #{forward.1} parent=1 // pred_fallthru
      _
    // Predicated region
    $region82: #{forward.1} parent=1 // pred_check
      _
    $region83: #{forward.1} parent=1 // pred_check_branch
      %319 = sbr.rel (0) target = $region85
    $region84: #{forward.1} parent=1 // pred_region
      %s321 = ssub.s32 2048, 2048
      %322 = vsyncadd [#allocation33], %s321
      %s323 = sshll.u32 [#allocation32], 4
      %s324 = int_to_ptr.vmem [resolvable:$true] %s323
      %329 = dma.hbm_to_vmem [thread:$0]  %s41, 2048, %s324, [#allocation33], 128, 128, 8
    $region85: #{forward.1} parent=1 // pred_fallthru
      _
    // Predicated region
    $region86: #{forward.1} parent=1 // pred_check
      _
    $region87: #{forward.1} parent=1 // pred_check_branch
      %331 = sbr.rel (0) target = $region89
    $region88: #{forward.1} parent=1 // pred_region
      %s333 = ssub.s32 16, 16
      %334 = vsyncadd [#allocation33], %s333
      %s336 = sshll.u32 [#allocation34], 4
      %s337 = int_to_ptr.vmem [resolvable:$true] %s336
      %339 = dma.hbm_to_vmem [thread:$0]  %s43, 16, %s337, [#allocation33]
    $region89: #{forward.1} parent=1 // pred_fallthru
      _
    // Predicated region
    $region90: #{forward.1} parent=1 // pred_check
      _
    $region91: #{forward.1} parent=1 // pred_check_branch
      %341 = sbr.rel (0) target = $region93
    $region92: #{forward.1} parent=1 // pred_region
      %s343 = ssub.s32 16, 16
      %344 = vsyncadd [#allocation36], %s343
      %s346 = sshll.u32 [#allocation35], 4
      %s347 = int_to_ptr.vmem [resolvable:$true] %s346
      %349 = dma.hbm_to_vmem [thread:$0]  %s45, 16, %s347, [#allocation36]
    $region93: #{forward.1} parent=1 // pred_fallthru
      _
    // Predicated region
    $region94: #{forward.1} parent=1 // pred_check
      _
    $region95: #{forward.1} parent=1 // pred_check_branch
      %351 = sbr.rel (0) target = $region97
    $region96: #{forward.1} parent=1 // pred_region
      %s353 = ssub.s32 16, 16
      %354 = vsyncadd [#allocation36], %s353
      %s356 = sshll.u32 [#allocation37], 4
      %s357 = int_to_ptr.vmem [resolvable:$true] %s356
      %359 = dma.hbm_to_vmem [thread:$0]  %s47, 16, %s357, [#allocation36]
    $region97: #{forward.1} parent=1 // pred_fallthru
      _
    // Predicated region
    $region98: #{forward.1} parent=1 // pred_check
      _
    $region99: #{forward.1} parent=1 // pred_check_branch
      %361 = sbr.rel (0) target = $region101
    $region100: #{forward.1} parent=1 // pred_region
      %s363 = ssub.s32 2048, 2048
      %364 = vsyncadd [#allocation39], %s363
      %s365 = sshll.u32 [#allocation38], 4
      %s366 = int_to_ptr.vmem [resolvable:$true] %s365
      %371 = dma.hbm_to_vmem [thread:$0]  %s49, 2048, %s366, [#allocation39], 128, 128, 8
    $region101: #{forward.1} parent=1 // pred_fallthru
      _
    // Predicated region
    $region102: #{forward.1} parent=1 // pred_check
      _
    $region103: #{forward.1} parent=1 // pred_check_branch
      %373 = sbr.rel (0) target = $region105
    $region104: #{forward.1} parent=1 // pred_region
      %s375 = ssub.s32 16, 16
      %376 = vsyncadd [#allocation39], %s375
      %s378 = sshll.u32 [#allocation40], 4
      %s379 = int_to_ptr.vmem [resolvable:$true] %s378
      %381 = dma.hbm_to_vmem [thread:$0]  %s51, 16, %s379, [#allocation39]
    $region105: #{forward.1} parent=1 // pred_fallthru
      _
    // Predicated region
    $region106: #{forward.1} parent=1 // pred_check
      _
    $region107: #{forward.1} parent=1 // pred_check_branch
      %383 = sbr.rel (0) target = $region109
    $region108: #{forward.1} parent=1 // pred_region
      %s385 = ssub.s32 2048, 2048
      %386 = vsyncadd [#allocation42], %s385
      %s387 = sshll.u32 [#allocation41], 4
      %s388 = int_to_ptr.vmem [resolvable:$true] %s387
      %393 = dma.hbm_to_vmem [thread:$0]  %s53, 2048, %s388, [#allocation42], 128, 128, 8
    $region109: #{forward.1} parent=1 // pred_fallthru
      _
    // Predicated region
    $region110: #{forward.1} parent=1 // pred_check
      _
    $region111: #{forward.1} parent=1 // pred_check_branch
      %395 = sbr.rel (0) target = $region113
    $region112: #{forward.1} parent=1 // pred_region
      %s397 = ssub.s32 2048, 2048
      %398 = vsyncadd [#allocation42], %s397
      %s399 = sshll.u32 [#allocation43], 4
      %s400 = int_to_ptr.vmem [resolvable:$true] %s399
      %405 = dma.hbm_to_vmem [thread:$0]  %s55, 2048, %s400, [#allocation42], 128, 128, 8
    $region113: #{forward.1} parent=1 // pred_fallthru
      _
    // Predicated region
    $region114: #{forward.1} parent=1 // pred_check
      _
    $region115: #{forward.1} parent=1 // pred_check_branch
      %407 = sbr.rel (0) target = $region117
    $region116: #{forward.1} parent=1 // pred_region
      %s409 = ssub.s32 16, 16
      %410 = vsyncadd [#allocation45], %s409
      %s412 = sshll.u32 [#allocation44], 4
      %s413 = int_to_ptr.vmem [resolvable:$true] %s412
      %415 = dma.hbm_to_vmem [thread:$0]  %s57, 16, %s413, [#allocation45]
    $region117: #{forward.1} parent=1 // pred_fallthru
      _
    // Predicated region
    $region118: #{forward.1} parent=1 // pred_check
      _
    $region119: #{forward.1} parent=1 // pred_check_branch
      %417 = sbr.rel (0) target = $region121
    $region120: #{forward.1} parent=1 // pred_region
      %s419 = ssub.s32 16, 16
      %420 = vsyncadd [#allocation45], %s419
      %s422 = sshll.u32 [#allocation46], 4
      %s423 = int_to_ptr.vmem [resolvable:$true] %s422
      %425 = dma.hbm_to_vmem [thread:$0]  %s59, 16, %s423, [#allocation45]
    $region121: #{forward.1} parent=1 // pred_fallthru
      _
    // Predicated region
    $region122: #{forward.1} parent=1 // pred_check
      _
    $region123: #{forward.1} parent=1 // pred_check_branch
      %427 = sbr.rel (0) target = $region125
    $region124: #{forward.1} parent=1 // pred_region
      %s429 = ssub.s32 16, 16
      %430 = vsyncadd [#allocation48], %s429
      %s432 = sshll.u32 [#allocation47], 4
      %s433 = int_to_ptr.vmem [resolvable:$true] %s432
      %435 = dma.hbm_to_vmem [thread:$0]  %s61, 16, %s433, [#allocation48]
    $region125: #{forward.1} parent=1 // pred_fallthru
      _
    // Predicated region
    $region126: #{forward.1} parent=1 // pred_check
      _
    $region127: #{forward.1} parent=1 // pred_check_branch
      %437 = sbr.rel (0) target = $region129
    $region128: #{forward.1} parent=1 // pred_region
      %s439 = ssub.s32 4096, 4096
      %440 = vsyncadd [#allocation48], %s439
      %s441 = sshll.u32 [#allocation49], 4
      %s442 = int_to_ptr.vmem [resolvable:$true] %s441
      %447 = dma.hbm_to_vmem [thread:$0]  %s63, 4096, %s442, [#allocation48], 256, 256, 16
    $region129: #{forward.1} parent=1 // pred_fallthru
      _
    // Predicated region
    $region130: #{forward.1} parent=1 // pred_check
      _
    $region131: #{forward.1} parent=1 // pred_check_branch
      %449 = sbr.rel (0) target = $region133
    $region132: #{forward.1} parent=1 // pred_region
      %s451 = ssub.s32 32, 32
      %452 = vsyncadd [#allocation51], %s451
      %s454 = sshll.u32 [#allocation50], 4
      %s455 = int_to_ptr.vmem [resolvable:$true] %s454
      %457 = dma.hbm_to_vmem [thread:$0]  %s65, 32, %s455, [#allocation51]
    $region133: #{forward.1} parent=1 // pred_fallthru
      _
    // Predicated region
    $region134: #{forward.1} parent=1 // pred_check
      _
    $region135: #{forward.1} parent=1 // pred_check_branch
      %459 = sbr.rel (0) target = $region137
    $region136: #{forward.1} parent=1 // pred_region
      %s461 = ssub.s32 32, 32
      %462 = vsyncadd [#allocation51], %s461
      %s464 = sshll.u32 [#allocation52], 4
      %s465 = int_to_ptr.vmem [resolvable:$true] %s464
      %467 = dma.hbm_to_vmem [thread:$0]  %s67, 32, %s465, [#allocation51]
    $region137: #{forward.1} parent=1 // pred_fallthru
      _
    // Predicated region
    $region138: #{forward.1} parent=1 // pred_check
      _
    $region139: #{forward.1} parent=1 // pred_check_branch
      %469 = sbr.rel (0) target = $region141
    $region140: #{forward.1} parent=1 // pred_region
      _
    $region141: #{forward.1} parent=1 // pred_fallthru
      _
    // Predicated region
    $region142: #{forward.1} parent=1 // pred_check
      _
    $region143: #{forward.1} parent=1 // pred_check_branch
      %471 = sbr.rel (0) target = $region145
    $region144: #{forward.1} parent=1 // pred_region
      %s473 = ssub.s32 4096, 4096
      %474 = vsyncadd [#allocation54], %s473
      %s475 = sshll.u32 [#allocation53], 4
      %s476 = int_to_ptr.vmem [resolvable:$true] %s475
      %481 = dma.hbm_to_vmem [thread:$0]  %s71, 4096, %s476, [#allocation54], 256, 256, 16
    $region145: #{forward.1} parent=1 // pred_fallthru
      _
    // Predicated region
    $region146: #{forward.1} parent=1 // pred_check
      _
    $region147: #{forward.1} parent=1 // pred_check_branch
      %483 = sbr.rel (0) target = $region149
    $region148: #{forward.1} parent=1 // pred_region
      %s485 = ssub.s32 32, 32
      %486 = vsyncadd [#allocation54], %s485
      %s488 = sshll.u32 [#allocation55], 4
      %s489 = int_to_ptr.vmem [resolvable:$true] %s488
      %491 = dma.hbm_to_vmem [thread:$0]  %s73, 32, %s489, [#allocation54]
    $region149: #{forward.1} parent=1 // pred_fallthru
      _
    // Predicated region
    $region150: #{forward.1} parent=1 // pred_check
      _
    $region151: #{forward.1} parent=1 // pred_check_branch
      %493 = sbr.rel (0) target = $region153
    $region152: #{forward.1} parent=1 // pred_region
      %s495 = ssub.s32 32, 32
      %496 = vsyncadd [#allocation57], %s495
      %s498 = sshll.u32 [#allocation56], 4
      %s499 = int_to_ptr.vmem [resolvable:$true] %s498
      %501 = dma.hbm_to_vmem [thread:$0]  %s75, 32, %s499, [#allocation57]
    $region153: #{forward.1} parent=1 // pred_fallthru
      _
    // Predicated region
    $region154: #{forward.1} parent=1 // pred_check
      _
    $region155: #{forward.1} parent=1 // pred_check_branch
      %503 = sbr.rel (0) target = $region157
    $region156: #{forward.1} parent=1 // pred_region
      _
    $region157: #{forward.1} parent=1 // pred_fallthru
      _
    // Predicated region
    $region158: #{forward.1} parent=1 // pred_check
      _
    $region159: #{forward.1} parent=1 // pred_check_branch
      %505 = sbr.rel (0) target = $region161
    $region160: #{forward.1} parent=1 // pred_region
      %s507 = ssub.s32 4096, 4096
      %508 = vsyncadd [#allocation57], %s507
      %s509 = sshll.u32 [#allocation58], 4
      %s510 = int_to_ptr.vmem [resolvable:$true] %s509
      %515 = dma.hbm_to_vmem [thread:$0]  %s79, 4096, %s510, [#allocation57], 256, 256, 16
    $region161: #{forward.1} parent=1 // pred_fallthru
      _
    // Predicated region
    $region162: #{forward.1} parent=1 // pred_check
      _
    $region163: #{forward.1} parent=1 // pred_check_branch
      %517 = sbr.rel (0) target = $region165
    $region164: #{forward.1} parent=1 // pred_region
      %s519 = ssub.s32 32, 32
      %520 = vsyncadd [#allocation60], %s519
      %s522 = sshll.u32 [#allocation59], 4
      %s523 = int_to_ptr.vmem [resolvable:$true] %s522
      %525 = dma.hbm_to_vmem [thread:$0]  %s81, 32, %s523, [#allocation60]
    $region165: #{forward.1} parent=1 // pred_fallthru
      _
    // Predicated region
    $region166: #{forward.1} parent=1 // pred_check
      _
    $region167: #{forward.1} parent=1 // pred_check_branch
      %527 = sbr.rel (0) target = $region169
    $region168: #{forward.1} parent=1 // pred_region
      %s529 = ssub.s32 32, 32
      %530 = vsyncadd [#allocation60], %s529
      %s532 = sshll.u32 [#allocation61], 4
      %s533 = int_to_ptr.vmem [resolvable:$true] %s532
      %535 = dma.hbm_to_vmem [thread:$0]  %s83, 32, %s533, [#allocation60]
    $region169: #{forward.1} parent=1 // pred_fallthru
      _
    // Predicated region
    $region170: #{forward.1} parent=1 // pred_check
      _
    $region171: #{forward.1} parent=1 // pred_check_branch
      %537 = sbr.rel (0) target = $region173
    $region172: #{forward.1} parent=1 // pred_region
      _
    $region173: #{forward.1} parent=1 // pred_fallthru
      _
    // Predicated region
    $region174: #{forward.1} parent=1 // pred_check
      _
    $region175: #{forward.1} parent=1 // pred_check_branch
      %539 = sbr.rel (0) target = $region177
    $region176: #{forward.1} parent=1 // pred_region
      %540 = dma.done [#allocation6], 32768
    $region177: #{forward.1} parent=1 // pred_fallthru
      _
    // Predicated region
    $region178: #{forward.1} parent=1 // pred_check
      _
    $region179: #{forward.1} parent=1 // pred_check_branch
      %542 = sbr.rel (0) target = $region181
    $region180: #{forward.1} parent=1 // pred_region
      %543 = dma.done [#allocation9], 32
    $region181: #{forward.1} parent=1 // pred_fallthru
      _
    // Predicated region
    $region182: #{forward.1} parent=1 // pred_check
      _
    $region183: #{forward.1} parent=1 // pred_check_branch
      %545 = sbr.rel (0) target = $region185
    $region184: #{forward.1} parent=1 // pred_region
      %546 = dma.done [#allocation9], 32
    $region185: #{forward.1} parent=1 // pred_fallthru
      _
    // Predicated region
    $region186: #{forward.1} parent=1 // pred_check
      _
    $region187: #{forward.1} parent=1 // pred_check_branch
      %548 = sbr.rel (0) target = $region189
    $region188: #{forward.1} parent=1 // pred_region
      %549 = dma.done [#allocation12], 4096
    $region189: #{forward.1} parent=1 // pred_fallthru
      _
    // Predicated region
    $region190: #{forward.1} parent=1 // pred_check
      _
    $region191: #{forward.1} parent=1 // pred_check_branch
      %551 = sbr.rel (0) target = $region193
    $region192: #{forward.1} parent=1 // pred_region
      %552 = dma.done [#allocation12], 16
    $region193: #{forward.1} parent=1 // pred_fallthru
      _
    // Predicated region
    $region194: #{forward.1} parent=1 // pred_check
      _
    $region195: #{forward.1} parent=1 // pred_check_branch
      %554 = sbr.rel (0) target = $region197
    $region196: #{forward.1} parent=1 // pred_region
      %555 = dma.done [#allocation15], 16
    $region197: #{forward.1} parent=1 // pred_fallthru
      _
    // Predicated region
    $region198: #{forward.1} parent=1 // pred_check
      _
    $region199: #{forward.1} parent=1 // pred_check_branch
      %557 = sbr.rel (0) target = $region201
    $region200: #{forward.1} parent=1 // pred_region
      %558 = dma.done [#allocation15], 16
    $region201: #{forward.1} parent=1 // pred_fallthru
      _
    // Predicated region
    $region202: #{forward.1} parent=1 // pred_check
      _
    $region203: #{forward.1} parent=1 // pred_check_branch
      %560 = sbr.rel (0) target = $region205
    $region204: #{forward.1} parent=1 // pred_region
      %561 = dma.done [#allocation18], 4096
    $region205: #{forward.1} parent=1 // pred_fallthru
      _
    // Predicated region
    $region206: #{forward.1} parent=1 // pred_check
      _
    $region207: #{forward.1} parent=1 // pred_check_branch
      %563 = sbr.rel (0) target = $region209
    $region208: #{forward.1} parent=1 // pred_region
      %564 = dma.done [#allocation18], 32
    $region209: #{forward.1} parent=1 // pred_fallthru
      _
    // Predicated region
    $region210: #{forward.1} parent=1 // pred_check
      _
    $region211: #{forward.1} parent=1 // pred_check_branch
      %566 = sbr.rel (0) target = $region213
    $region212: #{forward.1} parent=1 // pred_region
      %567 = dma.done [#allocation21], 32
    $region213: #{forward.1} parent=1 // pred_fallthru
      _
    // Predicated region
    $region214: #{forward.1} parent=1 // pred_check
      _
    $region215: #{forward.1} parent=1 // pred_check_branch
      %569 = sbr.rel (0) target = $region217
    $region216: #{forward.1} parent=1 // pred_region
      %570 = dma.done [#allocation21], 32
    $region217: #{forward.1} parent=1 // pred_fallthru
      _
    // Predicated region
    $region218: #{forward.1} parent=1 // pred_check
      _
    $region219: #{forward.1} parent=1 // pred_check_branch
      %572 = sbr.rel (0) target = $region221
    $region220: #{forward.1} parent=1 // pred_region
      %573 = dma.done [#allocation24], 4096
    $region221: #{forward.1} parent=1 // pred_fallthru
      _
    // Predicated region
    $region222: #{forward.1} parent=1 // pred_check
      _
    $region223: #{forward.1} parent=1 // pred_check_branch
      %575 = sbr.rel (0) target = $region225
    $region224: #{forward.1} parent=1 // pred_region
      %576 = dma.done [#allocation24], 16
    $region225: #{forward.1} parent=1 // pred_fallthru
      _
    // Predicated region
    $region226: #{forward.1} parent=1 // pred_check
      _
    $region227: #{forward.1} parent=1 // pred_check_branch
      %578 = sbr.rel (0) target = $region229
    $region228: #{forward.1} parent=1 // pred_region
      %579 = dma.done [#allocation27], 16
    $region229: #{forward.1} parent=1 // pred_fallthru
      _
    // Predicated region
    $region230: #{forward.1} parent=1 // pred_check
      _
    $region231: #{forward.1} parent=1 // pred_check_branch
      %581 = sbr.rel (0) target = $region233
    $region232: #{forward.1} parent=1 // pred_region
      %582 = dma.done [#allocation27], 16
    $region233: #{forward.1} parent=1 // pred_fallthru
      _
    // Predicated region
    $region234: #{forward.1} parent=1 // pred_check
      _
    $region235: #{forward.1} parent=1 // pred_check_branch
      %584 = sbr.rel (0) target = $region237
    $region236: #{forward.1} parent=1 // pred_region
      %585 = dma.done [#allocation30], 2048
    $region237: #{forward.1} parent=1 // pred_fallthru
      _
    // Predicated region
    $region238: #{forward.1} parent=1 // pred_check
      _
    $region239: #{forward.1} parent=1 // pred_check_branch
      %587 = sbr.rel (0) target = $region241
    $region240: #{forward.1} parent=1 // pred_region
      %588 = dma.done [#allocation30], 2048
    $region241: #{forward.1} parent=1 // pred_fallthru
      _
    // Predicated region
    $region242: #{forward.1} parent=1 // pred_check
      _
    $region243: #{forward.1} parent=1 // pred_check_branch
      %590 = sbr.rel (0) target = $region245
    $region244: #{forward.1} parent=1 // pred_region
      %591 = dma.done [#allocation33], 2048
    $region245: #{forward.1} parent=1 // pred_fallthru
      _
    // Predicated region
    $region246: #{forward.1} parent=1 // pred_check
      _
    $region247: #{forward.1} parent=1 // pred_check_branch
      %593 = sbr.rel (0) target = $region249
    $region248: #{forward.1} parent=1 // pred_region
      %594 = dma.done [#allocation33], 16
    $region249: #{forward.1} parent=1 // pred_fallthru
      _
    // Predicated region
    $region250: #{forward.1} parent=1 // pred_check
      _
    $region251: #{forward.1} parent=1 // pred_check_branch
      %596 = sbr.rel (0) target = $region253
    $region252: #{forward.1} parent=1 // pred_region
      %597 = dma.done [#allocation36], 16
    $region253: #{forward.1} parent=1 // pred_fallthru
      _
    // Predicated region
    $region254: #{forward.1} parent=1 // pred_check
      _
    $region255: #{forward.1} parent=1 // pred_check_branch
      %599 = sbr.rel (0) target = $region257
    $region256: #{forward.1} parent=1 // pred_region
      %600 = dma.done [#allocation36], 16
    $region257: #{forward.1} parent=1 // pred_fallthru
      _
    // Predicated region
    $region258: #{forward.1} parent=1 // pred_check
      _
    $region259: #{forward.1} parent=1 // pred_check_branch
      %602 = sbr.rel (0) target = $region261
    $region260: #{forward.1} parent=1 // pred_region
      %603 = dma.done [#allocation39], 2048
    $region261: #{forward.1} parent=1 // pred_fallthru
      _
    // Predicated region
    $region262: #{forward.1} parent=1 // pred_check
      _
    $region263: #{forward.1} parent=1 // pred_check_branch
      %605 = sbr.rel (0) target = $region265
    $region264: #{forward.1} parent=1 // pred_region
      %606 = dma.done [#allocation39], 16
    $region265: #{forward.1} parent=1 // pred_fallthru
      _
    // Predicated region
    $region266: #{forward.1} parent=1 // pred_check
      _
    $region267: #{forward.1} parent=1 // pred_check_branch
      %608 = sbr.rel (0) target = $region269
    $region268: #{forward.1} parent=1 // pred_region
      %609 = dma.done [#allocation42], 2048
    $region269: #{forward.1} parent=1 // pred_fallthru
      _
    // Predicated region
    $region270: #{forward.1} parent=1 // pred_check
      _
    $region271: #{forward.1} parent=1 // pred_check_branch
      %611 = sbr.rel (0) target = $region273
    $region272: #{forward.1} parent=1 // pred_region
      %612 = dma.done [#allocation42], 2048
    $region273: #{forward.1} parent=1 // pred_fallthru
      _
    // Predicated region
    $region274: #{forward.1} parent=1 // pred_check
      _
    $region275: #{forward.1} parent=1 // pred_check_branch
      %614 = sbr.rel (0) target = $region277
    $region276: #{forward.1} parent=1 // pred_region
      %615 = dma.done [#allocation45], 16
    $region277: #{forward.1} parent=1 // pred_fallthru
      _
    // Predicated region
    $region278: #{forward.1} parent=1 // pred_check
      _
    $region279: #{forward.1} parent=1 // pred_check_branch
      %617 = sbr.rel (0) target = $region281
    $region280: #{forward.1} parent=1 // pred_region
      %618 = dma.done [#allocation45], 16
    $region281: #{forward.1} parent=1 // pred_fallthru
      _
    // Predicated region
    $region282: #{forward.1} parent=1 // pred_check
      _
    $region283: #{forward.1} parent=1 // pred_check_branch
      %620 = sbr.rel (0) target = $region285
    $region284: #{forward.1} parent=1 // pred_region
      %621 = dma.done [#allocation48], 16
    $region285: #{forward.1} parent=1 // pred_fallthru
      _
    // Predicated region
    $region286: #{forward.1} parent=1 // pred_check
      _
    $region287: #{forward.1} parent=1 // pred_check_branch
      %623 = sbr.rel (0) target = $region289
    $region288: #{forward.1} parent=1 // pred_region
      %624 = dma.done [#allocation48], 4096
    $region289: #{forward.1} parent=1 // pred_fallthru
      _
    // Predicated region
    $region290: #{forward.1} parent=1 // pred_check
      _
    $region291: #{forward.1} parent=1 // pred_check_branch
      %626 = sbr.rel (0) target = $region293
    $region292: #{forward.1} parent=1 // pred_region
      %627 = dma.done [#allocation51], 32
    $region293: #{forward.1} parent=1 // pred_fallthru
      _
    // Predicated region
    $region294: #{forward.1} parent=1 // pred_check
      _
    $region295: #{forward.1} parent=1 // pred_check_branch
      %629 = sbr.rel (0) target = $region297
    $region296: #{forward.1} parent=1 // pred_region
      %630 = dma.done [#allocation51], 32
    $region297: #{forward.1} parent=1 // pred_fallthru
      _
    // Predicated region
    $region298: #{forward.1} parent=1 // pred_check
      _
    $region299: #{forward.1} parent=1 // pred_check_branch
      %632 = sbr.rel (0) target = $region301
    $region300: #{forward.1} parent=1 // pred_region
      %633 = dma.done [#allocation54], 4096
    $region301: #{forward.1} parent=1 // pred_fallthru
      _
    // Predicated region
    $region302: #{forward.1} parent=1 // pred_check
      _
    $region303: #{forward.1} parent=1 // pred_check_branch
      %635 = sbr.rel (0) target = $region305
    $region304: #{forward.1} parent=1 // pred_region
      %636 = dma.done [#allocation54], 32
    $region305: #{forward.1} parent=1 // pred_fallthru
      _
    // Predicated region
    $region306: #{forward.1} parent=1 // pred_check
      _
    $region307: #{forward.1} parent=1 // pred_check_branch
      %638 = sbr.rel (0) target = $region309
    $region308: #{forward.1} parent=1 // pred_region
      %639 = dma.done [#allocation57], 32
    $region309: #{forward.1} parent=1 // pred_fallthru
      _
    // Predicated region
    $region310: #{forward.1} parent=1 // pred_check
      _
    $region311: #{forward.1} parent=1 // pred_check_branch
      %641 = sbr.rel (0) target = $region313
    $region312: #{forward.1} parent=1 // pred_region
      %642 = dma.done [#allocation57], 4096
    $region313: #{forward.1} parent=1 // pred_fallthru
      _
    // Predicated region
    $region314: #{forward.1} parent=1 // pred_check
      _
    $region315: #{forward.1} parent=1 // pred_check_branch
      %644 = sbr.rel (0) target = $region317
    $region316: #{forward.1} parent=1 // pred_region
      %645 = dma.done [#allocation60], 32
    $region317: #{forward.1} parent=1 // pred_fallthru
      _
    // Predicated region
    $region318: #{forward.1} parent=1 // pred_check
      _
    $region319: #{forward.1} parent=1 // pred_check_branch
      %647 = sbr.rel (0) target = $region321
    $region320: #{forward.1} parent=1 // pred_region
      %648 = dma.done [#allocation60], 32
    $region321: #{forward.1} parent=1 // pred_fallthru
      _
    %v649 = vld [vmem:[%s1] sm:$0xff]
    %v650 = vld [vmem:[%s1 + $0x8] sm:$0xff]
    %v651 = vld [vmem:[%s1 + $0x10] sm:$0xff]
    %v652 = vld [vmem:[%s1 + $0x18] sm:$0xff]
    %v653 = vld [vmem:[%s1 + $0x20] sm:$0xff]
    %v654 = vld [vmem:[%s1 + $0x28] sm:$0xff]
    %v655 = vld [vmem:[%s1 + $0x30] sm:$0xff]
    %v656 = vld [vmem:[%s1 + $0x38] sm:$0xff]
    %v657 = vld [vmem:[%s1 + $0x40] sm:$0xff]
    %v658 = vld [vmem:[%s1 + $0x48] sm:$0xff]
    %v659 = vld [vmem:[%s1 + $0x50] sm:$0xff]
    %v660 = vld [vmem:[%s1 + $0x58] sm:$0xff]
    %v661 = vld [vmem:[%s1 + $0x60] sm:$0xff]
    %v662 = vld [vmem:[%s1 + $0x68] sm:$0xff]
    %v663 = vld [vmem:[%s1 + $0x70] sm:$0xff]
    %v664 = vld [vmem:[%s1 + $0x78] sm:$0xff]
    %v665 = vld [vmem:[#allocation5] sm:$0xff]
    %v666 = vld [vmem:[#allocation5 + $0x8] sm:$0xff]
    %v667 = vld [vmem:[#allocation5 + $0x10] sm:$0xff]
    %v668 = vld [vmem:[#allocation5 + $0x18] sm:$0xff]
    %v669 = vld [vmem:[#allocation5 + $0x20] sm:$0xff]
    %v670 = vld [vmem:[#allocation5 + $0x28] sm:$0xff]
    %v671 = vld [vmem:[#allocation5 + $0x30] sm:$0xff]
    %v672 = vld [vmem:[#allocation5 + $0x38] sm:$0xff]
    %v673 = vld [vmem:[#allocation5 + $0x40] sm:$0xff]
    %v674 = vld [vmem:[#allocation5 + $0x48] sm:$0xff]
    %v675 = vld [vmem:[#allocation5 + $0x50] sm:$0xff]
    %v676 = vld [vmem:[#allocation5 + $0x58] sm:$0xff]
    %v677 = vld [vmem:[#allocation5 + $0x60] sm:$0xff]
    %v678 = vld [vmem:[#allocation5 + $0x68] sm:$0xff]
    %v679 = vld [vmem:[#allocation5 + $0x70] sm:$0xff]
    %v680 = vld [vmem:[#allocation5 + $0x78] sm:$0xff]
    %v681 = vld [vmem:[#allocation5 + $0x80] sm:$0xff]
    %v682 = vld [vmem:[#allocation5 + $0x88] sm:$0xff]
    %v683 = vld [vmem:[#allocation5 + $0x90] sm:$0xff]
    %v684 = vld [vmem:[#allocation5 + $0x98] sm:$0xff]
    %v685 = vld [vmem:[#allocation5 + $0xa0] sm:$0xff]
    %v686 = vld [vmem:[#allocation5 + $0xa8] sm:$0xff]
    %v687 = vld [vmem:[#allocation5 + $0xb0] sm:$0xff]
    %v688 = vld [vmem:[#allocation5 + $0xb8] sm:$0xff]
    %v689 = vld [vmem:[#allocation5 + $0xc0] sm:$0xff]
    %v690 = vld [vmem:[#allocation5 + $0xc8] sm:$0xff]
    %v691 = vld [vmem:[#allocation5 + $0xd0] sm:$0xff]
    %v692 = vld [vmem:[#allocation5 + $0xd8] sm:$0xff]
    %v693 = vld [vmem:[#allocation5 + $0xe0] sm:$0xff]
    %v694 = vld [vmem:[#allocation5 + $0xe8] sm:$0xff]
    %v695 = vld [vmem:[#allocation5 + $0xf0] sm:$0xff]
    %v696 = vld [vmem:[#allocation5 + $0xf8] sm:$0xff]
    %v697 = vld [vmem:[#allocation5 + $0x100] sm:$0xff]
    %v698 = vld [vmem:[#allocation5 + $0x108] sm:$0xff]
    %v699 = vld [vmem:[#allocation5 + $0x110] sm:$0xff]
    %v700 = vld [vmem:[#allocation5 + $0x118] sm:$0xff]
    %v701 = vld [vmem:[#allocation5 + $0x120] sm:$0xff]
    %v702 = vld [vmem:[#allocation5 + $0x128] sm:$0xff]
    %v703 = vld [vmem:[#allocation5 + $0x130] sm:$0xff]
    %v704 = vld [vmem:[#allocation5 + $0x138] sm:$0xff]
    %v705 = vld [vmem:[#allocation5 + $0x140] sm:$0xff]
    %v706 = vld [vmem:[#allocation5 + $0x148] sm:$0xff]
    %v707 = vld [vmem:[#allocation5 + $0x150] sm:$0xff]
    %v708 = vld [vmem:[#allocation5 + $0x158] sm:$0xff]
    %v709 = vld [vmem:[#allocation5 + $0x160] sm:$0xff]
    %v710 = vld [vmem:[#allocation5 + $0x168] sm:$0xff]
    %v711 = vld [vmem:[#allocation5 + $0x170] sm:$0xff]
    %v712 = vld [vmem:[#allocation5 + $0x178] sm:$0xff]
    %v713 = vld [vmem:[#allocation5 + $0x180] sm:$0xff]
    %v714 = vld [vmem:[#allocation5 + $0x188] sm:$0xff]
    %v715 = vld [vmem:[#allocation5 + $0x190] sm:$0xff]
    %v716 = vld [vmem:[#allocation5 + $0x198] sm:$0xff]
    %v717 = vld [vmem:[#allocation5 + $0x1a0] sm:$0xff]
    %v718 = vld [vmem:[#allocation5 + $0x1a8] sm:$0xff]
    %v719 = vld [vmem:[#allocation5 + $0x1b0] sm:$0xff]
    %v720 = vld [vmem:[#allocation5 + $0x1b8] sm:$0xff]
    %v721 = vld [vmem:[#allocation5 + $0x1c0] sm:$0xff]
    %v722 = vld [vmem:[#allocation5 + $0x1c8] sm:$0xff]
    %v723 = vld [vmem:[#allocation5 + $0x1d0] sm:$0xff]
    %v724 = vld [vmem:[#allocation5 + $0x1d8] sm:$0xff]
    %v725 = vld [vmem:[#allocation5 + $0x1e0] sm:$0xff]
    %v726 = vld [vmem:[#allocation5 + $0x1e8] sm:$0xff]
    %v727 = vld [vmem:[#allocation5 + $0x1f0] sm:$0xff]
    %v728 = vld [vmem:[#allocation5 + $0x1f8] sm:$0xff]
    %v729 = vld [vmem:[#allocation5 + $0x200] sm:$0xff]
    %v730 = vld [vmem:[#allocation5 + $0x208] sm:$0xff]
    %v731 = vld [vmem:[#allocation5 + $0x210] sm:$0xff]
    %v732 = vld [vmem:[#allocation5 + $0x218] sm:$0xff]
    %v733 = vld [vmem:[#allocation5 + $0x220] sm:$0xff]
    %v734 = vld [vmem:[#allocation5 + $0x228] sm:$0xff]
    %v735 = vld [vmem:[#allocation5 + $0x230] sm:$0xff]
    %v736 = vld [vmem:[#allocation5 + $0x238] sm:$0xff]
    %v737 = vld [vmem:[#allocation5 + $0x240] sm:$0xff]
    %v738 = vld [vmem:[#allocation5 + $0x248] sm:$0xff]
    %v739 = vld [vmem:[#allocation5 + $0x250] sm:$0xff]
    %v740 = vld [vmem:[#allocation5 + $0x258] sm:$0xff]
    %v741 = vld [vmem:[#allocation5 + $0x260] sm:$0xff]
    %v742 = vld [vmem:[#allocation5 + $0x268] sm:$0xff]
    %v743 = vld [vmem:[#allocation5 + $0x270] sm:$0xff]
    %v744 = vld [vmem:[#allocation5 + $0x278] sm:$0xff]
    %v745 = vld [vmem:[#allocation5 + $0x280] sm:$0xff]
    %v746 = vld [vmem:[#allocation5 + $0x288] sm:$0xff]
    %v747 = vld [vmem:[#allocation5 + $0x290] sm:$0xff]
    %v748 = vld [vmem:[#allocation5 + $0x298] sm:$0xff]
    %v749 = vld [vmem:[#allocation5 + $0x2a0] sm:$0xff]
    %v750 = vld [vmem:[#allocation5 + $0x2a8] sm:$0xff]
    %v751 = vld [vmem:[#allocation5 + $0x2b0] sm:$0xff]
    %v752 = vld [vmem:[#allocation5 + $0x2b8] sm:$0xff]
    %v753 = vld [vmem:[#allocation5 + $0x2c0] sm:$0xff]
    %v754 = vld [vmem:[#allocation5 + $0x2c8] sm:$0xff]
    %v755 = vld [vmem:[#allocation5 + $0x2d0] sm:$0xff]
    %v756 = vld [vmem:[#allocation5 + $0x2d8] sm:$0xff]
    %v757 = vld [vmem:[#allocation5 + $0x2e0] sm:$0xff]
    %v758 = vld [vmem:[#allocation5 + $0x2e8] sm:$0xff]
    %v759 = vld [vmem:[#allocation5 + $0x2f0] sm:$0xff]
    %v760 = vld [vmem:[#allocation5 + $0x2f8] sm:$0xff]
    %v761 = vld [vmem:[#allocation5 + $0x300] sm:$0xff]
    %v762 = vld [vmem:[#allocation5 + $0x308] sm:$0xff]
    %v763 = vld [vmem:[#allocation5 + $0x310] sm:$0xff]
    %v764 = vld [vmem:[#allocation5 + $0x318] sm:$0xff]
    %v765 = vld [vmem:[#allocation5 + $0x320] sm:$0xff]
    %v766 = vld [vmem:[#allocation5 + $0x328] sm:$0xff]
    %v767 = vld [vmem:[#allocation5 + $0x330] sm:$0xff]
    %v768 = vld [vmem:[#allocation5 + $0x338] sm:$0xff]
    %v769 = vld [vmem:[#allocation5 + $0x340] sm:$0xff]
    %v770 = vld [vmem:[#allocation5 + $0x348] sm:$0xff]
    %v771 = vld [vmem:[#allocation5 + $0x350] sm:$0xff]
    %v772 = vld [vmem:[#allocation5 + $0x358] sm:$0xff]
    %v773 = vld [vmem:[#allocation5 + $0x360] sm:$0xff]
    %v774 = vld [vmem:[#allocation5 + $0x368] sm:$0xff]
    %v775 = vld [vmem:[#allocation5 + $0x370] sm:$0xff]
    %v776 = vld [vmem:[#allocation5 + $0x378] sm:$0xff]
    %v777 = vld [vmem:[#allocation5 + $0x380] sm:$0xff]
    %v778 = vld [vmem:[#allocation5 + $0x388] sm:$0xff]
    %v779 = vld [vmem:[#allocation5 + $0x390] sm:$0xff]
    %v780 = vld [vmem:[#allocation5 + $0x398] sm:$0xff]
    %v781 = vld [vmem:[#allocation5 + $0x3a0] sm:$0xff]
    %v782 = vld [vmem:[#allocation5 + $0x3a8] sm:$0xff]
    %v783 = vld [vmem:[#allocation5 + $0x3b0] sm:$0xff]
    %v784 = vld [vmem:[#allocation5 + $0x3b8] sm:$0xff]
    %v785 = vld [vmem:[#allocation5 + $0x3c0] sm:$0xff]
    %v786 = vld [vmem:[#allocation5 + $0x3c8] sm:$0xff]
    %v787 = vld [vmem:[#allocation5 + $0x3d0] sm:$0xff]
    %v788 = vld [vmem:[#allocation5 + $0x3d8] sm:$0xff]
    %v789 = vld [vmem:[#allocation5 + $0x3e0] sm:$0xff]
    %v790 = vld [vmem:[#allocation5 + $0x3e8] sm:$0xff]
    %v791 = vld [vmem:[#allocation5 + $0x3f0] sm:$0xff]
    %v792 = vld [vmem:[#allocation5 + $0x3f8] sm:$0xff]
    %v793 = vld [vmem:[#allocation5 + $0x400] sm:$0xff]
    %v794 = vld [vmem:[#allocation5 + $0x408] sm:$0xff]
    %v795 = vld [vmem:[#allocation5 + $0x410] sm:$0xff]
    %v796 = vld [vmem:[#allocation5 + $0x418] sm:$0xff]
    %v797 = vld [vmem:[#allocation5 + $0x420] sm:$0xff]
    %v798 = vld [vmem:[#allocation5 + $0x428] sm:$0xff]
    %v799 = vld [vmem:[#allocation5 + $0x430] sm:$0xff]
    %v800 = vld [vmem:[#allocation5 + $0x438] sm:$0xff]
    %v801 = vld [vmem:[#allocation5 + $0x440] sm:$0xff]
    %v802 = vld [vmem:[#allocation5 + $0x448] sm:$0xff]
    %v803 = vld [vmem:[#allocation5 + $0x450] sm:$0xff]
    %v804 = vld [vmem:[#allocation5 + $0x458] sm:$0xff]
    %v805 = vld [vmem:[#allocation5 + $0x460] sm:$0xff]
    %v806 = vld [vmem:[#allocation5 + $0x468] sm:$0xff]
    %v807 = vld [vmem:[#allocation5 + $0x470] sm:$0xff]
    %v808 = vld [vmem:[#allocation5 + $0x478] sm:$0xff]
    %v809 = vld [vmem:[#allocation5 + $0x480] sm:$0xff]
    %v810 = vld [vmem:[#allocation5 + $0x488] sm:$0xff]
    %v811 = vld [vmem:[#allocation5 + $0x490] sm:$0xff]
    %v812 = vld [vmem:[#allocation5 + $0x498] sm:$0xff]
    %v813 = vld [vmem:[#allocation5 + $0x4a0] sm:$0xff]
    %v814 = vld [vmem:[#allocation5 + $0x4a8] sm:$0xff]
    %v815 = vld [vmem:[#allocation5 + $0x4b0] sm:$0xff]
    %v816 = vld [vmem:[#allocation5 + $0x4b8] sm:$0xff]
    %v817 = vld [vmem:[#allocation5 + $0x4c0] sm:$0xff]
    %v818 = vld [vmem:[#allocation5 + $0x4c8] sm:$0xff]
    %v819 = vld [vmem:[#allocation5 + $0x4d0] sm:$0xff]
    %v820 = vld [vmem:[#allocation5 + $0x4d8] sm:$0xff]
    %v821 = vld [vmem:[#allocation5 + $0x4e0] sm:$0xff]
    %v822 = vld [vmem:[#allocation5 + $0x4e8] sm:$0xff]
    %v823 = vld [vmem:[#allocation5 + $0x4f0] sm:$0xff]
    %v824 = vld [vmem:[#allocation5 + $0x4f8] sm:$0xff]
    %v825 = vld [vmem:[#allocation5 + $0x500] sm:$0xff]
    %v826 = vld [vmem:[#allocation5 + $0x508] sm:$0xff]
    %v827 = vld [vmem:[#allocation5 + $0x510] sm:$0xff]
    %v828 = vld [vmem:[#allocation5 + $0x518] sm:$0xff]
    %v829 = vld [vmem:[#allocation5 + $0x520] sm:$0xff]
    %v830 = vld [vmem:[#allocation5 + $0x528] sm:$0xff]
    %v831 = vld [vmem:[#allocation5 + $0x530] sm:$0xff]
    %v832 = vld [vmem:[#allocation5 + $0x538] sm:$0xff]
    %v833 = vld [vmem:[#allocation5 + $0x540] sm:$0xff]
    %v834 = vld [vmem:[#allocation5 + $0x548] sm:$0xff]
    %v835 = vld [vmem:[#allocation5 + $0x550] sm:$0xff]
    %v836 = vld [vmem:[#allocation5 + $0x558] sm:$0xff]
    %v837 = vld [vmem:[#allocation5 + $0x560] sm:$0xff]
    %v838 = vld [vmem:[#allocation5 + $0x568] sm:$0xff]
    %v839 = vld [vmem:[#allocation5 + $0x570] sm:$0xff]
    %v840 = vld [vmem:[#allocation5 + $0x578] sm:$0xff]
    %v841 = vld [vmem:[#allocation5 + $0x580] sm:$0xff]
    %v842 = vld [vmem:[#allocation5 + $0x588] sm:$0xff]
    %v843 = vld [vmem:[#allocation5 + $0x590] sm:$0xff]
    %v844 = vld [vmem:[#allocation5 + $0x598] sm:$0xff]
    %v845 = vld [vmem:[#allocation5 + $0x5a0] sm:$0xff]
    %v846 = vld [vmem:[#allocation5 + $0x5a8] sm:$0xff]
    %v847 = vld [vmem:[#allocation5 + $0x5b0] sm:$0xff]
    %v848 = vld [vmem:[#allocation5 + $0x5b8] sm:$0xff]
    %v849 = vld [vmem:[#allocation5 + $0x5c0] sm:$0xff]
    %v850 = vld [vmem:[#allocation5 + $0x5c8] sm:$0xff]
    %v851 = vld [vmem:[#allocation5 + $0x5d0] sm:$0xff]
    %v852 = vld [vmem:[#allocation5 + $0x5d8] sm:$0xff]
    %v853 = vld [vmem:[#allocation5 + $0x5e0] sm:$0xff]
    %v854 = vld [vmem:[#allocation5 + $0x5e8] sm:$0xff]
    %v855 = vld [vmem:[#allocation5 + $0x5f0] sm:$0xff]
    %v856 = vld [vmem:[#allocation5 + $0x5f8] sm:$0xff]
    %v857 = vld [vmem:[#allocation5 + $0x600] sm:$0xff]
    %v858 = vld [vmem:[#allocation5 + $0x608] sm:$0xff]
    %v859 = vld [vmem:[#allocation5 + $0x610] sm:$0xff]
    %v860 = vld [vmem:[#allocation5 + $0x618] sm:$0xff]
    %v861 = vld [vmem:[#allocation5 + $0x620] sm:$0xff]
    %v862 = vld [vmem:[#allocation5 + $0x628] sm:$0xff]
    %v863 = vld [vmem:[#allocation5 + $0x630] sm:$0xff]
    %v864 = vld [vmem:[#allocation5 + $0x638] sm:$0xff]
    %v865 = vld [vmem:[#allocation5 + $0x640] sm:$0xff]
    %v866 = vld [vmem:[#allocation5 + $0x648] sm:$0xff]
    %v867 = vld [vmem:[#allocation5 + $0x650] sm:$0xff]
    %v868 = vld [vmem:[#allocation5 + $0x658] sm:$0xff]
    %v869 = vld [vmem:[#allocation5 + $0x660] sm:$0xff]
    %v870 = vld [vmem:[#allocation5 + $0x668] sm:$0xff]
    %v871 = vld [vmem:[#allocation5 + $0x670] sm:$0xff]
    %v872 = vld [vmem:[#allocation5 + $0x678] sm:$0xff]
    %v873 = vld [vmem:[#allocation5 + $0x680] sm:$0xff]
    %v874 = vld [vmem:[#allocation5 + $0x688] sm:$0xff]
    %v875 = vld [vmem:[#allocation5 + $0x690] sm:$0xff]
    %v876 = vld [vmem:[#allocation5 + $0x698] sm:$0xff]
    %v877 = vld [vmem:[#allocation5 + $0x6a0] sm:$0xff]
    %v878 = vld [vmem:[#allocation5 + $0x6a8] sm:$0xff]
    %v879 = vld [vmem:[#allocation5 + $0x6b0] sm:$0xff]
    %v880 = vld [vmem:[#allocation5 + $0x6b8] sm:$0xff]
    %v881 = vld [vmem:[#allocation5 + $0x6c0] sm:$0xff]
    %v882 = vld [vmem:[#allocation5 + $0x6c8] sm:$0xff]
    %v883 = vld [vmem:[#allocation5 + $0x6d0] sm:$0xff]
    %v884 = vld [vmem:[#allocation5 + $0x6d8] sm:$0xff]
    %v885 = vld [vmem:[#allocation5 + $0x6e0] sm:$0xff]
    %v886 = vld [vmem:[#allocation5 + $0x6e8] sm:$0xff]
    %v887 = vld [vmem:[#allocation5 + $0x6f0] sm:$0xff]
    %v888 = vld [vmem:[#allocation5 + $0x6f8] sm:$0xff]
    %v889 = vld [vmem:[#allocation5 + $0x700] sm:$0xff]
    %v890 = vld [vmem:[#allocation5 + $0x708] sm:$0xff]
    %v891 = vld [vmem:[#allocation5 + $0x710] sm:$0xff]
    %v892 = vld [vmem:[#allocation5 + $0x718] sm:$0xff]
    %v893 = vld [vmem:[#allocation5 + $0x720] sm:$0xff]
    %v894 = vld [vmem:[#allocation5 + $0x728] sm:$0xff]
    %v895 = vld [vmem:[#allocation5 + $0x730] sm:$0xff]
    %v896 = vld [vmem:[#allocation5 + $0x738] sm:$0xff]
    %v897 = vld [vmem:[#allocation5 + $0x740] sm:$0xff]
    %v898 = vld [vmem:[#allocation5 + $0x748] sm:$0xff]
    %v899 = vld [vmem:[#allocation5 + $0x750] sm:$0xff]
    %v900 = vld [vmem:[#allocation5 + $0x758] sm:$0xff]
    %v901 = vld [vmem:[#allocation5 + $0x760] sm:$0xff]
    %v902 = vld [vmem:[#allocation5 + $0x768] sm:$0xff]
    %v903 = vld [vmem:[#allocation5 + $0x770] sm:$0xff]
    %v904 = vld [vmem:[#allocation5 + $0x778] sm:$0xff]
    %v905 = vld [vmem:[#allocation5 + $0x780] sm:$0xff]
    %v906 = vld [vmem:[#allocation5 + $0x788] sm:$0xff]
    %v907 = vld [vmem:[#allocation5 + $0x790] sm:$0xff]
    %v908 = vld [vmem:[#allocation5 + $0x798] sm:$0xff]
    %v909 = vld [vmem:[#allocation5 + $0x7a0] sm:$0xff]
    %v910 = vld [vmem:[#allocation5 + $0x7a8] sm:$0xff]
    %v911 = vld [vmem:[#allocation5 + $0x7b0] sm:$0xff]
    %v912 = vld [vmem:[#allocation5 + $0x7b8] sm:$0xff]
    %v913 = vld [vmem:[#allocation5 + $0x7c0] sm:$0xff]
    %v914 = vld [vmem:[#allocation5 + $0x7c8] sm:$0xff]
    %v915 = vld [vmem:[#allocation5 + $0x7d0] sm:$0xff]
    %v916 = vld [vmem:[#allocation5 + $0x7d8] sm:$0xff]
    %v917 = vld [vmem:[#allocation5 + $0x7e0] sm:$0xff]
    %v918 = vld [vmem:[#allocation5 + $0x7e8] sm:$0xff]
    %v919 = vld [vmem:[#allocation5 + $0x7f0] sm:$0xff]
    %v920 = vld [vmem:[#allocation5 + $0x7f8] sm:$0xff]
    %v921 = vld [vmem:[%s7] sm:$0x3]
    %v923 = vlaneseq
    %v924 = vshrl.u32 %v923, 7
    %v925 = vsub.s32 0, %v924
    %v926 = vrot.slane %v921, %v925
    %v927 = vlaneseq
    %v928 = vshrl.u32 %v927, 7
    %v929 = vsub.s32 1, %v928
    %v930 = vrot.slane %v921, %v929
    %933 = vmatprep.subr.mxu0 %v666
    %934 = vmatpush1.msra.mxu0 %v665
    %935 = vmatprep.subr.mxu0 %v668
    %936 = vmatpush1.msra.mxu0 %v667
    %937 = vmatprep.subr.mxu0 %v670
    %938 = vmatpush1.msra.mxu0 %v669
    %939 = vmatprep.subr.mxu0 %v672
    %940 = vmatpush1.msra.mxu0 %v671
    %941 = vmatprep.subr.mxu0 %v674
    %942 = vmatpush1.msra.mxu0 %v673
    %943 = vmatprep.subr.mxu0 %v676
    %944 = vmatpush1.msra.mxu0 %v675
    %945 = vmatprep.subr.mxu0 %v678
    %946 = vmatpush1.msra.mxu0 %v677
    %947 = vmatprep.subr.mxu0 %v680
    %948 = vmatpush1.msra.mxu0 %v679
    %949 = vmatprep.subr.mxu0 %v682
    %950 = vmatpush1.msra.mxu0 %v681
    %951 = vmatprep.subr.mxu0 %v684
    %952 = vmatpush1.msra.mxu0 %v683
    %953 = vmatprep.subr.mxu0 %v686
    %954 = vmatpush1.msra.mxu0 %v685
    %955 = vmatprep.subr.mxu0 %v688
    %956 = vmatpush1.msra.mxu0 %v687
    %957 = vmatprep.subr.mxu0 %v690
    %958 = vmatpush1.msra.mxu0 %v689
    %959 = vmatprep.subr.mxu0 %v692
    %960 = vmatpush1.msra.mxu0 %v691
    %961 = vmatprep.subr.mxu0 %v694
    %962 = vmatpush1.msra.mxu0 %v693
    %963 = vmatprep.subr.mxu0 %v696
    %964 = vmatpush1.msra.mxu0 %v695
    %965 = vmatprep.subr.mxu0 %v698
    %966 = vmatpush1.msra.mxu0 %v697
    %967 = vmatprep.subr.mxu0 %v700
    %968 = vmatpush1.msra.mxu0 %v699
    %969 = vmatprep.subr.mxu0 %v702
    %970 = vmatpush1.msra.mxu0 %v701
    %971 = vmatprep.subr.mxu0 %v704
    %972 = vmatpush1.msra.mxu0 %v703
    %973 = vmatprep.subr.mxu0 %v706
    %974 = vmatpush1.msra.mxu0 %v705
    %975 = vmatprep.subr.mxu0 %v708
    %976 = vmatpush1.msra.mxu0 %v707
    %977 = vmatprep.subr.mxu0 %v710
    %978 = vmatpush1.msra.mxu0 %v709
    %979 = vmatprep.subr.mxu0 %v712
    %980 = vmatpush1.msra.mxu0 %v711
    %981 = vmatprep.subr.mxu0 %v714
    %982 = vmatpush1.msra.mxu0 %v713
    %983 = vmatprep.subr.mxu0 %v716
    %984 = vmatpush1.msra.mxu0 %v715
    %985 = vmatprep.subr.mxu0 %v718
    %986 = vmatpush1.msra.mxu0 %v717
    %987 = vmatprep.subr.mxu0 %v720
    %988 = vmatpush1.msra.mxu0 %v719
    %989 = vmatprep.subr.mxu0 %v722
    %990 = vmatpush1.msra.mxu0 %v721
    %991 = vmatprep.subr.mxu0 %v724
    %992 = vmatpush1.msra.mxu0 %v723
    %993 = vmatprep.subr.mxu0 %v726
    %994 = vmatpush1.msra.mxu0 %v725
    %995 = vmatprep.subr.mxu0 %v728
    %996 = vmatpush1.msra.mxu0 %v727
    %997 = vmatprep.mubr.f32.mxu0 %v650
    %998 = vmatmul.mubr.f32.gmra.mrb[0].mxu0 %v649
    %v999 = vpop.f32.mrb[0].mxu0
    %v1000 = vadd.f32 %v926, %v999
    %v1001 = vpop.f32.mrb[0].mxu0
    %v1002 = vadd.f32 %v930, %v1001
    %1003 = vmatprep.mubr.f32.mxu0 %v658
    %1004 = vmatmul.mubr.f32.gmra.mrb[0].mxu0 %v657
    %v1005 = vpop.f32.mrb[0].mxu0
    %v1006 = vadd.f32 %v926, %v1005
    %v1007 = vpop.f32.mrb[0].mxu0
    %v1008 = vadd.f32 %v930, %v1007
    %1009 = vdwg.mxu0
    %1010 = vmatprep.subr.mxu0 %v730
    %1011 = vmatpush1.msra.mxu0 %v729
    %1012 = vmatprep.subr.mxu0 %v732
    %1013 = vmatpush1.msra.mxu0 %v731
    %1014 = vmatprep.subr.mxu0 %v734
    %1015 = vmatpush1.msra.mxu0 %v733
    %1016 = vmatprep.subr.mxu0 %v736
    %1017 = vmatpush1.msra.mxu0 %v735
    %1018 = vmatprep.subr.mxu0 %v738
    %1019 = vmatpush1.msra.mxu0 %v737
    %1020 = vmatprep.subr.mxu0 %v740
    %1021 = vmatpush1.msra.mxu0 %v739
    %1022 = vmatprep.subr.mxu0 %v742
    %1023 = vmatpush1.msra.mxu0 %v741
    %1024 = vmatprep.subr.mxu0 %v744
    %1025 = vmatpush1.msra.mxu0 %v743
    %1026 = vmatprep.subr.mxu0 %v746
    %1027 = vmatpush1.msra.mxu0 %v745
    %1028 = vmatprep.subr.mxu0 %v748
    %1029 = vmatpush1.msra.mxu0 %v747
    %1030 = vmatprep.subr.mxu0 %v750
    %1031 = vmatpush1.msra.mxu0 %v749
    %1032 = vmatprep.subr.mxu0 %v752
    %1033 = vmatpush1.msra.mxu0 %v751
    %1034 = vmatprep.subr.mxu0 %v754
    %1035 = vmatpush1.msra.mxu0 %v753
    %1036 = vmatprep.subr.mxu0 %v756
    %1037 = vmatpush1.msra.mxu0 %v755
    %1038 = vmatprep.subr.mxu0 %v758
    %1039 = vmatpush1.msra.mxu0 %v757
    %1040 = vmatprep.subr.mxu0 %v760
    %1041 = vmatpush1.msra.mxu0 %v759
    %1042 = vmatprep.subr.mxu0 %v762
    %1043 = vmatpush1.msra.mxu0 %v761
    %1044 = vmatprep.subr.mxu0 %v764
    %1045 = vmatpush1.msra.mxu0 %v763
    %1046 = vmatprep.subr.mxu0 %v766
    %1047 = vmatpush1.msra.mxu0 %v765
    %1048 = vmatprep.subr.mxu0 %v768
    %1049 = vmatpush1.msra.mxu0 %v767
    %1050 = vmatprep.subr.mxu0 %v770
    %1051 = vmatpush1.msra.mxu0 %v769
    %1052 = vmatprep.subr.mxu0 %v772
    %1053 = vmatpush1.msra.mxu0 %v771
    %1054 = vmatprep.subr.mxu0 %v774
    %1055 = vmatpush1.msra.mxu0 %v773
    %1056 = vmatprep.subr.mxu0 %v776
    %1057 = vmatpush1.msra.mxu0 %v775
    %1058 = vmatprep.subr.mxu0 %v778
    %1059 = vmatpush1.msra.mxu0 %v777
    %1060 = vmatprep.subr.mxu0 %v780
    %1061 = vmatpush1.msra.mxu0 %v779
    %1062 = vmatprep.subr.mxu0 %v782
    %1063 = vmatpush1.msra.mxu0 %v781
    %1064 = vmatprep.subr.mxu0 %v784
    %1065 = vmatpush1.msra.mxu0 %v783
    %1066 = vmatprep.subr.mxu0 %v786
    %1067 = vmatpush1.msra.mxu0 %v785
    %1068 = vmatprep.subr.mxu0 %v788
    %1069 = vmatpush1.msra.mxu0 %v787
    %1070 = vmatprep.subr.mxu0 %v790
    %1071 = vmatpush1.msra.mxu0 %v789
    %1072 = vmatprep.subr.mxu0 %v792
    %1073 = vmatpush1.msra.mxu0 %v791
    %1074 = vmatprep.mubr.f32.mxu0 %v652
    %1075 = vmatmul.mubr.f32.gmra.mrb[0].mxu0 %v651
    %v1076 = vpop.f32.mrb[0].mxu0
    %v1077 = vadd.f32 %v1000, %v1076
    %v1078 = vpop.f32.mrb[0].mxu0
    %v1079 = vadd.f32 %v1002, %v1078
    %1080 = vmatprep.mubr.f32.mxu0 %v660
    %1081 = vmatmul.mubr.f32.gmra.mrb[0].mxu0 %v659
    %v1082 = vpop.f32.mrb[0].mxu0
    %v1083 = vadd.f32 %v1006, %v1082
    %v1084 = vpop.f32.mrb[0].mxu0
    %v1085 = vadd.f32 %v1008, %v1084
    %1086 = vdwg.mxu0
    %1087 = vmatprep.subr.mxu0 %v794
    %1088 = vmatpush1.msra.mxu0 %v793
    %1089 = vmatprep.subr.mxu0 %v796
    %1090 = vmatpush1.msra.mxu0 %v795
    %1091 = vmatprep.subr.mxu0 %v798
    %1092 = vmatpush1.msra.mxu0 %v797
    %1093 = vmatprep.subr.mxu0 %v800
    %1094 = vmatpush1.msra.mxu0 %v799
    %1095 = vmatprep.subr.mxu0 %v802
    %1096 = vmatpush1.msra.mxu0 %v801
    %1097 = vmatprep.subr.mxu0 %v804
    %1098 = vmatpush1.msra.mxu0 %v803
    %1099 = vmatprep.subr.mxu0 %v806
    %1100 = vmatpush1.msra.mxu0 %v805
    %1101 = vmatprep.subr.mxu0 %v808
    %1102 = vmatpush1.msra.mxu0 %v807
    %1103 = vmatprep.subr.mxu0 %v810
    %1104 = vmatpush1.msra.mxu0 %v809
    %1105 = vmatprep.subr.mxu0 %v812
    %1106 = vmatpush1.msra.mxu0 %v811
    %1107 = vmatprep.subr.mxu0 %v814
    %1108 = vmatpush1.msra.mxu0 %v813
    %1109 = vmatprep.subr.mxu0 %v816
    %1110 = vmatpush1.msra.mxu0 %v815
    %1111 = vmatprep.subr.mxu0 %v818
    %1112 = vmatpush1.msra.mxu0 %v817
    %1113 = vmatprep.subr.mxu0 %v820
    %1114 = vmatpush1.msra.mxu0 %v819
    %1115 = vmatprep.subr.mxu0 %v822
    %1116 = vmatpush1.msra.mxu0 %v821
    %1117 = vmatprep.subr.mxu0 %v824
    %1118 = vmatpush1.msra.mxu0 %v823
    %1119 = vmatprep.subr.mxu0 %v826
    %1120 = vmatpush1.msra.mxu0 %v825
    %1121 = vmatprep.subr.mxu0 %v828
    %1122 = vmatpush1.msra.mxu0 %v827
    %1123 = vmatprep.subr.mxu0 %v830
    %1124 = vmatpush1.msra.mxu0 %v829
    %1125 = vmatprep.subr.mxu0 %v832
    %1126 = vmatpush1.msra.mxu0 %v831
    %1127 = vmatprep.subr.mxu0 %v834
    %1128 = vmatpush1.msra.mxu0 %v833
    %1129 = vmatprep.subr.mxu0 %v836
    %1130 = vmatpush1.msra.mxu0 %v835
    %1131 = vmatprep.subr.mxu0 %v838
    %1132 = vmatpush1.msra.mxu0 %v837
    %1133 = vmatprep.subr.mxu0 %v840
    %1134 = vmatpush1.msra.mxu0 %v839
    %1135 = vmatprep.subr.mxu0 %v842
    %1136 = vmatpush1.msra.mxu0 %v841
    %1137 = vmatprep.subr.mxu0 %v844
    %1138 = vmatpush1.msra.mxu0 %v843
    %1139 = vmatprep.subr.mxu0 %v846
    %1140 = vmatpush1.msra.mxu0 %v845
    %1141 = vmatprep.subr.mxu0 %v848
    %1142 = vmatpush1.msra.mxu0 %v847
    %1143 = vmatprep.subr.mxu0 %v850
    %1144 = vmatpush1.msra.mxu0 %v849
    %1145 = vmatprep.subr.mxu0 %v852
    %1146 = vmatpush1.msra.mxu0 %v851
    %1147 = vmatprep.subr.mxu0 %v854
    %1148 = vmatpush1.msra.mxu0 %v853
    %1149 = vmatprep.subr.mxu0 %v856
    %1150 = vmatpush1.msra.mxu0 %v855
    %1151 = vmatprep.mubr.f32.mxu0 %v654
    %1152 = vmatmul.mubr.f32.gmra.mrb[0].mxu0 %v653
    %v1153 = vpop.f32.mrb[0].mxu0
    %v1154 = vadd.f32 %v1077, %v1153
    %v1155 = vpop.f32.mrb[0].mxu0
    %v1156 = vadd.f32 %v1079, %v1155
    %1157 = vmatprep.mubr.f32.mxu0 %v662
    %1158 = vmatmul.mubr.f32.gmra.mrb[0].mxu0 %v661
    %v1159 = vpop.f32.mrb[0].mxu0
    %v1160 = vadd.f32 %v1083, %v1159
    %v1161 = vpop.f32.mrb[0].mxu0
    %v1162 = vadd.f32 %v1085, %v1161
    %1163 = vdwg.mxu0
    %1164 = vmatprep.subr.mxu0 %v858
    %1165 = vmatpush1.msra.mxu0 %v857
    %1166 = vmatprep.subr.mxu0 %v860
    %1167 = vmatpush1.msra.mxu0 %v859
    %1168 = vmatprep.subr.mxu0 %v862
    %1169 = vmatpush1.msra.mxu0 %v861
    %1170 = vmatprep.subr.mxu0 %v864
    %1171 = vmatpush1.msra.mxu0 %v863
    %1172 = vmatprep.subr.mxu0 %v866
    %1173 = vmatpush1.msra.mxu0 %v865
    %1174 = vmatprep.subr.mxu0 %v868
    %1175 = vmatpush1.msra.mxu0 %v867
    %1176 = vmatprep.subr.mxu0 %v870
    %1177 = vmatpush1.msra.mxu0 %v869
    %1178 = vmatprep.subr.mxu0 %v872
    %1179 = vmatpush1.msra.mxu0 %v871
    %1180 = vmatprep.subr.mxu0 %v874
    %1181 = vmatpush1.msra.mxu0 %v873
    %1182 = vmatprep.subr.mxu0 %v876
    %1183 = vmatpush1.msra.mxu0 %v875
    %1184 = vmatprep.subr.mxu0 %v878
    %1185 = vmatpush1.msra.mxu0 %v877
    %1186 = vmatprep.subr.mxu0 %v880
    %1187 = vmatpush1.msra.mxu0 %v879
    %1188 = vmatprep.subr.mxu0 %v882
    %1189 = vmatpush1.msra.mxu0 %v881
    %1190 = vmatprep.subr.mxu0 %v884
    %1191 = vmatpush1.msra.mxu0 %v883
    %1192 = vmatprep.subr.mxu0 %v886
    %1193 = vmatpush1.msra.mxu0 %v885
    %1194 = vmatprep.subr.mxu0 %v888
    %1195 = vmatpush1.msra.mxu0 %v887
    %1196 = vmatprep.subr.mxu0 %v890
    %1197 = vmatpush1.msra.mxu0 %v889
    %1198 = vmatprep.subr.mxu0 %v892
    %1199 = vmatpush1.msra.mxu0 %v891
    %1200 = vmatprep.subr.mxu0 %v894
    %1201 = vmatpush1.msra.mxu0 %v893
    %1202 = vmatprep.subr.mxu0 %v896
    %1203 = vmatpush1.msra.mxu0 %v895
    %1204 = vmatprep.subr.mxu0 %v898
    %1205 = vmatpush1.msra.mxu0 %v897
    %1206 = vmatprep.subr.mxu0 %v900
    %1207 = vmatpush1.msra.mxu0 %v899
    %1208 = vmatprep.subr.mxu0 %v902
    %1209 = vmatpush1.msra.mxu0 %v901
    %1210 = vmatprep.subr.mxu0 %v904
    %1211 = vmatpush1.msra.mxu0 %v903
    %1212 = vmatprep.subr.mxu0 %v906
    %1213 = vmatpush1.msra.mxu0 %v905
    %1214 = vmatprep.subr.mxu0 %v908
    %1215 = vmatpush1.msra.mxu0 %v907
    %1216 = vmatprep.subr.mxu0 %v910
    %1217 = vmatpush1.msra.mxu0 %v909
    %1218 = vmatprep.subr.mxu0 %v912
    %1219 = vmatpush1.msra.mxu0 %v911
    %1220 = vmatprep.subr.mxu0 %v914
    %1221 = vmatpush1.msra.mxu0 %v913
    %1222 = vmatprep.subr.mxu0 %v916
    %1223 = vmatpush1.msra.mxu0 %v915
    %1224 = vmatprep.subr.mxu0 %v918
    %1225 = vmatpush1.msra.mxu0 %v917
    %1226 = vmatprep.subr.mxu0 %v920
    %1227 = vmatpush1.msra.mxu0 %v919
    %1228 = vmatprep.mubr.f32.mxu0 %v656
    %1229 = vmatmul.mubr.f32.gmra.mrb[0].mxu0 %v655
    %v1230 = vpop.f32.mrb[0].mxu0
    %v1231 = vadd.f32 %v1154, %v1230
    %v1232 = vpop.f32.mrb[0].mxu0
    %v1233 = vadd.f32 %v1156, %v1232
    %1234 = vmatprep.mubr.f32.mxu0 %v664
    %1235 = vmatmul.mubr.f32.gmra.mrb[0].mxu0 %v663
    %v1236 = vpop.f32.mrb[0].mxu0
    %v1237 = vadd.f32 %v1160, %v1236
    %v1238 = vpop.f32.mrb[0].mxu0
    %v1239 = vadd.f32 %v1162, %v1238
    %1240 = vdwg.mxu0
    %v1241 = vadd.f32 %v1231, %v1233
    %1242 = vadd.xlane.f32.xlu0 %v1241
    %v1243 = vpop.xlane.xlu0 %1242
    %v1244 = vadd.f32 %v1237, %v1239
    %1245 = vadd.xlane.f32.xlu0 %v1244
    %v1246 = vpop.xlane.xlu0 %1245
    %v1247 = vrcp.pop 256.0
    %v1248 = vmul.f32 %v1243, %v1247
    %v1249 = vmul.f32 %v1246, %v1247
    %v1250 = vsub.f32 %v1231, %v1248
    %v1251 = vsub.f32 %v1233, %v1248
    %v1252 = vsub.f32 %v1237, %v1249
    %v1253 = vsub.f32 %v1239, %v1249
    %v1254 = vmul.f32 %v1250, %v1250
    %v1255 = vmul.f32 %v1251, %v1251
    %v1256 = vmul.f32 %v1252, %v1252
    %v1257 = vmul.f32 %v1253, %v1253
    %v1258 = vadd.f32 %v1254, %v1255
    %1259 = vadd.xlane.f32.xlu0 %v1258
    %v1260 = vpop.xlane.xlu0 %1259
    %v1261 = vadd.f32 %v1256, %v1257
    %1262 = vadd.xlane.f32.xlu0 %v1261
    %v1263 = vpop.xlane.xlu0 %1262
    %v1264 = vmul.f32 %v1260, %v1247
    %v1265 = vmul.f32 %v1263, %v1247
    %v1266 = vadd.f32 %v1264, 1e-05
    %v1267 = vadd.f32 %v1265, 1e-05
    %v1268 = vrsqrt.pop %v1266
    %v1269 = vrsqrt.pop %v1267
    %v1270 = vmul.f32 %v1250, %v1268
    %v1271 = vmul.f32 %v1251, %v1268
    %v1272 = vmul.f32 %v1252, %v1269
    %v1273 = vmul.f32 %v1253, %v1269
    %v1274 = vld [vmem:[#allocation8] sm:$0x3]
    %v1276 = vlaneseq
    %v1277 = vshrl.u32 %v1276, 7
    %v1278 = vsub.s32 0, %v1277
    %v1279 = vrot.slane %v1274, %v1278
    %v1280 = vlaneseq
    %v1281 = vshrl.u32 %v1280, 7
    %v1282 = vsub.s32 1, %v1281
    %v1283 = vrot.slane %v1274, %v1282
    %v1286 = vmul.f32 %v1270, %v1279
    %v1287 = vmul.f32 %v1271, %v1283
    %v1288 = vmul.f32 %v1272, %v1279
    %v1289 = vmul.f32 %v1273, %v1283
    %v1290 = vld [vmem:[#allocation10] sm:$0x3]
    %v1292 = vlaneseq
    %v1293 = vshrl.u32 %v1292, 7
    %v1294 = vsub.s32 0, %v1293
    %v1295 = vrot.slane %v1290, %v1294
    %v1296 = vlaneseq
    %v1297 = vshrl.u32 %v1296, 7
    %v1298 = vsub.s32 1, %v1297
    %v1299 = vrot.slane %v1290, %v1298
    %v1302 = vadd.f32 %v1286, %v1295
    %v1303 = vadd.f32 %v1287, %v1299
    %v1304 = vadd.f32 %v1288, %v1295
    %v1305 = vadd.f32 %v1289, %v1299
    %v1306 = vmax.f32 %v1302, 0.0
    %v1307 = vmax.f32 %v1303, 0.0
    %v1308 = vmax.f32 %v1304, 0.0
    %v1309 = vmax.f32 %v1305, 0.0
    %v1310 = vld [vmem:[#allocation11] sm:$0xff]
    %v1311 = vld [vmem:[#allocation11 + $0x8] sm:$0xff]
    %v1312 = vld [vmem:[#allocation11 + $0x10] sm:$0xff]
    %v1313 = vld [vmem:[#allocation11 + $0x18] sm:$0xff]
    %v1314 = vld [vmem:[#allocation11 + $0x20] sm:$0xff]
    %v1315 = vld [vmem:[#allocation11 + $0x28] sm:$0xff]
    %v1316 = vld [vmem:[#allocation11 + $0x30] sm:$0xff]
    %v1317 = vld [vmem:[#allocation11 + $0x38] sm:$0xff]
    %v1318 = vld [vmem:[#allocation11 + $0x40] sm:$0xff]
    %v1319 = vld [vmem:[#allocation11 + $0x48] sm:$0xff]
    %v1320 = vld [vmem:[#allocation11 + $0x50] sm:$0xff]
    %v1321 = vld [vmem:[#allocation11 + $0x58] sm:$0xff]
    %v1322 = vld [vmem:[#allocation11 + $0x60] sm:$0xff]
    %v1323 = vld [vmem:[#allocation11 + $0x68] sm:$0xff]
    %v1324 = vld [vmem:[#allocation11 + $0x70] sm:$0xff]
    %v1325 = vld [vmem:[#allocation11 + $0x78] sm:$0xff]
    %v1326 = vld [vmem:[#allocation11 + $0x80] sm:$0xff]
    %v1327 = vld [vmem:[#allocation11 + $0x88] sm:$0xff]
    %v1328 = vld [vmem:[#allocation11 + $0x90] sm:$0xff]
    %v1329 = vld [vmem:[#allocation11 + $0x98] sm:$0xff]
    %v1330 = vld [vmem:[#allocation11 + $0xa0] sm:$0xff]
    %v1331 = vld [vmem:[#allocation11 + $0xa8] sm:$0xff]
    %v1332 = vld [vmem:[#allocation11 + $0xb0] sm:$0xff]
    %v1333 = vld [vmem:[#allocation11 + $0xb8] sm:$0xff]
    %v1334 = vld [vmem:[#allocation11 + $0xc0] sm:$0xff]
    %v1335 = vld [vmem:[#allocation11 + $0xc8] sm:$0xff]
    %v1336 = vld [vmem:[#allocation11 + $0xd0] sm:$0xff]
    %v1337 = vld [vmem:[#allocation11 + $0xd8] sm:$0xff]
    %v1338 = vld [vmem:[#allocation11 + $0xe0] sm:$0xff]
    %v1339 = vld [vmem:[#allocation11 + $0xe8] sm:$0xff]
    %v1340 = vld [vmem:[#allocation11 + $0xf0] sm:$0xff]
    %v1341 = vld [vmem:[#allocation11 + $0xf8] sm:$0xff]
    %v1342 = vld [vmem:[#allocation13] sm:$0x1]
    %v1344 = vlaneseq
    %v1345 = vshrl.u32 %v1344, 7
    %v1346 = vsub.s32 0, %v1345
    %v1347 = vrot.slane %v1342, %v1346
    %1349 = vmatprep.subr.mxu0 0.0
    %1350 = vmatpush1.msra.mxu0 %v1310
    %1351 = vmatprep.subr.mxu0 0.0
    %1352 = vmatpush1.msra.mxu0 %v1311
    %1353 = vmatprep.subr.mxu0 0.0
    %1354 = vmatpush1.msra.mxu0 %v1312
    %1355 = vmatprep.subr.mxu0 0.0
    %1356 = vmatpush1.msra.mxu0 %v1313
    %1357 = vmatprep.subr.mxu0 0.0
    %1358 = vmatpush1.msra.mxu0 %v1314
    %1359 = vmatprep.subr.mxu0 0.0
    %1360 = vmatpush1.msra.mxu0 %v1315
    %1361 = vmatprep.subr.mxu0 0.0
    %1362 = vmatpush1.msra.mxu0 %v1316
    %1363 = vmatprep.subr.mxu0 0.0
    %1364 = vmatpush1.msra.mxu0 %v1317
    %1365 = vmatprep.subr.mxu0 0.0
    %1366 = vmatpush1.msra.mxu0 %v1318
    %1367 = vmatprep.subr.mxu0 0.0
    %1368 = vmatpush1.msra.mxu0 %v1319
    %1369 = vmatprep.subr.mxu0 0.0
    %1370 = vmatpush1.msra.mxu0 %v1320
    %1371 = vmatprep.subr.mxu0 0.0
    %1372 = vmatpush1.msra.mxu0 %v1321
    %1373 = vmatprep.subr.mxu0 0.0
    %1374 = vmatpush1.msra.mxu0 %v1322
    %1375 = vmatprep.subr.mxu0 0.0
    %1376 = vmatpush1.msra.mxu0 %v1323
    %1377 = vmatprep.subr.mxu0 0.0
    %1378 = vmatpush1.msra.mxu0 %v1324
    %1379 = vmatprep.subr.mxu0 0.0
    %1380 = vmatpush1.msra.mxu0 %v1325
    %1381 = vmatprep.subr.mxu0 0.0
    %1382 = vmatpush1.msra.mxu0 %v1326
    %1383 = vmatprep.subr.mxu0 0.0
    %1384 = vmatpush1.msra.mxu0 %v1327
    %1385 = vmatprep.subr.mxu0 0.0
    %1386 = vmatpush1.msra.mxu0 %v1328
    %1387 = vmatprep.subr.mxu0 0.0
    %1388 = vmatpush1.msra.mxu0 %v1329
    %1389 = vmatprep.subr.mxu0 0.0
    %1390 = vmatpush1.msra.mxu0 %v1330
    %1391 = vmatprep.subr.mxu0 0.0
    %1392 = vmatpush1.msra.mxu0 %v1331
    %1393 = vmatprep.subr.mxu0 0.0
    %1394 = vmatpush1.msra.mxu0 %v1332
    %1395 = vmatprep.subr.mxu0 0.0
    %1396 = vmatpush1.msra.mxu0 %v1333
    %1397 = vmatprep.subr.mxu0 0.0
    %1398 = vmatpush1.msra.mxu0 %v1334
    %1399 = vmatprep.subr.mxu0 0.0
    %1400 = vmatpush1.msra.mxu0 %v1335
    %1401 = vmatprep.subr.mxu0 0.0
    %1402 = vmatpush1.msra.mxu0 %v1336
    %1403 = vmatprep.subr.mxu0 0.0
    %1404 = vmatpush1.msra.mxu0 %v1337
    %1405 = vmatprep.subr.mxu0 0.0
    %1406 = vmatpush1.msra.mxu0 %v1338
    %1407 = vmatprep.subr.mxu0 0.0
    %1408 = vmatpush1.msra.mxu0 %v1339
    %1409 = vmatprep.subr.mxu0 0.0
    %1410 = vmatpush1.msra.mxu0 %v1340
    %1411 = vmatprep.subr.mxu0 0.0
    %1412 = vmatpush1.msra.mxu0 %v1341
    %1413 = vmatprep.mubr.f32.mxu0 %v1307
    %1414 = vmatmul.mubr.f32.gmra.mrb[0].mxu0 %v1306
    %v1415 = vpop.f32.mrb[0].mxu0
    %v1416 = vadd.f32 %v1347, %v1415
    %v1417 = vpop.f32.mrb[0].mxu0
    %1418 = vmatprep.mubr.f32.mxu0 %v1309
    %1419 = vmatmul.mubr.f32.gmra.mrb[0].mxu0 %v1308
    %v1420 = vpop.f32.mrb[0].mxu0
    %v1421 = vadd.f32 %v1347, %v1420
    %v1422 = vpop.f32.mrb[0].mxu0
    %1423 = vdwg.mxu0
    %1424 = vadd.xlane.f32.xlu0 %v1416
    %v1425 = vpop.xlane.xlu0 %1424
    %1426 = vadd.xlane.f32.xlu0 %v1421
    %v1427 = vpop.xlane.xlu0 %1426
    %v1428 = vrcp.pop 128.0
    %v1429 = vmul.f32 %v1425, %v1428
    %v1430 = vmul.f32 %v1427, %v1428
    %v1431 = vsub.f32 %v1416, %v1429
    %v1432 = vsub.f32 %v1421, %v1430
    %v1433 = vmul.f32 %v1431, %v1431
    %v1434 = vmul.f32 %v1432, %v1432
    %1435 = vadd.xlane.f32.xlu0 %v1433
    %v1436 = vpop.xlane.xlu0 %1435
    %1437 = vadd.xlane.f32.xlu0 %v1434
    %v1438 = vpop.xlane.xlu0 %1437
    %v1439 = vmul.f32 %v1436, %v1428
    %v1440 = vmul.f32 %v1438, %v1428
    %v1441 = vadd.f32 %v1439, 1e-05
    %v1442 = vadd.f32 %v1440, 1e-05
    %v1443 = vrsqrt.pop %v1441
    %v1444 = vrsqrt.pop %v1442
    %v1445 = vmul.f32 %v1431, %v1443
    %v1446 = vmul.f32 %v1432, %v1444
    %v1447 = vld [vmem:[#allocation14] sm:$0x1]
    %v1449 = vlaneseq
    %v1450 = vshrl.u32 %v1449, 7
    %v1451 = vsub.s32 0, %v1450
    %v1452 = vrot.slane %v1447, %v1451
    %v1454 = vmul.f32 %v1445, %v1452
    %v1455 = vmul.f32 %v1446, %v1452
    %v1456 = vld [vmem:[#allocation16] sm:$0x1]
    %v1458 = vlaneseq
    %v1459 = vshrl.u32 %v1458, 7
    %v1460 = vsub.s32 0, %v1459
    %v1461 = vrot.slane %v1456, %v1460
    %v1463 = vadd.f32 %v1454, %v1461
    %v1464 = vadd.f32 %v1455, %v1461
    %v1465 = vld [vmem:[%s3] sm:$0xff]
    %v1466 = vld [vmem:[%s3 + $0x8] sm:$0xff]
    %v1467 = vld [vmem:[%s3 + $0x10] sm:$0xff]
    %v1468 = vld [vmem:[%s3 + $0x18] sm:$0xff]
    %v1469 = vld [vmem:[#allocation17] sm:$0xff]
    %v1470 = vld [vmem:[#allocation17 + $0x8] sm:$0xff]
    %v1471 = vld [vmem:[#allocation17 + $0x10] sm:$0xff]
    %v1472 = vld [vmem:[#allocation17 + $0x18] sm:$0xff]
    %v1473 = vld [vmem:[#allocation17 + $0x20] sm:$0xff]
    %v1474 = vld [vmem:[#allocation17 + $0x28] sm:$0xff]
    %v1475 = vld [vmem:[#allocation17 + $0x30] sm:$0xff]
    %v1476 = vld [vmem:[#allocation17 + $0x38] sm:$0xff]
    %v1477 = vld [vmem:[#allocation17 + $0x40] sm:$0xff]
    %v1478 = vld [vmem:[#allocation17 + $0x48] sm:$0xff]
    %v1479 = vld [vmem:[#allocation17 + $0x50] sm:$0xff]
    %v1480 = vld [vmem:[#allocation17 + $0x58] sm:$0xff]
    %v1481 = vld [vmem:[#allocation17 + $0x60] sm:$0xff]
    %v1482 = vld [vmem:[#allocation17 + $0x68] sm:$0xff]
    %v1483 = vld [vmem:[#allocation17 + $0x70] sm:$0xff]
    %v1484 = vld [vmem:[#allocation17 + $0x78] sm:$0xff]
    %v1485 = vld [vmem:[#allocation17 + $0x80] sm:$0xff]
    %v1486 = vld [vmem:[#allocation17 + $0x88] sm:$0xff]
    %v1487 = vld [vmem:[#allocation17 + $0x90] sm:$0xff]
    %v1488 = vld [vmem:[#allocation17 + $0x98] sm:$0xff]
    %v1489 = vld [vmem:[#allocation17 + $0xa0] sm:$0xff]
    %v1490 = vld [vmem:[#allocation17 + $0xa8] sm:$0xff]
    %v1491 = vld [vmem:[#allocation17 + $0xb0] sm:$0xff]
    %v1492 = vld [vmem:[#allocation17 + $0xb8] sm:$0xff]
    %v1493 = vld [vmem:[#allocation17 + $0xc0] sm:$0xff]
    %v1494 = vld [vmem:[#allocation17 + $0xc8] sm:$0xff]
    %v1495 = vld [vmem:[#allocation17 + $0xd0] sm:$0xff]
    %v1496 = vld [vmem:[#allocation17 + $0xd8] sm:$0xff]
    %v1497 = vld [vmem:[#allocation17 + $0xe0] sm:$0xff]
    %v1498 = vld [vmem:[#allocation17 + $0xe8] sm:$0xff]
    %v1499 = vld [vmem:[#allocation17 + $0xf0] sm:$0xff]
    %v1500 = vld [vmem:[#allocation17 + $0xf8] sm:$0xff]
    %v1501 = vld [vmem:[#allocation19] sm:$0x3]
    %v1503 = vlaneseq
    %v1504 = vshrl.u32 %v1503, 7
    %v1505 = vsub.s32 0, %v1504
    %v1506 = vrot.slane %v1501, %v1505
    %v1507 = vlaneseq
    %v1508 = vshrl.u32 %v1507, 7
    %v1509 = vsub.s32 1, %v1508
    %v1510 = vrot.slane %v1501, %v1509
    %1513 = vmatprep.subr.mxu0 %v1470
    %1514 = vmatpush1.msra.mxu0 %v1469
    %1515 = vmatprep.subr.mxu0 %v1472
    %1516 = vmatpush1.msra.mxu0 %v1471
    %1517 = vmatprep.subr.mxu0 %v1474
    %1518 = vmatpush1.msra.mxu0 %v1473
    %1519 = vmatprep.subr.mxu0 %v1476
    %1520 = vmatpush1.msra.mxu0 %v1475
    %1521 = vmatprep.subr.mxu0 %v1478
    %1522 = vmatpush1.msra.mxu0 %v1477
    %1523 = vmatprep.subr.mxu0 %v1480
    %1524 = vmatpush1.msra.mxu0 %v1479
    %1525 = vmatprep.subr.mxu0 %v1482
    %1526 = vmatpush1.msra.mxu0 %v1481
    %1527 = vmatprep.subr.mxu0 %v1484
    %1528 = vmatpush1.msra.mxu0 %v1483
    %1529 = vmatprep.subr.mxu0 %v1486
    %1530 = vmatpush1.msra.mxu0 %v1485
    %1531 = vmatprep.subr.mxu0 %v1488
    %1532 = vmatpush1.msra.mxu0 %v1487
    %1533 = vmatprep.subr.mxu0 %v1490
    %1534 = vmatpush1.msra.mxu0 %v1489
    %1535 = vmatprep.subr.mxu0 %v1492
    %1536 = vmatpush1.msra.mxu0 %v1491
    %1537 = vmatprep.subr.mxu0 %v1494
    %1538 = vmatpush1.msra.mxu0 %v1493
    %1539 = vmatprep.subr.mxu0 %v1496
    %1540 = vmatpush1.msra.mxu0 %v1495
    %1541 = vmatprep.subr.mxu0 %v1498
    %1542 = vmatpush1.msra.mxu0 %v1497
    %1543 = vmatprep.subr.mxu0 %v1500
    %1544 = vmatpush1.msra.mxu0 %v1499
    %1545 = vmatprep.subr.mxu0 0.0
    %1546 = vmatpush1.msra.mxu0 0.0
    %1547 = vmatprep.subr.mxu0 0.0
    %1548 = vmatpush1.msra.mxu0 0.0
    %1549 = vmatprep.subr.mxu0 0.0
    %1550 = vmatpush1.msra.mxu0 0.0
    %1551 = vmatprep.subr.mxu0 0.0
    %1552 = vmatpush1.msra.mxu0 0.0
    %1553 = vmatprep.subr.mxu0 0.0
    %1554 = vmatpush1.msra.mxu0 0.0
    %1555 = vmatprep.subr.mxu0 0.0
    %1556 = vmatpush1.msra.mxu0 0.0
    %1557 = vmatprep.subr.mxu0 0.0
    %1558 = vmatpush1.msra.mxu0 0.0
    %1559 = vmatprep.subr.mxu0 0.0
    %1560 = vmatpush1.msra.mxu0 0.0
    %1561 = vmatprep.subr.mxu0 0.0
    %1562 = vmatpush1.msra.mxu0 0.0
    %1563 = vmatprep.subr.mxu0 0.0
    %1564 = vmatpush1.msra.mxu0 0.0
    %1565 = vmatprep.subr.mxu0 0.0
    %1566 = vmatpush1.msra.mxu0 0.0
    %1567 = vmatprep.subr.mxu0 0.0
    %1568 = vmatpush1.msra.mxu0 0.0
    %1569 = vmatprep.subr.mxu0 0.0
    %1570 = vmatpush1.msra.mxu0 0.0
    %1571 = vmatprep.subr.mxu0 0.0
    %1572 = vmatpush1.msra.mxu0 0.0
    %1573 = vmatprep.subr.mxu0 0.0
    %1574 = vmatpush1.msra.mxu0 0.0
    %1575 = vmatprep.subr.mxu0 0.0
    %1576 = vmatpush1.msra.mxu0 0.0
    %1577 = vmatprep.mubr.f32.mxu0 0.0
    %1578 = vmatmul.mubr.f32.gmra.mrb[0].mxu0 %v1465
    %v1579 = vpop.f32.mrb[0].mxu0
    %v1580 = vadd.f32 %v1506, %v1579
    %v1581 = vpop.f32.mrb[0].mxu0
    %v1582 = vadd.f32 %v1510, %v1581
    %1583 = vmatprep.mubr.f32.mxu0 0.0
    %1584 = vmatmul.mubr.f32.gmra.mrb[0].mxu0 %v1466
    %v1585 = vpop.f32.mrb[0].mxu0
    %v1586 = vadd.f32 %v1506, %v1585
    %v1587 = vpop.f32.mrb[0].mxu0
    %v1588 = vadd.f32 %v1510, %v1587
    %1589 = vmatprep.mubr.f32.mxu0 0.0
    %1590 = vmatmul.mubr.f32.gmra.mrb[0].mxu0 %v1467
    %v1591 = vpop.f32.mrb[0].mxu0
    %v1592 = vadd.f32 %v1506, %v1591
    %v1593 = vpop.f32.mrb[0].mxu0
    %v1594 = vadd.f32 %v1510, %v1593
    %1595 = vmatprep.mubr.f32.mxu0 0.0
    %1596 = vmatmul.mubr.f32.gmra.mrb[0].mxu0 %v1468
    %v1597 = vpop.f32.mrb[0].mxu0
    %v1598 = vadd.f32 %v1506, %v1597
    %v1599 = vpop.f32.mrb[0].mxu0
    %v1600 = vadd.f32 %v1510, %v1599
    %1601 = vdwg.mxu0
    %v1602 = vadd.f32 %v1580, %v1582
    %1603 = vadd.xlane.f32.xlu0 %v1602
    %v1604 = vpop.xlane.xlu0 %1603
    %v1605 = vadd.f32 %v1586, %v1588
    %1606 = vadd.xlane.f32.xlu0 %v1605
    %v1607 = vpop.xlane.xlu0 %1606
    %v1608 = vadd.f32 %v1592, %v1594
    %1609 = vadd.xlane.f32.xlu0 %v1608
    %v1610 = vpop.xlane.xlu0 %1609
    %v1611 = vadd.f32 %v1598, %v1600
    %1612 = vadd.xlane.f32.xlu0 %v1611
    %v1613 = vpop.xlane.xlu0 %1612
    %v1614 = vmul.f32 %v1604, %v1247
    %v1615 = vmul.f32 %v1607, %v1247
    %v1616 = vmul.f32 %v1610, %v1247
    %v1617 = vmul.f32 %v1613, %v1247
    %v1618 = vsub.f32 %v1580, %v1614
    %v1619 = vsub.f32 %v1582, %v1614
    %v1620 = vsub.f32 %v1586, %v1615
    %v1621 = vsub.f32 %v1588, %v1615
    %v1622 = vsub.f32 %v1592, %v1616
    %v1623 = vsub.f32 %v1594, %v1616
    %v1624 = vsub.f32 %v1598, %v1617
    %v1625 = vsub.f32 %v1600, %v1617
    %v1626 = vmul.f32 %v1618, %v1618
    %v1627 = vmul.f32 %v1619, %v1619
    %v1628 = vmul.f32 %v1620, %v1620
    %v1629 = vmul.f32 %v1621, %v1621
    %v1630 = vmul.f32 %v1622, %v1622
    %v1631 = vmul.f32 %v1623, %v1623
    %v1632 = vmul.f32 %v1624, %v1624
    %v1633 = vmul.f32 %v1625, %v1625
    %v1634 = vadd.f32 %v1626, %v1627
    %1635 = vadd.xlane.f32.xlu0 %v1634
    %v1636 = vpop.xlane.xlu0 %1635
    %v1637 = vadd.f32 %v1628, %v1629
    %1638 = vadd.xlane.f32.xlu0 %v1637
    %v1639 = vpop.xlane.xlu0 %1638
    %v1640 = vadd.f32 %v1630, %v1631
    %1641 = vadd.xlane.f32.xlu0 %v1640
    %v1642 = vpop.xlane.xlu0 %1641
    %v1643 = vadd.f32 %v1632, %v1633
    %1644 = vadd.xlane.f32.xlu0 %v1643
    %v1645 = vpop.xlane.xlu0 %1644
    %v1646 = vmul.f32 %v1636, %v1247
    %v1647 = vmul.f32 %v1639, %v1247
    %v1648 = vmul.f32 %v1642, %v1247
    %v1649 = vmul.f32 %v1645, %v1247
    %v1650 = vadd.f32 %v1646, 1e-05
    %v1651 = vadd.f32 %v1647, 1e-05
    %v1652 = vadd.f32 %v1648, 1e-05
    %v1653 = vadd.f32 %v1649, 1e-05
    %v1654 = vrsqrt.pop %v1650
    %v1655 = vrsqrt.pop %v1651
    %v1656 = vrsqrt.pop %v1652
    %v1657 = vrsqrt.pop %v1653
    %v1658 = vmul.f32 %v1618, %v1654
    %v1659 = vmul.f32 %v1619, %v1654
    %v1660 = vmul.f32 %v1620, %v1655
    %v1661 = vmul.f32 %v1621, %v1655
    %v1662 = vmul.f32 %v1622, %v1656
    %v1663 = vmul.f32 %v1623, %v1656
    %v1664 = vmul.f32 %v1624, %v1657
    %v1665 = vmul.f32 %v1625, %v1657
    %v1666 = vld [vmem:[#allocation20] sm:$0x3]
    %v1668 = vlaneseq
    %v1669 = vshrl.u32 %v1668, 7
    %v1670 = vsub.s32 0, %v1669
    %v1671 = vrot.slane %v1666, %v1670
    %v1672 = vlaneseq
    %v1673 = vshrl.u32 %v1672, 7
    %v1674 = vsub.s32 1, %v1673
    %v1675 = vrot.slane %v1666, %v1674
    %v1678 = vmul.f32 %v1658, %v1671
    %v1679 = vmul.f32 %v1659, %v1675
    %v1680 = vmul.f32 %v1660, %v1671
    %v1681 = vmul.f32 %v1661, %v1675
    %v1682 = vmul.f32 %v1662, %v1671
    %v1683 = vmul.f32 %v1663, %v1675
    %v1684 = vmul.f32 %v1664, %v1671
    %v1685 = vmul.f32 %v1665, %v1675
    %v1686 = vld [vmem:[#allocation22] sm:$0x3]
    %v1688 = vlaneseq
    %v1689 = vshrl.u32 %v1688, 7
    %v1690 = vsub.s32 0, %v1689
    %v1691 = vrot.slane %v1686, %v1690
    %v1692 = vlaneseq
    %v1693 = vshrl.u32 %v1692, 7
    %v1694 = vsub.s32 1, %v1693
    %v1695 = vrot.slane %v1686, %v1694
    %v1698 = vadd.f32 %v1678, %v1691
    %v1699 = vadd.f32 %v1679, %v1695
    %v1700 = vadd.f32 %v1680, %v1691
    %v1701 = vadd.f32 %v1681, %v1695
    %v1702 = vadd.f32 %v1682, %v1691
    %v1703 = vadd.f32 %v1683, %v1695
    %v1704 = vadd.f32 %v1684, %v1691
    %v1705 = vadd.f32 %v1685, %v1695
    %v1706 = vmax.f32 %v1698, 0.0
    %v1707 = vmax.f32 %v1699, 0.0
    %v1708 = vmax.f32 %v1700, 0.0
    %v1709 = vmax.f32 %v1701, 0.0
    %v1710 = vmax.f32 %v1702, 0.0
    %v1711 = vmax.f32 %v1703, 0.0
    %v1712 = vmax.f32 %v1704, 0.0
    %v1713 = vmax.f32 %v1705, 0.0
    %v1714 = vld [vmem:[#allocation23] sm:$0xff]
    %v1715 = vld [vmem:[#allocation23 + $0x8] sm:$0xff]
    %v1716 = vld [vmem:[#allocation23 + $0x10] sm:$0xff]
    %v1717 = vld [vmem:[#allocation23 + $0x18] sm:$0xff]
    %v1718 = vld [vmem:[#allocation23 + $0x20] sm:$0xff]
    %v1719 = vld [vmem:[#allocation23 + $0x28] sm:$0xff]
    %v1720 = vld [vmem:[#allocation23 + $0x30] sm:$0xff]
    %v1721 = vld [vmem:[#allocation23 + $0x38] sm:$0xff]
    %v1722 = vld [vmem:[#allocation23 + $0x40] sm:$0xff]
    %v1723 = vld [vmem:[#allocation23 + $0x48] sm:$0xff]
    %v1724 = vld [vmem:[#allocation23 + $0x50] sm:$0xff]
    %v1725 = vld [vmem:[#allocation23 + $0x58] sm:$0xff]
    %v1726 = vld [vmem:[#allocation23 + $0x60] sm:$0xff]
    %v1727 = vld [vmem:[#allocation23 + $0x68] sm:$0xff]
    %v1728 = vld [vmem:[#allocation23 + $0x70] sm:$0xff]
    %v1729 = vld [vmem:[#allocation23 + $0x78] sm:$0xff]
    %v1730 = vld [vmem:[#allocation23 + $0x80] sm:$0xff]
    %v1731 = vld [vmem:[#allocation23 + $0x88] sm:$0xff]
    %v1732 = vld [vmem:[#allocation23 + $0x90] sm:$0xff]
    %v1733 = vld [vmem:[#allocation23 + $0x98] sm:$0xff]
    %v1734 = vld [vmem:[#allocation23 + $0xa0] sm:$0xff]
    %v1735 = vld [vmem:[#allocation23 + $0xa8] sm:$0xff]
    %v1736 = vld [vmem:[#allocation23 + $0xb0] sm:$0xff]
    %v1737 = vld [vmem:[#allocation23 + $0xb8] sm:$0xff]
    %v1738 = vld [vmem:[#allocation23 + $0xc0] sm:$0xff]
    %v1739 = vld [vmem:[#allocation23 + $0xc8] sm:$0xff]
    %v1740 = vld [vmem:[#allocation23 + $0xd0] sm:$0xff]
    %v1741 = vld [vmem:[#allocation23 + $0xd8] sm:$0xff]
    %v1742 = vld [vmem:[#allocation23 + $0xe0] sm:$0xff]
    %v1743 = vld [vmem:[#allocation23 + $0xe8] sm:$0xff]
    %v1744 = vld [vmem:[#allocation23 + $0xf0] sm:$0xff]
    %v1745 = vld [vmem:[#allocation23 + $0xf8] sm:$0xff]
    %v1746 = vld [vmem:[#allocation25] sm:$0x1]
    %v1748 = vlaneseq
    %v1749 = vshrl.u32 %v1748, 7
    %v1750 = vsub.s32 0, %v1749
    %v1751 = vrot.slane %v1746, %v1750
    %1753 = vmatprep.subr.mxu0 0.0
    %1754 = vmatpush1.msra.mxu0 %v1714
    %1755 = vmatprep.subr.mxu0 0.0
    %1756 = vmatpush1.msra.mxu0 %v1715
    %1757 = vmatprep.subr.mxu0 0.0
    %1758 = vmatpush1.msra.mxu0 %v1716
    %1759 = vmatprep.subr.mxu0 0.0
    %1760 = vmatpush1.msra.mxu0 %v1717
    %1761 = vmatprep.subr.mxu0 0.0
    %1762 = vmatpush1.msra.mxu0 %v1718
    %1763 = vmatprep.subr.mxu0 0.0
    %1764 = vmatpush1.msra.mxu0 %v1719
    %1765 = vmatprep.subr.mxu0 0.0
    %1766 = vmatpush1.msra.mxu0 %v1720
    %1767 = vmatprep.subr.mxu0 0.0
    %1768 = vmatpush1.msra.mxu0 %v1721
    %1769 = vmatprep.subr.mxu0 0.0
    %1770 = vmatpush1.msra.mxu0 %v1722
    %1771 = vmatprep.subr.mxu0 0.0
    %1772 = vmatpush1.msra.mxu0 %v1723
    %1773 = vmatprep.subr.mxu0 0.0
    %1774 = vmatpush1.msra.mxu0 %v1724
    %1775 = vmatprep.subr.mxu0 0.0
    %1776 = vmatpush1.msra.mxu0 %v1725
    %1777 = vmatprep.subr.mxu0 0.0
    %1778 = vmatpush1.msra.mxu0 %v1726
    %1779 = vmatprep.subr.mxu0 0.0
    %1780 = vmatpush1.msra.mxu0 %v1727
    %1781 = vmatprep.subr.mxu0 0.0
    %1782 = vmatpush1.msra.mxu0 %v1728
    %1783 = vmatprep.subr.mxu0 0.0
    %1784 = vmatpush1.msra.mxu0 %v1729
    %1785 = vmatprep.subr.mxu0 0.0
    %1786 = vmatpush1.msra.mxu0 %v1730
    %1787 = vmatprep.subr.mxu0 0.0
    %1788 = vmatpush1.msra.mxu0 %v1731
    %1789 = vmatprep.subr.mxu0 0.0
    %1790 = vmatpush1.msra.mxu0 %v1732
    %1791 = vmatprep.subr.mxu0 0.0
    %1792 = vmatpush1.msra.mxu0 %v1733
    %1793 = vmatprep.subr.mxu0 0.0
    %1794 = vmatpush1.msra.mxu0 %v1734
    %1795 = vmatprep.subr.mxu0 0.0
    %1796 = vmatpush1.msra.mxu0 %v1735
    %1797 = vmatprep.subr.mxu0 0.0
    %1798 = vmatpush1.msra.mxu0 %v1736
    %1799 = vmatprep.subr.mxu0 0.0
    %1800 = vmatpush1.msra.mxu0 %v1737
    %1801 = vmatprep.subr.mxu0 0.0
    %1802 = vmatpush1.msra.mxu0 %v1738
    %1803 = vmatprep.subr.mxu0 0.0
    %1804 = vmatpush1.msra.mxu0 %v1739
    %1805 = vmatprep.subr.mxu0 0.0
    %1806 = vmatpush1.msra.mxu0 %v1740
    %1807 = vmatprep.subr.mxu0 0.0
    %1808 = vmatpush1.msra.mxu0 %v1741
    %1809 = vmatprep.subr.mxu0 0.0
    %1810 = vmatpush1.msra.mxu0 %v1742
    %1811 = vmatprep.subr.mxu0 0.0
    %1812 = vmatpush1.msra.mxu0 %v1743
    %1813 = vmatprep.subr.mxu0 0.0
    %1814 = vmatpush1.msra.mxu0 %v1744
    %1815 = vmatprep.subr.mxu0 0.0
    %1816 = vmatpush1.msra.mxu0 %v1745
    %1817 = vmatprep.mubr.f32.mxu0 %v1707
    %1818 = vmatmul.mubr.f32.gmra.mrb[0].mxu0 %v1706
    %v1819 = vpop.f32.mrb[0].mxu0
    %v1820 = vadd.f32 %v1751, %v1819
    %v1821 = vpop.f32.mrb[0].mxu0
    %1822 = vmatprep.mubr.f32.mxu0 %v1709
    %1823 = vmatmul.mubr.f32.gmra.mrb[0].mxu0 %v1708
    %v1824 = vpop.f32.mrb[0].mxu0
    %v1825 = vadd.f32 %v1751, %v1824
    %v1826 = vpop.f32.mrb[0].mxu0
    %1827 = vmatprep.mubr.f32.mxu0 %v1711
    %1828 = vmatmul.mubr.f32.gmra.mrb[0].mxu0 %v1710
    %v1829 = vpop.f32.mrb[0].mxu0
    %v1830 = vadd.f32 %v1751, %v1829
    %v1831 = vpop.f32.mrb[0].mxu0
    %1832 = vmatprep.mubr.f32.mxu0 %v1713
    %1833 = vmatmul.mubr.f32.gmra.mrb[0].mxu0 %v1712
    %v1834 = vpop.f32.mrb[0].mxu0
    %v1835 = vadd.f32 %v1751, %v1834
    %v1836 = vpop.f32.mrb[0].mxu0
    %1837 = vdwg.mxu0
    %1838 = vadd.xlane.f32.xlu0 %v1820
    %v1839 = vpop.xlane.xlu0 %1838
    %1840 = vadd.xlane.f32.xlu0 %v1825
    %v1841 = vpop.xlane.xlu0 %1840
    %1842 = vadd.xlane.f32.xlu0 %v1830
    %v1843 = vpop.xlane.xlu0 %1842
    %1844 = vadd.xlane.f32.xlu0 %v1835
    %v1845 = vpop.xlane.xlu0 %1844
    %v1846 = vmul.f32 %v1839, %v1428
    %v1847 = vmul.f32 %v1841, %v1428
    %v1848 = vmul.f32 %v1843, %v1428
    %v1849 = vmul.f32 %v1845, %v1428
    %v1850 = vsub.f32 %v1820, %v1846
    %v1851 = vsub.f32 %v1825, %v1847
    %v1852 = vsub.f32 %v1830, %v1848
    %v1853 = vsub.f32 %v1835, %v1849
    %v1854 = vmul.f32 %v1850, %v1850
    %v1855 = vmul.f32 %v1851, %v1851
    %v1856 = vmul.f32 %v1852, %v1852
    %v1857 = vmul.f32 %v1853, %v1853
    %1858 = vadd.xlane.f32.xlu0 %v1854
    %v1859 = vpop.xlane.xlu0 %1858
    %1860 = vadd.xlane.f32.xlu0 %v1855
    %v1861 = vpop.xlane.xlu0 %1860
    %1862 = vadd.xlane.f32.xlu0 %v1856
    %v1863 = vpop.xlane.xlu0 %1862
    %1864 = vadd.xlane.f32.xlu0 %v1857
    %v1865 = vpop.xlane.xlu0 %1864
    %v1866 = vmul.f32 %v1859, %v1428
    %v1867 = vmul.f32 %v1861, %v1428
    %v1868 = vmul.f32 %v1863, %v1428
    %v1869 = vmul.f32 %v1865, %v1428
    %v1870 = vadd.f32 %v1866, 1e-05
    %v1871 = vadd.f32 %v1867, 1e-05
    %v1872 = vadd.f32 %v1868, 1e-05
    %v1873 = vadd.f32 %v1869, 1e-05
    %v1874 = vrsqrt.pop %v1870
    %v1875 = vrsqrt.pop %v1871
    %v1876 = vrsqrt.pop %v1872
    %v1877 = vrsqrt.pop %v1873
    %v1878 = vmul.f32 %v1850, %v1874
    %v1879 = vmul.f32 %v1851, %v1875
    %v1880 = vmul.f32 %v1852, %v1876
    %v1881 = vmul.f32 %v1853, %v1877
    %v1882 = vld [vmem:[#allocation26] sm:$0x1]
    %v1884 = vlaneseq
    %v1885 = vshrl.u32 %v1884, 7
    %v1886 = vsub.s32 0, %v1885
    %v1887 = vrot.slane %v1882, %v1886
    %v1889 = vmul.f32 %v1878, %v1887
    %v1890 = vmul.f32 %v1879, %v1887
    %v1891 = vmul.f32 %v1880, %v1887
    %v1892 = vmul.f32 %v1881, %v1887
    %v1893 = vld [vmem:[#allocation28] sm:$0x1]
    %v1895 = vlaneseq
    %v1896 = vshrl.u32 %v1895, 7
    %v1897 = vsub.s32 0, %v1896
    %v1898 = vrot.slane %v1893, %v1897
    %v1900 = vadd.f32 %v1889, %v1898
    %v1901 = vadd.f32 %v1890, %v1898
    %v1902 = vadd.f32 %v1891, %v1898
    %v1903 = vadd.f32 %v1892, %v1898
    %1904 = vst [vmem:[#allocation62] sm:$0xff] %v1463
    %1905 = vst [vmem:[#allocation62 + $0x8] sm:$0xff] %v1464
    %1906 = vst [vmem:[#allocation63] sm:$0xff] %v1900
    %1907 = vst [vmem:[#allocation63 + $0x8] sm:$0xff] %v1901
    %1908 = vst [vmem:[#allocation63 + $0x10] sm:$0xff] %v1902
    %1909 = vst [vmem:[#allocation63 + $0x18] sm:$0xff] %v1903
    %v1910 = vld [vmem:[#allocation29] sm:$0xff]
    %v1911 = vld [vmem:[#allocation29 + $0x8] sm:$0xff]
    %v1912 = vld [vmem:[#allocation29 + $0x10] sm:$0xff]
    %v1913 = vld [vmem:[#allocation29 + $0x18] sm:$0xff]
    %v1914 = vld [vmem:[#allocation29 + $0x20] sm:$0xff]
    %v1915 = vld [vmem:[#allocation29 + $0x28] sm:$0xff]
    %v1916 = vld [vmem:[#allocation29 + $0x30] sm:$0xff]
    %v1917 = vld [vmem:[#allocation29 + $0x38] sm:$0xff]
    %v1918 = vld [vmem:[#allocation29 + $0x40] sm:$0xff]
    %v1919 = vld [vmem:[#allocation29 + $0x48] sm:$0xff]
    %v1920 = vld [vmem:[#allocation29 + $0x50] sm:$0xff]
    %v1921 = vld [vmem:[#allocation29 + $0x58] sm:$0xff]
    %v1922 = vld [vmem:[#allocation29 + $0x60] sm:$0xff]
    %v1923 = vld [vmem:[#allocation29 + $0x68] sm:$0xff]
    %v1924 = vld [vmem:[#allocation29 + $0x70] sm:$0xff]
    %v1925 = vld [vmem:[#allocation29 + $0x78] sm:$0xff]
    %v1926 = vld [vmem:[#allocation34] sm:$0x1]
    %v1928 = vlaneseq
    %v1929 = vshrl.u32 %v1928, 7
    %v1930 = vsub.s32 0, %v1929
    %v1931 = vrot.slane %v1926, %v1930
    %1933 = vmatprep.subr.mxu0 0.0
    %1934 = vmatpush1.msra.mxu0 %v1910
    %1935 = vmatprep.subr.mxu0 0.0
    %1936 = vmatpush1.msra.mxu0 %v1911
    %1937 = vmatprep.subr.mxu0 0.0
    %1938 = vmatpush1.msra.mxu0 %v1912
    %1939 = vmatprep.subr.mxu0 0.0
    %1940 = vmatpush1.msra.mxu0 %v1913
    %1941 = vmatprep.subr.mxu0 0.0
    %1942 = vmatpush1.msra.mxu0 %v1914
    %1943 = vmatprep.subr.mxu0 0.0
    %1944 = vmatpush1.msra.mxu0 %v1915
    %1945 = vmatprep.subr.mxu0 0.0
    %1946 = vmatpush1.msra.mxu0 %v1916
    %1947 = vmatprep.subr.mxu0 0.0
    %1948 = vmatpush1.msra.mxu0 %v1917
    %1949 = vmatprep.subr.mxu0 0.0
    %1950 = vmatpush1.msra.mxu0 %v1918
    %1951 = vmatprep.subr.mxu0 0.0
    %1952 = vmatpush1.msra.mxu0 %v1919
    %1953 = vmatprep.subr.mxu0 0.0
    %1954 = vmatpush1.msra.mxu0 %v1920
    %1955 = vmatprep.subr.mxu0 0.0
    %1956 = vmatpush1.msra.mxu0 %v1921
    %1957 = vmatprep.subr.mxu0 0.0
    %1958 = vmatpush1.msra.mxu0 %v1922
    %1959 = vmatprep.subr.mxu0 0.0
    %1960 = vmatpush1.msra.mxu0 %v1923
    %1961 = vmatprep.subr.mxu0 0.0
    %1962 = vmatpush1.msra.mxu0 %v1924
    %1963 = vmatprep.subr.mxu0 0.0
    %1964 = vmatpush1.msra.mxu0 %v1925
    %1965 = vmatprep.subr.mxu0 0.0
    %1966 = vmatpush1.msra.mxu0 0.0
    %1967 = vmatprep.subr.mxu0 0.0
    %1968 = vmatpush1.msra.mxu0 0.0
    %1969 = vmatprep.subr.mxu0 0.0
    %1970 = vmatpush1.msra.mxu0 0.0
    %1971 = vmatprep.subr.mxu0 0.0
    %1972 = vmatpush1.msra.mxu0 0.0
    %1973 = vmatprep.subr.mxu0 0.0
    %1974 = vmatpush1.msra.mxu0 0.0
    %1975 = vmatprep.subr.mxu0 0.0
    %1976 = vmatpush1.msra.mxu0 0.0
    %1977 = vmatprep.subr.mxu0 0.0
    %1978 = vmatpush1.msra.mxu0 0.0
    %1979 = vmatprep.subr.mxu0 0.0
    %1980 = vmatpush1.msra.mxu0 0.0
    %1981 = vmatprep.subr.mxu0 0.0
    %1982 = vmatpush1.msra.mxu0 0.0
    %1983 = vmatprep.subr.mxu0 0.0
    %1984 = vmatpush1.msra.mxu0 0.0
    %1985 = vmatprep.subr.mxu0 0.0
    %1986 = vmatpush1.msra.mxu0 0.0
    %1987 = vmatprep.subr.mxu0 0.0
    %1988 = vmatpush1.msra.mxu0 0.0
    %1989 = vmatprep.subr.mxu0 0.0
    %1990 = vmatpush1.msra.mxu0 0.0
    %1991 = vmatprep.subr.mxu0 0.0
    %1992 = vmatpush1.msra.mxu0 0.0
    %1993 = vmatprep.subr.mxu0 0.0
    %1994 = vmatpush1.msra.mxu0 0.0
    %1995 = vmatprep.subr.mxu0 0.0
    %1996 = vmatpush1.msra.mxu0 0.0
    %1997 = vmatprep.mubr.f32.mxu0 0.0
    %1998 = vmatmul.mubr.f32.gmra.mrb[0].mxu0 %v1463
    %v1999 = vpop.f32.mrb[0].mxu0
    %v2000 = vadd.f32 %v1931, %v1999
    %v2001 = vpop.f32.mrb[0].mxu0
    %2002 = vmatprep.mubr.f32.mxu0 0.0
    %2003 = vmatmul.mubr.f32.gmra.mrb[0].mxu0 %v1464
    %v2004 = vpop.f32.mrb[0].mxu0
    %v2005 = vadd.f32 %v1931, %v2004
    %v2006 = vpop.f32.mrb[0].mxu0
    %2007 = vdwg.mxu0
    %v2008 = vld [vmem:[#allocation31] sm:$0xff]
    %v2009 = vld [vmem:[#allocation31 + $0x8] sm:$0xff]
    %v2010 = vld [vmem:[#allocation31 + $0x10] sm:$0xff]
    %v2011 = vld [vmem:[#allocation31 + $0x18] sm:$0xff]
    %v2012 = vld [vmem:[#allocation31 + $0x20] sm:$0xff]
    %v2013 = vld [vmem:[#allocation31 + $0x28] sm:$0xff]
    %v2014 = vld [vmem:[#allocation31 + $0x30] sm:$0xff]
    %v2015 = vld [vmem:[#allocation31 + $0x38] sm:$0xff]
    %v2016 = vld [vmem:[#allocation31 + $0x40] sm:$0xff]
    %v2017 = vld [vmem:[#allocation31 + $0x48] sm:$0xff]
    %v2018 = vld [vmem:[#allocation31 + $0x50] sm:$0xff]
    %v2019 = vld [vmem:[#allocation31 + $0x58] sm:$0xff]
    %v2020 = vld [vmem:[#allocation31 + $0x60] sm:$0xff]
    %v2021 = vld [vmem:[#allocation31 + $0x68] sm:$0xff]
    %v2022 = vld [vmem:[#allocation31 + $0x70] sm:$0xff]
    %v2023 = vld [vmem:[#allocation31 + $0x78] sm:$0xff]
    %v2024 = vld [vmem:[#allocation35] sm:$0x1]
    %v2026 = vlaneseq
    %v2027 = vshrl.u32 %v2026, 7
    %v2028 = vsub.s32 0, %v2027
    %v2029 = vrot.slane %v2024, %v2028
    %2031 = vmatprep.subr.mxu0 0.0
    %2032 = vmatpush1.msra.mxu0 %v2008
    %2033 = vmatprep.subr.mxu0 0.0
    %2034 = vmatpush1.msra.mxu0 %v2009
    %2035 = vmatprep.subr.mxu0 0.0
    %2036 = vmatpush1.msra.mxu0 %v2010
    %2037 = vmatprep.subr.mxu0 0.0
    %2038 = vmatpush1.msra.mxu0 %v2011
    %2039 = vmatprep.subr.mxu0 0.0
    %2040 = vmatpush1.msra.mxu0 %v2012
    %2041 = vmatprep.subr.mxu0 0.0
    %2042 = vmatpush1.msra.mxu0 %v2013
    %2043 = vmatprep.subr.mxu0 0.0
    %2044 = vmatpush1.msra.mxu0 %v2014
    %2045 = vmatprep.subr.mxu0 0.0
    %2046 = vmatpush1.msra.mxu0 %v2015
    %2047 = vmatprep.subr.mxu0 0.0
    %2048 = vmatpush1.msra.mxu0 %v2016
    %2049 = vmatprep.subr.mxu0 0.0
    %2050 = vmatpush1.msra.mxu0 %v2017
    %2051 = vmatprep.subr.mxu0 0.0
    %2052 = vmatpush1.msra.mxu0 %v2018
    %2053 = vmatprep.subr.mxu0 0.0
    %2054 = vmatpush1.msra.mxu0 %v2019
    %2055 = vmatprep.subr.mxu0 0.0
    %2056 = vmatpush1.msra.mxu0 %v2020
    %2057 = vmatprep.subr.mxu0 0.0
    %2058 = vmatpush1.msra.mxu0 %v2021
    %2059 = vmatprep.subr.mxu0 0.0
    %2060 = vmatpush1.msra.mxu0 %v2022
    %2061 = vmatprep.subr.mxu0 0.0
    %2062 = vmatpush1.msra.mxu0 %v2023
    %2063 = vmatprep.subr.mxu0 0.0
    %2064 = vmatpush1.msra.mxu0 0.0
    %2065 = vmatprep.subr.mxu0 0.0
    %2066 = vmatpush1.msra.mxu0 0.0
    %2067 = vmatprep.subr.mxu0 0.0
    %2068 = vmatpush1.msra.mxu0 0.0
    %2069 = vmatprep.subr.mxu0 0.0
    %2070 = vmatpush1.msra.mxu0 0.0
    %2071 = vmatprep.subr.mxu0 0.0
    %2072 = vmatpush1.msra.mxu0 0.0
    %2073 = vmatprep.subr.mxu0 0.0
    %2074 = vmatpush1.msra.mxu0 0.0
    %2075 = vmatprep.subr.mxu0 0.0
    %2076 = vmatpush1.msra.mxu0 0.0
    %2077 = vmatprep.subr.mxu0 0.0
    %2078 = vmatpush1.msra.mxu0 0.0
    %2079 = vmatprep.subr.mxu0 0.0
    %2080 = vmatpush1.msra.mxu0 0.0
    %2081 = vmatprep.subr.mxu0 0.0
    %2082 = vmatpush1.msra.mxu0 0.0
    %2083 = vmatprep.subr.mxu0 0.0
    %2084 = vmatpush1.msra.mxu0 0.0
    %2085 = vmatprep.subr.mxu0 0.0
    %2086 = vmatpush1.msra.mxu0 0.0
    %2087 = vmatprep.subr.mxu0 0.0
    %2088 = vmatpush1.msra.mxu0 0.0
    %2089 = vmatprep.subr.mxu0 0.0
    %2090 = vmatpush1.msra.mxu0 0.0
    %2091 = vmatprep.subr.mxu0 0.0
    %2092 = vmatpush1.msra.mxu0 0.0
    %2093 = vmatprep.subr.mxu0 0.0
    %2094 = vmatpush1.msra.mxu0 0.0
    %2095 = vmatprep.mubr.f32.mxu0 0.0
    %2096 = vmatmul.mubr.f32.gmra.mrb[0].mxu0 %v1900
    %v2097 = vpop.f32.mrb[0].mxu0
    %v2098 = vadd.f32 %v2029, %v2097
    %v2099 = vpop.f32.mrb[0].mxu0
    %2100 = vmatprep.mubr.f32.mxu0 0.0
    %2101 = vmatmul.mubr.f32.gmra.mrb[0].mxu0 %v1901
    %v2102 = vpop.f32.mrb[0].mxu0
    %v2103 = vadd.f32 %v2029, %v2102
    %v2104 = vpop.f32.mrb[0].mxu0
    %2105 = vmatprep.mubr.f32.mxu0 0.0
    %2106 = vmatmul.mubr.f32.gmra.mrb[0].mxu0 %v1902
    %v2107 = vpop.f32.mrb[0].mxu0
    %v2108 = vadd.f32 %v2029, %v2107
    %v2109 = vpop.f32.mrb[0].mxu0
    %2110 = vmatprep.mubr.f32.mxu0 0.0
    %2111 = vmatmul.mubr.f32.gmra.mrb[0].mxu0 %v1903
    %v2112 = vpop.f32.mrb[0].mxu0
    %v2113 = vadd.f32 %v2029, %v2112
    %v2114 = vpop.f32.mrb[0].mxu0
    %2115 = vdwg.mxu0
    %v2116 = vld [vmem:[#allocation32] sm:$0xff]
    %v2117 = vld [vmem:[#allocation32 + $0x8] sm:$0xff]
    %v2118 = vld [vmem:[#allocation32 + $0x10] sm:$0xff]
    %v2119 = vld [vmem:[#allocation32 + $0x18] sm:$0xff]
    %v2120 = vld [vmem:[#allocation32 + $0x20] sm:$0xff]
    %v2121 = vld [vmem:[#allocation32 + $0x28] sm:$0xff]
    %v2122 = vld [vmem:[#allocation32 + $0x30] sm:$0xff]
    %v2123 = vld [vmem:[#allocation32 + $0x38] sm:$0xff]
    %v2124 = vld [vmem:[#allocation32 + $0x40] sm:$0xff]
    %v2125 = vld [vmem:[#allocation32 + $0x48] sm:$0xff]
    %v2126 = vld [vmem:[#allocation32 + $0x50] sm:$0xff]
    %v2127 = vld [vmem:[#allocation32 + $0x58] sm:$0xff]
    %v2128 = vld [vmem:[#allocation32 + $0x60] sm:$0xff]
    %v2129 = vld [vmem:[#allocation32 + $0x68] sm:$0xff]
    %v2130 = vld [vmem:[#allocation32 + $0x70] sm:$0xff]
    %v2131 = vld [vmem:[#allocation32 + $0x78] sm:$0xff]
    %v2132 = vld [vmem:[#allocation37] sm:$0x1]
    %v2134 = vlaneseq
    %v2135 = vshrl.u32 %v2134, 7
    %v2136 = vsub.s32 0, %v2135
    %v2137 = vrot.slane %v2132, %v2136
    %2139 = vmatprep.subr.mxu0 0.0
    %2140 = vmatpush1.msra.mxu0 %v2116
    %2141 = vmatprep.subr.mxu0 0.0
    %2142 = vmatpush1.msra.mxu0 %v2117
    %2143 = vmatprep.subr.mxu0 0.0
    %2144 = vmatpush1.msra.mxu0 %v2118
    %2145 = vmatprep.subr.mxu0 0.0
    %2146 = vmatpush1.msra.mxu0 %v2119
    %2147 = vmatprep.subr.mxu0 0.0
    %2148 = vmatpush1.msra.mxu0 %v2120
    %2149 = vmatprep.subr.mxu0 0.0
    %2150 = vmatpush1.msra.mxu0 %v2121
    %2151 = vmatprep.subr.mxu0 0.0
    %2152 = vmatpush1.msra.mxu0 %v2122
    %2153 = vmatprep.subr.mxu0 0.0
    %2154 = vmatpush1.msra.mxu0 %v2123
    %2155 = vmatprep.subr.mxu0 0.0
    %2156 = vmatpush1.msra.mxu0 %v2124
    %2157 = vmatprep.subr.mxu0 0.0
    %2158 = vmatpush1.msra.mxu0 %v2125
    %2159 = vmatprep.subr.mxu0 0.0
    %2160 = vmatpush1.msra.mxu0 %v2126
    %2161 = vmatprep.subr.mxu0 0.0
    %2162 = vmatpush1.msra.mxu0 %v2127
    %2163 = vmatprep.subr.mxu0 0.0
    %2164 = vmatpush1.msra.mxu0 %v2128
    %2165 = vmatprep.subr.mxu0 0.0
    %2166 = vmatpush1.msra.mxu0 %v2129
    %2167 = vmatprep.subr.mxu0 0.0
    %2168 = vmatpush1.msra.mxu0 %v2130
    %2169 = vmatprep.subr.mxu0 0.0
    %2170 = vmatpush1.msra.mxu0 %v2131
    %2171 = vmatprep.subr.mxu0 0.0
    %2172 = vmatpush1.msra.mxu0 0.0
    %2173 = vmatprep.subr.mxu0 0.0
    %2174 = vmatpush1.msra.mxu0 0.0
    %2175 = vmatprep.subr.mxu0 0.0
    %2176 = vmatpush1.msra.mxu0 0.0
    %2177 = vmatprep.subr.mxu0 0.0
    %2178 = vmatpush1.msra.mxu0 0.0
    %2179 = vmatprep.subr.mxu0 0.0
    %2180 = vmatpush1.msra.mxu0 0.0
    %2181 = vmatprep.subr.mxu0 0.0
    %2182 = vmatpush1.msra.mxu0 0.0
    %2183 = vmatprep.subr.mxu0 0.0
    %2184 = vmatpush1.msra.mxu0 0.0
    %2185 = vmatprep.subr.mxu0 0.0
    %2186 = vmatpush1.msra.mxu0 0.0
    %2187 = vmatprep.subr.mxu0 0.0
    %2188 = vmatpush1.msra.mxu0 0.0
    %2189 = vmatprep.subr.mxu0 0.0
    %2190 = vmatpush1.msra.mxu0 0.0
    %2191 = vmatprep.subr.mxu0 0.0
    %2192 = vmatpush1.msra.mxu0 0.0
    %2193 = vmatprep.subr.mxu0 0.0
    %2194 = vmatpush1.msra.mxu0 0.0
    %2195 = vmatprep.subr.mxu0 0.0
    %2196 = vmatpush1.msra.mxu0 0.0
    %2197 = vmatprep.subr.mxu0 0.0
    %2198 = vmatpush1.msra.mxu0 0.0
    %2199 = vmatprep.subr.mxu0 0.0
    %2200 = vmatpush1.msra.mxu0 0.0
    %2201 = vmatprep.subr.mxu0 0.0
    %2202 = vmatpush1.msra.mxu0 0.0
    %2203 = vmatprep.mubr.f32.mxu0 0.0
    %2204 = vmatmul.mubr.f32.gmra.mrb[0].mxu0 %v1900
    %v2205 = vpop.f32.mrb[0].mxu0
    %v2206 = vadd.f32 %v2137, %v2205
    %v2207 = vpop.f32.mrb[0].mxu0
    %2208 = vmatprep.mubr.f32.mxu0 0.0
    %2209 = vmatmul.mubr.f32.gmra.mrb[0].mxu0 %v1901
    %v2210 = vpop.f32.mrb[0].mxu0
    %v2211 = vadd.f32 %v2137, %v2210
    %v2212 = vpop.f32.mrb[0].mxu0
    %2213 = vmatprep.mubr.f32.mxu0 0.0
    %2214 = vmatmul.mubr.f32.gmra.mrb[0].mxu0 %v1902
    %v2215 = vpop.f32.mrb[0].mxu0
    %v2216 = vadd.f32 %v2137, %v2215
    %v2217 = vpop.f32.mrb[0].mxu0
    %2218 = vmatprep.mubr.f32.mxu0 0.0
    %2219 = vmatmul.mubr.f32.gmra.mrb[0].mxu0 %v1903
    %v2220 = vpop.f32.mrb[0].mxu0
    %v2221 = vadd.f32 %v2137, %v2220
    %v2222 = vpop.f32.mrb[0].mxu0
    %2223 = vdwg.mxu0
    %v2224 = vld [vmem:[#allocation38] sm:$0xff]
    %v2225 = vld [vmem:[#allocation38 + $0x8] sm:$0xff]
    %v2226 = vld [vmem:[#allocation38 + $0x10] sm:$0xff]
    %v2227 = vld [vmem:[#allocation38 + $0x18] sm:$0xff]
    %v2228 = vld [vmem:[#allocation38 + $0x20] sm:$0xff]
    %v2229 = vld [vmem:[#allocation38 + $0x28] sm:$0xff]
    %v2230 = vld [vmem:[#allocation38 + $0x30] sm:$0xff]
    %v2231 = vld [vmem:[#allocation38 + $0x38] sm:$0xff]
    %v2232 = vld [vmem:[#allocation38 + $0x40] sm:$0xff]
    %v2233 = vld [vmem:[#allocation38 + $0x48] sm:$0xff]
    %v2234 = vld [vmem:[#allocation38 + $0x50] sm:$0xff]
    %v2235 = vld [vmem:[#allocation38 + $0x58] sm:$0xff]
    %v2236 = vld [vmem:[#allocation38 + $0x60] sm:$0xff]
    %v2237 = vld [vmem:[#allocation38 + $0x68] sm:$0xff]
    %v2238 = vld [vmem:[#allocation38 + $0x70] sm:$0xff]
    %v2239 = vld [vmem:[#allocation38 + $0x78] sm:$0xff]
    %v2240 = vmul.f32 %v2000, 0.17677669
    %v2241 = vmul.f32 %v2005, 0.17677669
    %vm2242 = vcmask 261120
    %v2244 = vsel %vm2242, %v2240, 0
    %v2247 = vsel %vm2242, %v2098, 0
    %v2250 = vsel %vm2242, %v2103, 0
    %2252 = vmatprep.subr.mxu0 0.0
    %2253 = vmatpush1.xpose.msra.mxu0 %v2247
    %2254 = vmatprep.subr.mxu0 0.0
    %2255 = vmatpush1.xpose.msra.mxu0 %v2250
    %2256 = vmatprep.subr.mxu0 0.0
    %2257 = vmatpush1.xpose.msra.mxu0 0.0
    %2258 = vmatprep.subr.mxu0 0.0
    %2259 = vmatpush1.xpose.msra.mxu0 0.0
    %2260 = vmatprep.subr.mxu0 0.0
    %2261 = vmatpush1.xpose.msra.mxu0 0.0
    %2262 = vmatprep.subr.mxu0 0.0
    %2263 = vmatpush1.xpose.msra.mxu0 0.0
    %2264 = vmatprep.subr.mxu0 0.0
    %2265 = vmatpush1.xpose.msra.mxu0 0.0
    %2266 = vmatprep.subr.mxu0 0.0
    %2267 = vmatpush1.xpose.msra.mxu0 0.0
    %2268 = vmatprep.subr.mxu0 0.0
    %2269 = vmatpush1.xpose.msra.mxu0 0.0
    %2270 = vmatprep.subr.mxu0 0.0
    %2271 = vmatpush1.xpose.msra.mxu0 0.0
    %2272 = vmatprep.subr.mxu0 0.0
    %2273 = vmatpush1.xpose.msra.mxu0 0.0
    %2274 = vmatprep.subr.mxu0 0.0
    %2275 = vmatpush1.xpose.msra.mxu0 0.0
    %2276 = vmatprep.subr.mxu0 0.0
    %2277 = vmatpush1.xpose.msra.mxu0 0.0
    %2278 = vmatprep.subr.mxu0 0.0
    %2279 = vmatpush1.xpose.msra.mxu0 0.0
    %2280 = vmatprep.subr.mxu0 0.0
    %2281 = vmatpush1.xpose.msra.mxu0 0.0
    %2282 = vmatprep.subr.mxu0 0.0
    %2283 = vmatpush1.xpose.msra.mxu0 0.0
    %2284 = vmatprep.subr.mxu0 0.0
    %2285 = vmatpush1.xpose.msra.mxu0 0.0
    %2286 = vmatprep.subr.mxu0 0.0
    %2287 = vmatpush1.xpose.msra.mxu0 0.0
    %2288 = vmatprep.subr.mxu0 0.0
    %2289 = vmatpush1.xpose.msra.mxu0 0.0
    %2290 = vmatprep.subr.mxu0 0.0
    %2291 = vmatpush1.xpose.msra.mxu0 0.0
    %2292 = vmatprep.subr.mxu0 0.0
    %2293 = vmatpush1.xpose.msra.mxu0 0.0
    %2294 = vmatprep.subr.mxu0 0.0
    %2295 = vmatpush1.xpose.msra.mxu0 0.0
    %2296 = vmatprep.subr.mxu0 0.0
    %2297 = vmatpush1.xpose.msra.mxu0 0.0
    %2298 = vmatprep.subr.mxu0 0.0
    %2299 = vmatpush1.xpose.msra.mxu0 0.0
    %2300 = vmatprep.subr.mxu0 0.0
    %2301 = vmatpush1.xpose.msra.mxu0 0.0
    %2302 = vmatprep.subr.mxu0 0.0
    %2303 = vmatpush1.xpose.msra.mxu0 0.0
    %2304 = vmatprep.subr.mxu0 0.0
    %2305 = vmatpush1.xpose.msra.mxu0 0.0
    %2306 = vmatprep.subr.mxu0 0.0
    %2307 = vmatpush1.xpose.msra.mxu0 0.0
    %2308 = vmatprep.subr.mxu0 0.0
    %2309 = vmatpush1.xpose.msra.mxu0 0.0
    %2310 = vmatprep.subr.mxu0 0.0
    %2311 = vmatpush1.xpose.msra.mxu0 0.0
    %2312 = vmatprep.subr.mxu0 0.0
    %2313 = vmatpush1.xpose.msra.mxu0 0.0
    %2314 = vmatprep.subr.mxu0 0.0
    %2315 = vmatpush1.xpose.msra.mxu0 0.0
    %2316 = vmatprep.mubr.f32.mxu0 0.0
    %2317 = vmatmul.mubr.f32.gmra.mrb[0].mxu0 %v2244
    %v2318 = vpop.f32.mrb[0].mxu0
    %v2319 = vadd.f32 0.0, %v2318
    %v2320 = vpop.f32.mrb[0].mxu0
    %2321 = vdwg.mxu0
    %v2323 = vsel %vm2242, %v2241, 0
    %v2326 = vsel %vm2242, %v2108, 0
    %v2329 = vsel %vm2242, %v2113, 0
    %2331 = vmatprep.subr.mxu0 0.0
    %2332 = vmatpush1.xpose.msra.mxu0 %v2326
    %2333 = vmatprep.subr.mxu0 0.0
    %2334 = vmatpush1.xpose.msra.mxu0 %v2329
    %2335 = vmatprep.subr.mxu0 0.0
    %2336 = vmatpush1.xpose.msra.mxu0 0.0
    %2337 = vmatprep.subr.mxu0 0.0
    %2338 = vmatpush1.xpose.msra.mxu0 0.0
    %2339 = vmatprep.subr.mxu0 0.0
    %2340 = vmatpush1.xpose.msra.mxu0 0.0
    %2341 = vmatprep.subr.mxu0 0.0
    %2342 = vmatpush1.xpose.msra.mxu0 0.0
    %2343 = vmatprep.subr.mxu0 0.0
    %2344 = vmatpush1.xpose.msra.mxu0 0.0
    %2345 = vmatprep.subr.mxu0 0.0
    %2346 = vmatpush1.xpose.msra.mxu0 0.0
    %2347 = vmatprep.subr.mxu0 0.0
    %2348 = vmatpush1.xpose.msra.mxu0 0.0
    %2349 = vmatprep.subr.mxu0 0.0
    %2350 = vmatpush1.xpose.msra.mxu0 0.0
    %2351 = vmatprep.subr.mxu0 0.0
    %2352 = vmatpush1.xpose.msra.mxu0 0.0
    %2353 = vmatprep.subr.mxu0 0.0
    %2354 = vmatpush1.xpose.msra.mxu0 0.0
    %2355 = vmatprep.subr.mxu0 0.0
    %2356 = vmatpush1.xpose.msra.mxu0 0.0
    %2357 = vmatprep.subr.mxu0 0.0
    %2358 = vmatpush1.xpose.msra.mxu0 0.0
    %2359 = vmatprep.subr.mxu0 0.0
    %2360 = vmatpush1.xpose.msra.mxu0 0.0
    %2361 = vmatprep.subr.mxu0 0.0
    %2362 = vmatpush1.xpose.msra.mxu0 0.0
    %2363 = vmatprep.subr.mxu0 0.0
    %2364 = vmatpush1.xpose.msra.mxu0 0.0
    %2365 = vmatprep.subr.mxu0 0.0
    %2366 = vmatpush1.xpose.msra.mxu0 0.0
    %2367 = vmatprep.subr.mxu0 0.0
    %2368 = vmatpush1.xpose.msra.mxu0 0.0
    %2369 = vmatprep.subr.mxu0 0.0
    %2370 = vmatpush1.xpose.msra.mxu0 0.0
    %2371 = vmatprep.subr.mxu0 0.0
    %2372 = vmatpush1.xpose.msra.mxu0 0.0
    %2373 = vmatprep.subr.mxu0 0.0
    %2374 = vmatpush1.xpose.msra.mxu0 0.0
    %2375 = vmatprep.subr.mxu0 0.0
    %2376 = vmatpush1.xpose.msra.mxu0 0.0
    %2377 = vmatprep.subr.mxu0 0.0
    %2378 = vmatpush1.xpose.msra.mxu0 0.0
    %2379 = vmatprep.subr.mxu0 0.0
    %2380 = vmatpush1.xpose.msra.mxu0 0.0
    %2381 = vmatprep.subr.mxu0 0.0
    %2382 = vmatpush1.xpose.msra.mxu0 0.0
    %2383 = vmatprep.subr.mxu0 0.0
    %2384 = vmatpush1.xpose.msra.mxu0 0.0
    %2385 = vmatprep.subr.mxu0 0.0
    %2386 = vmatpush1.xpose.msra.mxu0 0.0
    %2387 = vmatprep.subr.mxu0 0.0
    %2388 = vmatpush1.xpose.msra.mxu0 0.0
    %2389 = vmatprep.subr.mxu0 0.0
    %2390 = vmatpush1.xpose.msra.mxu0 0.0
    %2391 = vmatprep.subr.mxu0 0.0
    %2392 = vmatpush1.xpose.msra.mxu0 0.0
    %2393 = vmatprep.subr.mxu0 0.0
    %2394 = vmatpush1.xpose.msra.mxu0 0.0
    %2395 = vmatprep.mubr.f32.mxu0 0.0
    %2396 = vmatmul.mubr.f32.gmra.mrb[0].mxu0 %v2323
    %v2397 = vpop.f32.mrb[0].mxu0
    %v2398 = vadd.f32 0.0, %v2397
    %v2399 = vpop.f32.mrb[0].mxu0
    %2400 = vdwg.mxu0
    %vm2401 = vcmask 130048
    %v2402 = vsel %vm2401, %v2319, -inf
    %2403 = vmax.xlane.f32.xlu0 %v2402
    %v2404 = vpop.xlane.xlu0 %2403
    %v2405 = vsel %vm2401, %v2398, -inf
    %2406 = vmax.xlane.f32.xlu0 %v2405
    %v2407 = vpop.xlane.xlu0 %2406
    %v2408 = vsub.f32 %v2319, %v2404
    %v2409 = vsub.f32 %v2398, %v2407
    %v2410 = vmul.f32 %v2408, 1.442695
    %v2411 = vpow.pop %v2410
    %v2412 = vmul.f32 %v2409, 1.442695
    %v2413 = vpow.pop %v2412
    %v2414 = vsel %vm2401, %v2411, 0.0
    %2415 = vadd.xlane.f32.xlu0 %v2414
    %v2416 = vpop.xlane.xlu0 %2415
    %v2417 = vsel %vm2401, %v2413, 0.0
    %2418 = vadd.xlane.f32.xlu0 %v2417
    %v2419 = vpop.xlane.xlu0 %2418
    %v2420 = vrcp.pop %v2416
    %v2421 = vrcp.pop %v2419
    %v2422 = vmul.f32 %v2411, %v2420
    %v2423 = vmul.f32 %v2413, %v2421
    %v2425 = vsel %vm2401, %v2422, 0
    %2427 = vmatprep.subr.mxu0 0.0
    %2428 = vmatpush1.msra.mxu0 %v2206
    %2429 = vmatprep.subr.mxu0 0.0
    %2430 = vmatpush1.msra.mxu0 %v2211
    %2431 = vmatprep.subr.mxu0 0.0
    %2432 = vmatpush1.msra.mxu0 0.0
    %2433 = vmatprep.subr.mxu0 0.0
    %2434 = vmatpush1.msra.mxu0 0.0
    %2435 = vmatprep.subr.mxu0 0.0
    %2436 = vmatpush1.msra.mxu0 0.0
    %2437 = vmatprep.subr.mxu0 0.0
    %2438 = vmatpush1.msra.mxu0 0.0
    %2439 = vmatprep.subr.mxu0 0.0
    %2440 = vmatpush1.msra.mxu0 0.0
    %2441 = vmatprep.subr.mxu0 0.0
    %2442 = vmatpush1.msra.mxu0 0.0
    %2443 = vmatprep.subr.mxu0 0.0
    %2444 = vmatpush1.msra.mxu0 0.0
    %2445 = vmatprep.subr.mxu0 0.0
    %2446 = vmatpush1.msra.mxu0 0.0
    %2447 = vmatprep.subr.mxu0 0.0
    %2448 = vmatpush1.msra.mxu0 0.0
    %2449 = vmatprep.subr.mxu0 0.0
    %2450 = vmatpush1.msra.mxu0 0.0
    %2451 = vmatprep.subr.mxu0 0.0
    %2452 = vmatpush1.msra.mxu0 0.0
    %2453 = vmatprep.subr.mxu0 0.0
    %2454 = vmatpush1.msra.mxu0 0.0
    %2455 = vmatprep.subr.mxu0 0.0
    %2456 = vmatpush1.msra.mxu0 0.0
    %2457 = vmatprep.subr.mxu0 0.0
    %2458 = vmatpush1.msra.mxu0 0.0
    %2459 = vmatprep.subr.mxu0 0.0
    %2460 = vmatpush1.msra.mxu0 0.0
    %2461 = vmatprep.subr.mxu0 0.0
    %2462 = vmatpush1.msra.mxu0 0.0
    %2463 = vmatprep.subr.mxu0 0.0
    %2464 = vmatpush1.msra.mxu0 0.0
    %2465 = vmatprep.subr.mxu0 0.0
    %2466 = vmatpush1.msra.mxu0 0.0
    %2467 = vmatprep.subr.mxu0 0.0
    %2468 = vmatpush1.msra.mxu0 0.0
    %2469 = vmatprep.subr.mxu0 0.0
    %2470 = vmatpush1.msra.mxu0 0.0
    %2471 = vmatprep.subr.mxu0 0.0
    %2472 = vmatpush1.msra.mxu0 0.0
    %2473 = vmatprep.subr.mxu0 0.0
    %2474 = vmatpush1.msra.mxu0 0.0
    %2475 = vmatprep.subr.mxu0 0.0
    %2476 = vmatpush1.msra.mxu0 0.0
    %2477 = vmatprep.subr.mxu0 0.0
    %2478 = vmatpush1.msra.mxu0 0.0
    %2479 = vmatprep.subr.mxu0 0.0
    %2480 = vmatpush1.msra.mxu0 0.0
    %2481 = vmatprep.subr.mxu0 0.0
    %2482 = vmatpush1.msra.mxu0 0.0
    %2483 = vmatprep.subr.mxu0 0.0
    %2484 = vmatpush1.msra.mxu0 0.0
    %2485 = vmatprep.subr.mxu0 0.0
    %2486 = vmatpush1.msra.mxu0 0.0
    %2487 = vmatprep.subr.mxu0 0.0
    %2488 = vmatpush1.msra.mxu0 0.0
    %2489 = vmatprep.subr.mxu0 0.0
    %2490 = vmatpush1.msra.mxu0 0.0
    %2491 = vmatprep.mubr.f32.mxu0 0.0
    %2492 = vmatmul.mubr.f32.gmra.mrb[0].mxu0 %v2425
    %v2493 = vpop.f32.mrb[0].mxu0
    %v2494 = vadd.f32 0.0, %v2493
    %v2495 = vpop.f32.mrb[0].mxu0
    %2496 = vdwg.mxu0
    %v2498 = vsel %vm2401, %v2423, 0
    %2500 = vmatprep.subr.mxu0 0.0
    %2501 = vmatpush1.msra.mxu0 %v2216
    %2502 = vmatprep.subr.mxu0 0.0
    %2503 = vmatpush1.msra.mxu0 %v2221
    %2504 = vmatprep.subr.mxu0 0.0
    %2505 = vmatpush1.msra.mxu0 0.0
    %2506 = vmatprep.subr.mxu0 0.0
    %2507 = vmatpush1.msra.mxu0 0.0
    %2508 = vmatprep.subr.mxu0 0.0
    %2509 = vmatpush1.msra.mxu0 0.0
    %2510 = vmatprep.subr.mxu0 0.0
    %2511 = vmatpush1.msra.mxu0 0.0
    %2512 = vmatprep.subr.mxu0 0.0
    %2513 = vmatpush1.msra.mxu0 0.0
    %2514 = vmatprep.subr.mxu0 0.0
    %2515 = vmatpush1.msra.mxu0 0.0
    %2516 = vmatprep.subr.mxu0 0.0
    %2517 = vmatpush1.msra.mxu0 0.0
    %2518 = vmatprep.subr.mxu0 0.0
    %2519 = vmatpush1.msra.mxu0 0.0
    %2520 = vmatprep.subr.mxu0 0.0
    %2521 = vmatpush1.msra.mxu0 0.0
    %2522 = vmatprep.subr.mxu0 0.0
    %2523 = vmatpush1.msra.mxu0 0.0
    %2524 = vmatprep.subr.mxu0 0.0
    %2525 = vmatpush1.msra.mxu0 0.0
    %2526 = vmatprep.subr.mxu0 0.0
    %2527 = vmatpush1.msra.mxu0 0.0
    %2528 = vmatprep.subr.mxu0 0.0
    %2529 = vmatpush1.msra.mxu0 0.0
    %2530 = vmatprep.subr.mxu0 0.0
    %2531 = vmatpush1.msra.mxu0 0.0
    %2532 = vmatprep.subr.mxu0 0.0
    %2533 = vmatpush1.msra.mxu0 0.0
    %2534 = vmatprep.subr.mxu0 0.0
    %2535 = vmatpush1.msra.mxu0 0.0
    %2536 = vmatprep.subr.mxu0 0.0
    %2537 = vmatpush1.msra.mxu0 0.0
    %2538 = vmatprep.subr.mxu0 0.0
    %2539 = vmatpush1.msra.mxu0 0.0
    %2540 = vmatprep.subr.mxu0 0.0
    %2541 = vmatpush1.msra.mxu0 0.0
    %2542 = vmatprep.subr.mxu0 0.0
    %2543 = vmatpush1.msra.mxu0 0.0
    %2544 = vmatprep.subr.mxu0 0.0
    %2545 = vmatpush1.msra.mxu0 0.0
    %2546 = vmatprep.subr.mxu0 0.0
    %2547 = vmatpush1.msra.mxu0 0.0
    %2548 = vmatprep.subr.mxu0 0.0
    %2549 = vmatpush1.msra.mxu0 0.0
    %2550 = vmatprep.subr.mxu0 0.0
    %2551 = vmatpush1.msra.mxu0 0.0
    %2552 = vmatprep.subr.mxu0 0.0
    %2553 = vmatpush1.msra.mxu0 0.0
    %2554 = vmatprep.subr.mxu0 0.0
    %2555 = vmatpush1.msra.mxu0 0.0
    %2556 = vmatprep.subr.mxu0 0.0
    %2557 = vmatpush1.msra.mxu0 0.0
    %2558 = vmatprep.subr.mxu0 0.0
    %2559 = vmatpush1.msra.mxu0 0.0
    %2560 = vmatprep.subr.mxu0 0.0
    %2561 = vmatpush1.msra.mxu0 0.0
    %2562 = vmatprep.subr.mxu0 0.0
    %2563 = vmatpush1.msra.mxu0 0.0
    %2564 = vmatprep.mubr.f32.mxu0 0.0
    %2565 = vmatmul.mubr.f32.gmra.mrb[0].mxu0 %v2498
    %v2566 = vpop.f32.mrb[0].mxu0
    %v2567 = vadd.f32 0.0, %v2566
    %v2568 = vpop.f32.mrb[0].mxu0
    %2569 = vdwg.mxu0
    %2570 = vrot.lane.b32.xlu0 %v2240, 96
    %v2571 = vpop.permute.xlu0 %2570
    %2572 = vrot.lane.b32.xlu0 %v2098, 96
    %v2573 = vpop.permute.xlu0 %2572
    %2574 = vrot.lane.b32.xlu0 %v2103, 96
    %v2575 = vpop.permute.xlu0 %2574
    %v2576 = vsel %vm2242, %v2571, 0
    %v2578 = vsel %vm2242, %v2573, 0
    %v2580 = vsel %vm2242, %v2575, 0
    %2582 = vmatprep.subr.mxu0 0.0
    %2583 = vmatpush1.xpose.msra.mxu0 %v2578
    %2584 = vmatprep.subr.mxu0 0.0
    %2585 = vmatpush1.xpose.msra.mxu0 %v2580
    %2586 = vmatprep.subr.mxu0 0.0
    %2587 = vmatpush1.xpose.msra.mxu0 0.0
    %2588 = vmatprep.subr.mxu0 0.0
    %2589 = vmatpush1.xpose.msra.mxu0 0.0
    %2590 = vmatprep.subr.mxu0 0.0
    %2591 = vmatpush1.xpose.msra.mxu0 0.0
    %2592 = vmatprep.subr.mxu0 0.0
    %2593 = vmatpush1.xpose.msra.mxu0 0.0
    %2594 = vmatprep.subr.mxu0 0.0
    %2595 = vmatpush1.xpose.msra.mxu0 0.0
    %2596 = vmatprep.subr.mxu0 0.0
    %2597 = vmatpush1.xpose.msra.mxu0 0.0
    %2598 = vmatprep.subr.mxu0 0.0
    %2599 = vmatpush1.xpose.msra.mxu0 0.0
    %2600 = vmatprep.subr.mxu0 0.0
    %2601 = vmatpush1.xpose.msra.mxu0 0.0
    %2602 = vmatprep.subr.mxu0 0.0
    %2603 = vmatpush1.xpose.msra.mxu0 0.0
    %2604 = vmatprep.subr.mxu0 0.0
    %2605 = vmatpush1.xpose.msra.mxu0 0.0
    %2606 = vmatprep.subr.mxu0 0.0
    %2607 = vmatpush1.xpose.msra.mxu0 0.0
    %2608 = vmatprep.subr.mxu0 0.0
    %2609 = vmatpush1.xpose.msra.mxu0 0.0
    %2610 = vmatprep.subr.mxu0 0.0
    %2611 = vmatpush1.xpose.msra.mxu0 0.0
    %2612 = vmatprep.subr.mxu0 0.0
    %2613 = vmatpush1.xpose.msra.mxu0 0.0
    %2614 = vmatprep.subr.mxu0 0.0
    %2615 = vmatpush1.xpose.msra.mxu0 0.0
    %2616 = vmatprep.subr.mxu0 0.0
    %2617 = vmatpush1.xpose.msra.mxu0 0.0
    %2618 = vmatprep.subr.mxu0 0.0
    %2619 = vmatpush1.xpose.msra.mxu0 0.0
    %2620 = vmatprep.subr.mxu0 0.0
    %2621 = vmatpush1.xpose.msra.mxu0 0.0
    %2622 = vmatprep.subr.mxu0 0.0
    %2623 = vmatpush1.xpose.msra.mxu0 0.0
    %2624 = vmatprep.subr.mxu0 0.0
    %2625 = vmatpush1.xpose.msra.mxu0 0.0
    %2626 = vmatprep.subr.mxu0 0.0
    %2627 = vmatpush1.xpose.msra.mxu0 0.0
    %2628 = vmatprep.subr.mxu0 0.0
    %2629 = vmatpush1.xpose.msra.mxu0 0.0
    %2630 = vmatprep.subr.mxu0 0.0
    %2631 = vmatpush1.xpose.msra.mxu0 0.0
    %2632 = vmatprep.subr.mxu0 0.0
    %2633 = vmatpush1.xpose.msra.mxu0 0.0
    %2634 = vmatprep.subr.mxu0 0.0
    %2635 = vmatpush1.xpose.msra.mxu0 0.0
    %2636 = vmatprep.subr.mxu0 0.0
    %2637 = vmatpush1.xpose.msra.mxu0 0.0
    %2638 = vmatprep.subr.mxu0 0.0
    %2639 = vmatpush1.xpose.msra.mxu0 0.0
    %2640 = vmatprep.subr.mxu0 0.0
    %2641 = vmatpush1.xpose.msra.mxu0 0.0
    %2642 = vmatprep.subr.mxu0 0.0
    %2643 = vmatpush1.xpose.msra.mxu0 0.0
    %2644 = vmatprep.subr.mxu0 0.0
    %2645 = vmatpush1.xpose.msra.mxu0 0.0
    %2646 = vmatprep.mubr.f32.mxu0 0.0
    %2647 = vmatmul.mubr.f32.gmra.mrb[0].mxu0 %v2576
    %v2648 = vpop.f32.mrb[0].mxu0
    %v2649 = vadd.f32 0.0, %v2648
    %v2650 = vpop.f32.mrb[0].mxu0
    %2651 = vdwg.mxu0
    %2652 = vrot.lane.b32.xlu0 %v2241, 96
    %v2653 = vpop.permute.xlu0 %2652
    %2654 = vrot.lane.b32.xlu0 %v2108, 96
    %v2655 = vpop.permute.xlu0 %2654
    %2656 = vrot.lane.b32.xlu0 %v2113, 96
    %v2657 = vpop.permute.xlu0 %2656
    %v2658 = vsel %vm2242, %v2653, 0
    %v2660 = vsel %vm2242, %v2655, 0
    %v2662 = vsel %vm2242, %v2657, 0
    %2664 = vmatprep.subr.mxu0 0.0
    %2665 = vmatpush1.xpose.msra.mxu0 %v2660
    %2666 = vmatprep.subr.mxu0 0.0
    %2667 = vmatpush1.xpose.msra.mxu0 %v2662
    %2668 = vmatprep.subr.mxu0 0.0
    %2669 = vmatpush1.xpose.msra.mxu0 0.0
    %2670 = vmatprep.subr.mxu0 0.0
    %2671 = vmatpush1.xpose.msra.mxu0 0.0
    %2672 = vmatprep.subr.mxu0 0.0
    %2673 = vmatpush1.xpose.msra.mxu0 0.0
    %2674 = vmatprep.subr.mxu0 0.0
    %2675 = vmatpush1.xpose.msra.mxu0 0.0
    %2676 = vmatprep.subr.mxu0 0.0
    %2677 = vmatpush1.xpose.msra.mxu0 0.0
    %2678 = vmatprep.subr.mxu0 0.0
    %2679 = vmatpush1.xpose.msra.mxu0 0.0
    %2680 = vmatprep.subr.mxu0 0.0
    %2681 = vmatpush1.xpose.msra.mxu0 0.0
    %2682 = vmatprep.subr.mxu0 0.0
    %2683 = vmatpush1.xpose.msra.mxu0 0.0
    %2684 = vmatprep.subr.mxu0 0.0
    %2685 = vmatpush1.xpose.msra.mxu0 0.0
    %2686 = vmatprep.subr.mxu0 0.0
    %2687 = vmatpush1.xpose.msra.mxu0 0.0
    %2688 = vmatprep.subr.mxu0 0.0
    %2689 = vmatpush1.xpose.msra.mxu0 0.0
    %2690 = vmatprep.subr.mxu0 0.0
    %2691 = vmatpush1.xpose.msra.mxu0 0.0
    %2692 = vmatprep.subr.mxu0 0.0
    %2693 = vmatpush1.xpose.msra.mxu0 0.0
    %2694 = vmatprep.subr.mxu0 0.0
    %2695 = vmatpush1.xpose.msra.mxu0 0.0
    %2696 = vmatprep.subr.mxu0 0.0
    %2697 = vmatpush1.xpose.msra.mxu0 0.0
    %2698 = vmatprep.subr.mxu0 0.0
    %2699 = vmatpush1.xpose.msra.mxu0 0.0
    %2700 = vmatprep.subr.mxu0 0.0
    %2701 = vmatpush1.xpose.msra.mxu0 0.0
    %2702 = vmatprep.subr.mxu0 0.0
    %2703 = vmatpush1.xpose.msra.mxu0 0.0
    %2704 = vmatprep.subr.mxu0 0.0
    %2705 = vmatpush1.xpose.msra.mxu0 0.0
    %2706 = vmatprep.subr.mxu0 0.0
    %2707 = vmatpush1.xpose.msra.mxu0 0.0
    %2708 = vmatprep.subr.mxu0 0.0
    %2709 = vmatpush1.xpose.msra.mxu0 0.0
    %2710 = vmatprep.subr.mxu0 0.0
    %2711 = vmatpush1.xpose.msra.mxu0 0.0
    %2712 = vmatprep.subr.mxu0 0.0
    %2713 = vmatpush1.xpose.msra.mxu0 0.0
    %2714 = vmatprep.subr.mxu0 0.0
    %2715 = vmatpush1.xpose.msra.mxu0 0.0
    %2716 = vmatprep.subr.mxu0 0.0
    %2717 = vmatpush1.xpose.msra.mxu0 0.0
    %2718 = vmatprep.subr.mxu0 0.0
    %2719 = vmatpush1.xpose.msra.mxu0 0.0
    %2720 = vmatprep.subr.mxu0 0.0
    %2721 = vmatpush1.xpose.msra.mxu0 0.0
    %2722 = vmatprep.subr.mxu0 0.0
    %2723 = vmatpush1.xpose.msra.mxu0 0.0
    %2724 = vmatprep.subr.mxu0 0.0
    %2725 = vmatpush1.xpose.msra.mxu0 0.0
    %2726 = vmatprep.subr.mxu0 0.0
    %2727 = vmatpush1.xpose.msra.mxu0 0.0
    %2728 = vmatprep.mubr.f32.mxu0 0.0
    %2729 = vmatmul.mubr.f32.gmra.mrb[0].mxu0 %v2658
    %v2730 = vpop.f32.mrb[0].mxu0
    %v2731 = vadd.f32 0.0, %v2730
    %v2732 = vpop.f32.mrb[0].mxu0
    %2733 = vdwg.mxu0
    %v2734 = vsel %vm2401, %v2649, -inf
    %2735 = vmax.xlane.f32.xlu0 %v2734
    %v2736 = vpop.xlane.xlu0 %2735
    %v2737 = vsel %vm2401, %v2731, -inf
    %2738 = vmax.xlane.f32.xlu0 %v2737
    %v2739 = vpop.xlane.xlu0 %2738
    %v2740 = vsub.f32 %v2649, %v2736
    %v2741 = vsub.f32 %v2731, %v2739
    %v2742 = vmul.f32 %v2740, 1.442695
    %v2743 = vpow.pop %v2742
    %v2744 = vmul.f32 %v2741, 1.442695
    %v2745 = vpow.pop %v2744
    %v2746 = vsel %vm2401, %v2743, 0.0
    %2747 = vadd.xlane.f32.xlu0 %v2746
    %v2748 = vpop.xlane.xlu0 %2747
    %v2749 = vsel %vm2401, %v2745, 0.0
    %2750 = vadd.xlane.f32.xlu0 %v2749
    %v2751 = vpop.xlane.xlu0 %2750
    %v2752 = vrcp.pop %v2748
    %v2753 = vrcp.pop %v2751
    %v2754 = vmul.f32 %v2743, %v2752
    %v2755 = vmul.f32 %v2745, %v2753
    %2758 = vrot.lane.b32.xlu0 %v2206, 96
    %v2759 = vpop.permute.xlu0 %2758
    %2760 = vrot.lane.b32.xlu0 %v2211, 96
    %v2761 = vpop.permute.xlu0 %2760
    %v2765 = vsel %vm2401, %v2754, 0
    %2767 = vmatprep.subr.mxu0 0.0
    %2768 = vmatpush1.msra.mxu0 %v2759
    %2769 = vmatprep.subr.mxu0 0.0
    %2770 = vmatpush1.msra.mxu0 %v2761
    %2771 = vmatprep.subr.mxu0 0.0
    %2772 = vmatpush1.msra.mxu0 0.0
    %2773 = vmatprep.subr.mxu0 0.0
    %2774 = vmatpush1.msra.mxu0 0.0
    %2775 = vmatprep.subr.mxu0 0.0
    %2776 = vmatpush1.msra.mxu0 0.0
    %2777 = vmatprep.subr.mxu0 0.0
    %2778 = vmatpush1.msra.mxu0 0.0
    %2779 = vmatprep.subr.mxu0 0.0
    %2780 = vmatpush1.msra.mxu0 0.0
    %2781 = vmatprep.subr.mxu0 0.0
    %2782 = vmatpush1.msra.mxu0 0.0
    %2783 = vmatprep.subr.mxu0 0.0
    %2784 = vmatpush1.msra.mxu0 0.0
    %2785 = vmatprep.subr.mxu0 0.0
    %2786 = vmatpush1.msra.mxu0 0.0
    %2787 = vmatprep.subr.mxu0 0.0
    %2788 = vmatpush1.msra.mxu0 0.0
    %2789 = vmatprep.subr.mxu0 0.0
    %2790 = vmatpush1.msra.mxu0 0.0
    %2791 = vmatprep.subr.mxu0 0.0
    %2792 = vmatpush1.msra.mxu0 0.0
    %2793 = vmatprep.subr.mxu0 0.0
    %2794 = vmatpush1.msra.mxu0 0.0
    %2795 = vmatprep.subr.mxu0 0.0
    %2796 = vmatpush1.msra.mxu0 0.0
    %2797 = vmatprep.subr.mxu0 0.0
    %2798 = vmatpush1.msra.mxu0 0.0
    %2799 = vmatprep.subr.mxu0 0.0
    %2800 = vmatpush1.msra.mxu0 0.0
    %2801 = vmatprep.subr.mxu0 0.0
    %2802 = vmatpush1.msra.mxu0 0.0
    %2803 = vmatprep.subr.mxu0 0.0
    %2804 = vmatpush1.msra.mxu0 0.0
    %2805 = vmatprep.subr.mxu0 0.0
    %2806 = vmatpush1.msra.mxu0 0.0
    %2807 = vmatprep.subr.mxu0 0.0
    %2808 = vmatpush1.msra.mxu0 0.0
    %2809 = vmatprep.subr.mxu0 0.0
    %2810 = vmatpush1.msra.mxu0 0.0
    %2811 = vmatprep.subr.mxu0 0.0
    %2812 = vmatpush1.msra.mxu0 0.0
    %2813 = vmatprep.subr.mxu0 0.0
    %2814 = vmatpush1.msra.mxu0 0.0
    %2815 = vmatprep.subr.mxu0 0.0
    %2816 = vmatpush1.msra.mxu0 0.0
    %2817 = vmatprep.subr.mxu0 0.0
    %2818 = vmatpush1.msra.mxu0 0.0
    %2819 = vmatprep.subr.mxu0 0.0
    %2820 = vmatpush1.msra.mxu0 0.0
    %2821 = vmatprep.subr.mxu0 0.0
    %2822 = vmatpush1.msra.mxu0 0.0
    %2823 = vmatprep.subr.mxu0 0.0
    %2824 = vmatpush1.msra.mxu0 0.0
    %2825 = vmatprep.subr.mxu0 0.0
    %2826 = vmatpush1.msra.mxu0 0.0
    %2827 = vmatprep.subr.mxu0 0.0
    %2828 = vmatpush1.msra.mxu0 0.0
    %2829 = vmatprep.subr.mxu0 0.0
    %2830 = vmatpush1.msra.mxu0 0.0
    %2831 = vmatprep.mubr.f32.mxu0 0.0
    %2832 = vmatmul.mubr.f32.gmra.mrb[0].mxu0 %v2765
    %v2833 = vpop.f32.mrb[0].mxu0
    %v2834 = vadd.f32 0.0, %v2833
    %v2835 = vpop.f32.mrb[0].mxu0
    %2836 = vdwg.mxu0
    %2839 = vrot.lane.b32.xlu0 %v2216, 96
    %v2840 = vpop.permute.xlu0 %2839
    %2841 = vrot.lane.b32.xlu0 %v2221, 96
    %v2842 = vpop.permute.xlu0 %2841
    %v2846 = vsel %vm2401, %v2755, 0
    %2848 = vmatprep.subr.mxu0 0.0
    %2849 = vmatpush1.msra.mxu0 %v2840
    %2850 = vmatprep.subr.mxu0 0.0
    %2851 = vmatpush1.msra.mxu0 %v2842
    %2852 = vmatprep.subr.mxu0 0.0
    %2853 = vmatpush1.msra.mxu0 0.0
    %2854 = vmatprep.subr.mxu0 0.0
    %2855 = vmatpush1.msra.mxu0 0.0
    %2856 = vmatprep.subr.mxu0 0.0
    %2857 = vmatpush1.msra.mxu0 0.0
    %2858 = vmatprep.subr.mxu0 0.0
    %2859 = vmatpush1.msra.mxu0 0.0
    %2860 = vmatprep.subr.mxu0 0.0
    %2861 = vmatpush1.msra.mxu0 0.0
    %2862 = vmatprep.subr.mxu0 0.0
    %2863 = vmatpush1.msra.mxu0 0.0
    %2864 = vmatprep.subr.mxu0 0.0
    %2865 = vmatpush1.msra.mxu0 0.0
    %2866 = vmatprep.subr.mxu0 0.0
    %2867 = vmatpush1.msra.mxu0 0.0
    %2868 = vmatprep.subr.mxu0 0.0
    %2869 = vmatpush1.msra.mxu0 0.0
    %2870 = vmatprep.subr.mxu0 0.0
    %2871 = vmatpush1.msra.mxu0 0.0
    %2872 = vmatprep.subr.mxu0 0.0
    %2873 = vmatpush1.msra.mxu0 0.0
    %2874 = vmatprep.subr.mxu0 0.0
    %2875 = vmatpush1.msra.mxu0 0.0
    %2876 = vmatprep.subr.mxu0 0.0
    %2877 = vmatpush1.msra.mxu0 0.0
    %2878 = vmatprep.subr.mxu0 0.0
    %2879 = vmatpush1.msra.mxu0 0.0
    %2880 = vmatprep.subr.mxu0 0.0
    %2881 = vmatpush1.msra.mxu0 0.0
    %2882 = vmatprep.subr.mxu0 0.0
    %2883 = vmatpush1.msra.mxu0 0.0
    %2884 = vmatprep.subr.mxu0 0.0
    %2885 = vmatpush1.msra.mxu0 0.0
    %2886 = vmatprep.subr.mxu0 0.0
    %2887 = vmatpush1.msra.mxu0 0.0
    %2888 = vmatprep.subr.mxu0 0.0
    %2889 = vmatpush1.msra.mxu0 0.0
    %2890 = vmatprep.subr.mxu0 0.0
    %2891 = vmatpush1.msra.mxu0 0.0
    %2892 = vmatprep.subr.mxu0 0.0
    %2893 = vmatpush1.msra.mxu0 0.0
    %2894 = vmatprep.subr.mxu0 0.0
    %2895 = vmatpush1.msra.mxu0 0.0
    %2896 = vmatprep.subr.mxu0 0.0
    %2897 = vmatpush1.msra.mxu0 0.0
    %2898 = vmatprep.subr.mxu0 0.0
    %2899 = vmatpush1.msra.mxu0 0.0
    %2900 = vmatprep.subr.mxu0 0.0
    %2901 = vmatpush1.msra.mxu0 0.0
    %2902 = vmatprep.subr.mxu0 0.0
    %2903 = vmatpush1.msra.mxu0 0.0
    %2904 = vmatprep.subr.mxu0 0.0
    %2905 = vmatpush1.msra.mxu0 0.0
    %2906 = vmatprep.subr.mxu0 0.0
    %2907 = vmatpush1.msra.mxu0 0.0
    %2908 = vmatprep.subr.mxu0 0.0
    %2909 = vmatpush1.msra.mxu0 0.0
    %2910 = vmatprep.subr.mxu0 0.0
    %2911 = vmatpush1.msra.mxu0 0.0
    %2912 = vmatprep.mubr.f32.mxu0 0.0
    %2913 = vmatmul.mubr.f32.gmra.mrb[0].mxu0 %v2846
    %v2914 = vpop.f32.mrb[0].mxu0
    %v2915 = vadd.f32 0.0, %v2914
    %v2916 = vpop.f32.mrb[0].mxu0
    %2917 = vdwg.mxu0
    %v2919 = vsel %vm2242, %v2834, 0
    %2921 = vmatprep.subr.mxu0 0.0
    %2922 = vmatpush1.msra.mxu0 %v2228
    %2923 = vmatprep.subr.mxu0 0.0
    %2924 = vmatpush1.msra.mxu0 %v2229
    %2925 = vmatprep.subr.mxu0 0.0
    %2926 = vmatpush1.msra.mxu0 %v2230
    %2927 = vmatprep.subr.mxu0 0.0
    %2928 = vmatpush1.msra.mxu0 %v2231
    %2929 = vmatprep.subr.mxu0 0.0
    %2930 = vmatpush1.msra.mxu0 0.0
    %2931 = vmatprep.subr.mxu0 0.0
    %2932 = vmatpush1.msra.mxu0 0.0
    %2933 = vmatprep.subr.mxu0 0.0
    %2934 = vmatpush1.msra.mxu0 0.0
    %2935 = vmatprep.subr.mxu0 0.0
    %2936 = vmatpush1.msra.mxu0 0.0
    %2937 = vmatprep.subr.mxu0 0.0
    %2938 = vmatpush1.msra.mxu0 0.0
    %2939 = vmatprep.subr.mxu0 0.0
    %2940 = vmatpush1.msra.mxu0 0.0
    %2941 = vmatprep.subr.mxu0 0.0
    %2942 = vmatpush1.msra.mxu0 0.0
    %2943 = vmatprep.subr.mxu0 0.0
    %2944 = vmatpush1.msra.mxu0 0.0
    %2945 = vmatprep.subr.mxu0 0.0
    %2946 = vmatpush1.msra.mxu0 0.0
    %2947 = vmatprep.subr.mxu0 0.0
    %2948 = vmatpush1.msra.mxu0 0.0
    %2949 = vmatprep.subr.mxu0 0.0
    %2950 = vmatpush1.msra.mxu0 0.0
    %2951 = vmatprep.subr.mxu0 0.0
    %2952 = vmatpush1.msra.mxu0 0.0
    %2953 = vmatprep.subr.mxu0 0.0
    %2954 = vmatpush1.msra.mxu0 0.0
    %2955 = vmatprep.subr.mxu0 0.0
    %2956 = vmatpush1.msra.mxu0 0.0
    %2957 = vmatprep.subr.mxu0 0.0
    %2958 = vmatpush1.msra.mxu0 0.0
    %2959 = vmatprep.subr.mxu0 0.0
    %2960 = vmatpush1.msra.mxu0 0.0
    %2961 = vmatprep.subr.mxu0 0.0
    %2962 = vmatpush1.msra.mxu0 0.0
    %2963 = vmatprep.subr.mxu0 0.0
    %2964 = vmatpush1.msra.mxu0 0.0
    %2965 = vmatprep.subr.mxu0 0.0
    %2966 = vmatpush1.msra.mxu0 0.0
    %2967 = vmatprep.subr.mxu0 0.0
    %2968 = vmatpush1.msra.mxu0 0.0
    %2969 = vmatprep.subr.mxu0 0.0
    %2970 = vmatpush1.msra.mxu0 0.0
    %2971 = vmatprep.subr.mxu0 0.0
    %2972 = vmatpush1.msra.mxu0 0.0
    %2973 = vmatprep.subr.mxu0 0.0
    %2974 = vmatpush1.msra.mxu0 0.0
    %2975 = vmatprep.subr.mxu0 0.0
    %2976 = vmatpush1.msra.mxu0 0.0
    %2977 = vmatprep.subr.mxu0 0.0
    %2978 = vmatpush1.msra.mxu0 0.0
    %2979 = vmatprep.subr.mxu0 0.0
    %2980 = vmatpush1.msra.mxu0 0.0
    %2981 = vmatprep.subr.mxu0 0.0
    %2982 = vmatpush1.msra.mxu0 0.0
    %2983 = vmatprep.subr.mxu0 0.0
    %2984 = vmatpush1.msra.mxu0 0.0
    %2985 = vmatprep.mubr.f32.mxu0 0.0
    %2986 = vmatmul.mubr.f32.gmra.mrb[0].mxu0 %v2919
    %v2987 = vpop.f32.mrb[0].mxu0
    %v2988 = vadd.f32 0.0, %v2987
    %v2989 = vpop.f32.mrb[0].mxu0
    %2990 = vdwg.mxu0
    %v2992 = vsel %vm2242, %v2915, 0
    %2994 = vmatprep.subr.mxu0 0.0
    %2995 = vmatpush1.msra.mxu0 %v2228
    %2996 = vmatprep.subr.mxu0 0.0
    %2997 = vmatpush1.msra.mxu0 %v2229
    %2998 = vmatprep.subr.mxu0 0.0
    %2999 = vmatpush1.msra.mxu0 %v2230
    %3000 = vmatprep.subr.mxu0 0.0
    %3001 = vmatpush1.msra.mxu0 %v2231
    %3002 = vmatprep.subr.mxu0 0.0
    %3003 = vmatpush1.msra.mxu0 0.0
    %3004 = vmatprep.subr.mxu0 0.0
    %3005 = vmatpush1.msra.mxu0 0.0
    %3006 = vmatprep.subr.mxu0 0.0
    %3007 = vmatpush1.msra.mxu0 0.0
    %3008 = vmatprep.subr.mxu0 0.0
    %3009 = vmatpush1.msra.mxu0 0.0
    %3010 = vmatprep.subr.mxu0 0.0
    %3011 = vmatpush1.msra.mxu0 0.0
    %3012 = vmatprep.subr.mxu0 0.0
    %3013 = vmatpush1.msra.mxu0 0.0
    %3014 = vmatprep.subr.mxu0 0.0
    %3015 = vmatpush1.msra.mxu0 0.0
    %3016 = vmatprep.subr.mxu0 0.0
    %3017 = vmatpush1.msra.mxu0 0.0
    %3018 = vmatprep.subr.mxu0 0.0
    %3019 = vmatpush1.msra.mxu0 0.0
    %3020 = vmatprep.subr.mxu0 0.0
    %3021 = vmatpush1.msra.mxu0 0.0
    %3022 = vmatprep.subr.mxu0 0.0
    %3023 = vmatpush1.msra.mxu0 0.0
    %3024 = vmatprep.subr.mxu0 0.0
    %3025 = vmatpush1.msra.mxu0 0.0
    %3026 = vmatprep.subr.mxu0 0.0
    %3027 = vmatpush1.msra.mxu0 0.0
    %3028 = vmatprep.subr.mxu0 0.0
    %3029 = vmatpush1.msra.mxu0 0.0
    %3030 = vmatprep.subr.mxu0 0.0
    %3031 = vmatpush1.msra.mxu0 0.0
    %3032 = vmatprep.subr.mxu0 0.0
    %3033 = vmatpush1.msra.mxu0 0.0
    %3034 = vmatprep.subr.mxu0 0.0
    %3035 = vmatpush1.msra.mxu0 0.0
    %3036 = vmatprep.subr.mxu0 0.0
    %3037 = vmatpush1.msra.mxu0 0.0
    %3038 = vmatprep.subr.mxu0 0.0
    %3039 = vmatpush1.msra.mxu0 0.0
    %3040 = vmatprep.subr.mxu0 0.0
    %3041 = vmatpush1.msra.mxu0 0.0
    %3042 = vmatprep.subr.mxu0 0.0
    %3043 = vmatpush1.msra.mxu0 0.0
    %3044 = vmatprep.subr.mxu0 0.0
    %3045 = vmatpush1.msra.mxu0 0.0
    %3046 = vmatprep.subr.mxu0 0.0
    %3047 = vmatpush1.msra.mxu0 0.0
    %3048 = vmatprep.subr.mxu0 0.0
    %3049 = vmatpush1.msra.mxu0 0.0
    %3050 = vmatprep.subr.mxu0 0.0
    %3051 = vmatpush1.msra.mxu0 0.0
    %3052 = vmatprep.subr.mxu0 0.0
    %3053 = vmatpush1.msra.mxu0 0.0
    %3054 = vmatprep.subr.mxu0 0.0
    %3055 = vmatpush1.msra.mxu0 0.0
    %3056 = vmatprep.subr.mxu0 0.0
    %3057 = vmatpush1.msra.mxu0 0.0
    %3058 = vmatprep.mubr.f32.mxu0 0.0
    %3059 = vmatmul.mubr.f32.gmra.mrb[0].mxu0 %v2992
    %v3060 = vpop.f32.mrb[0].mxu0
    %v3061 = vadd.f32 0.0, %v3060
    %v3062 = vpop.f32.mrb[0].mxu0
    %3063 = vdwg.mxu0
    %v3065 = vsel %vm2242, %v2494, 0
    %3067 = vmatprep.subr.mxu0 0.0
    %3068 = vmatpush1.msra.mxu0 %v2224
    %3069 = vmatprep.subr.mxu0 0.0
    %3070 = vmatpush1.msra.mxu0 %v2225
    %3071 = vmatprep.subr.mxu0 0.0
    %3072 = vmatpush1.msra.mxu0 %v2226
    %3073 = vmatprep.subr.mxu0 0.0
    %3074 = vmatpush1.msra.mxu0 %v2227
    %3075 = vmatprep.subr.mxu0 0.0
    %3076 = vmatpush1.msra.mxu0 0.0
    %3077 = vmatprep.subr.mxu0 0.0
    %3078 = vmatpush1.msra.mxu0 0.0
    %3079 = vmatprep.subr.mxu0 0.0
    %3080 = vmatpush1.msra.mxu0 0.0
    %3081 = vmatprep.subr.mxu0 0.0
    %3082 = vmatpush1.msra.mxu0 0.0
    %3083 = vmatprep.subr.mxu0 0.0
    %3084 = vmatpush1.msra.mxu0 0.0
    %3085 = vmatprep.subr.mxu0 0.0
    %3086 = vmatpush1.msra.mxu0 0.0
    %3087 = vmatprep.subr.mxu0 0.0
    %3088 = vmatpush1.msra.mxu0 0.0
    %3089 = vmatprep.subr.mxu0 0.0
    %3090 = vmatpush1.msra.mxu0 0.0
    %3091 = vmatprep.subr.mxu0 0.0
    %3092 = vmatpush1.msra.mxu0 0.0
    %3093 = vmatprep.subr.mxu0 0.0
    %3094 = vmatpush1.msra.mxu0 0.0
    %3095 = vmatprep.subr.mxu0 0.0
    %3096 = vmatpush1.msra.mxu0 0.0
    %3097 = vmatprep.subr.mxu0 0.0
    %3098 = vmatpush1.msra.mxu0 0.0
    %3099 = vmatprep.subr.mxu0 0.0
    %3100 = vmatpush1.msra.mxu0 0.0
    %3101 = vmatprep.subr.mxu0 0.0
    %3102 = vmatpush1.msra.mxu0 0.0
    %3103 = vmatprep.subr.mxu0 0.0
    %3104 = vmatpush1.msra.mxu0 0.0
    %3105 = vmatprep.subr.mxu0 0.0
    %3106 = vmatpush1.msra.mxu0 0.0
    %3107 = vmatprep.subr.mxu0 0.0
    %3108 = vmatpush1.msra.mxu0 0.0
    %3109 = vmatprep.subr.mxu0 0.0
    %3110 = vmatpush1.msra.mxu0 0.0
    %3111 = vmatprep.subr.mxu0 0.0
    %3112 = vmatpush1.msra.mxu0 0.0
    %3113 = vmatprep.subr.mxu0 0.0
    %3114 = vmatpush1.msra.mxu0 0.0
    %3115 = vmatprep.subr.mxu0 0.0
    %3116 = vmatpush1.msra.mxu0 0.0
    %3117 = vmatprep.subr.mxu0 0.0
    %3118 = vmatpush1.msra.mxu0 0.0
    %3119 = vmatprep.subr.mxu0 0.0
    %3120 = vmatpush1.msra.mxu0 0.0
    %3121 = vmatprep.subr.mxu0 0.0
    %3122 = vmatpush1.msra.mxu0 0.0
    %3123 = vmatprep.subr.mxu0 0.0
    %3124 = vmatpush1.msra.mxu0 0.0
    %3125 = vmatprep.subr.mxu0 0.0
    %3126 = vmatpush1.msra.mxu0 0.0
    %3127 = vmatprep.subr.mxu0 0.0
    %3128 = vmatpush1.msra.mxu0 0.0
    %3129 = vmatprep.subr.mxu0 0.0
    %3130 = vmatpush1.msra.mxu0 0.0
    %3131 = vmatprep.mubr.f32.mxu0 0.0
    %3132 = vmatmul.mubr.f32.gmra.mrb[0].mxu0 %v3065
    %v3133 = vpop.f32.mrb[0].mxu0
    %v3134 = vadd.f32 %v2988, %v3133
    %v3135 = vpop.f32.mrb[0].mxu0
    %3136 = vdwg.mxu0
    %v3138 = vsel %vm2242, %v2567, 0
    %3140 = vmatprep.subr.mxu0 0.0
    %3141 = vmatpush1.msra.mxu0 %v2224
    %3142 = vmatprep.subr.mxu0 0.0
    %3143 = vmatpush1.msra.mxu0 %v2225
    %3144 = vmatprep.subr.mxu0 0.0
    %3145 = vmatpush1.msra.mxu0 %v2226
    %3146 = vmatprep.subr.mxu0 0.0
    %3147 = vmatpush1.msra.mxu0 %v2227
    %3148 = vmatprep.subr.mxu0 0.0
    %3149 = vmatpush1.msra.mxu0 0.0
    %3150 = vmatprep.subr.mxu0 0.0
    %3151 = vmatpush1.msra.mxu0 0.0
    %3152 = vmatprep.subr.mxu0 0.0
    %3153 = vmatpush1.msra.mxu0 0.0
    %3154 = vmatprep.subr.mxu0 0.0
    %3155 = vmatpush1.msra.mxu0 0.0
    %3156 = vmatprep.subr.mxu0 0.0
    %3157 = vmatpush1.msra.mxu0 0.0
    %3158 = vmatprep.subr.mxu0 0.0
    %3159 = vmatpush1.msra.mxu0 0.0
    %3160 = vmatprep.subr.mxu0 0.0
    %3161 = vmatpush1.msra.mxu0 0.0
    %3162 = vmatprep.subr.mxu0 0.0
    %3163 = vmatpush1.msra.mxu0 0.0
    %3164 = vmatprep.subr.mxu0 0.0
    %3165 = vmatpush1.msra.mxu0 0.0
    %3166 = vmatprep.subr.mxu0 0.0
    %3167 = vmatpush1.msra.mxu0 0.0
    %3168 = vmatprep.subr.mxu0 0.0
    %3169 = vmatpush1.msra.mxu0 0.0
    %3170 = vmatprep.subr.mxu0 0.0
    %3171 = vmatpush1.msra.mxu0 0.0
    %3172 = vmatprep.subr.mxu0 0.0
    %3173 = vmatpush1.msra.mxu0 0.0
    %3174 = vmatprep.subr.mxu0 0.0
    %3175 = vmatpush1.msra.mxu0 0.0
    %3176 = vmatprep.subr.mxu0 0.0
    %3177 = vmatpush1.msra.mxu0 0.0
    %3178 = vmatprep.subr.mxu0 0.0
    %3179 = vmatpush1.msra.mxu0 0.0
    %3180 = vmatprep.subr.mxu0 0.0
    %3181 = vmatpush1.msra.mxu0 0.0
    %3182 = vmatprep.subr.mxu0 0.0
    %3183 = vmatpush1.msra.mxu0 0.0
    %3184 = vmatprep.subr.mxu0 0.0
    %3185 = vmatpush1.msra.mxu0 0.0
    %3186 = vmatprep.subr.mxu0 0.0
    %3187 = vmatpush1.msra.mxu0 0.0
    %3188 = vmatprep.subr.mxu0 0.0
    %3189 = vmatpush1.msra.mxu0 0.0
    %3190 = vmatprep.subr.mxu0 0.0
    %3191 = vmatpush1.msra.mxu0 0.0
    %3192 = vmatprep.subr.mxu0 0.0
    %3193 = vmatpush1.msra.mxu0 0.0
    %3194 = vmatprep.subr.mxu0 0.0
    %3195 = vmatpush1.msra.mxu0 0.0
    %3196 = vmatprep.subr.mxu0 0.0
    %3197 = vmatpush1.msra.mxu0 0.0
    %3198 = vmatprep.subr.mxu0 0.0
    %3199 = vmatpush1.msra.mxu0 0.0
    %3200 = vmatprep.subr.mxu0 0.0
    %3201 = vmatpush1.msra.mxu0 0.0
    %3202 = vmatprep.subr.mxu0 0.0
    %3203 = vmatpush1.msra.mxu0 0.0
    %3204 = vmatprep.mubr.f32.mxu0 0.0
    %3205 = vmatmul.mubr.f32.gmra.mrb[0].mxu0 %v3138
    %v3206 = vpop.f32.mrb[0].mxu0
    %v3207 = vadd.f32 %v3061, %v3206
    %v3208 = vpop.f32.mrb[0].mxu0
    %3209 = vdwg.mxu0
    %3210 = vrot.lane.b32.xlu0 %v2240, 64
    %v3211 = vpop.permute.xlu0 %3210
    %3212 = vrot.lane.b32.xlu0 %v2098, 64
    %v3213 = vpop.permute.xlu0 %3212
    %3214 = vrot.lane.b32.xlu0 %v2103, 64
    %v3215 = vpop.permute.xlu0 %3214
    %v3216 = vsel %vm2242, %v3211, 0
    %v3218 = vsel %vm2242, %v3213, 0
    %v3220 = vsel %vm2242, %v3215, 0
    %3222 = vmatprep.subr.mxu0 0.0
    %3223 = vmatpush1.xpose.msra.mxu0 %v3218
    %3224 = vmatprep.subr.mxu0 0.0
    %3225 = vmatpush1.xpose.msra.mxu0 %v3220
    %3226 = vmatprep.subr.mxu0 0.0
    %3227 = vmatpush1.xpose.msra.mxu0 0.0
    %3228 = vmatprep.subr.mxu0 0.0
    %3229 = vmatpush1.xpose.msra.mxu0 0.0
    %3230 = vmatprep.subr.mxu0 0.0
    %3231 = vmatpush1.xpose.msra.mxu0 0.0
    %3232 = vmatprep.subr.mxu0 0.0
    %3233 = vmatpush1.xpose.msra.mxu0 0.0
    %3234 = vmatprep.subr.mxu0 0.0
    %3235 = vmatpush1.xpose.msra.mxu0 0.0
    %3236 = vmatprep.subr.mxu0 0.0
    %3237 = vmatpush1.xpose.msra.mxu0 0.0
    %3238 = vmatprep.subr.mxu0 0.0
    %3239 = vmatpush1.xpose.msra.mxu0 0.0
    %3240 = vmatprep.subr.mxu0 0.0
    %3241 = vmatpush1.xpose.msra.mxu0 0.0
    %3242 = vmatprep.subr.mxu0 0.0
    %3243 = vmatpush1.xpose.msra.mxu0 0.0
    %3244 = vmatprep.subr.mxu0 0.0
    %3245 = vmatpush1.xpose.msra.mxu0 0.0
    %3246 = vmatprep.subr.mxu0 0.0
    %3247 = vmatpush1.xpose.msra.mxu0 0.0
    %3248 = vmatprep.subr.mxu0 0.0
    %3249 = vmatpush1.xpose.msra.mxu0 0.0
    %3250 = vmatprep.subr.mxu0 0.0
    %3251 = vmatpush1.xpose.msra.mxu0 0.0
    %3252 = vmatprep.subr.mxu0 0.0
    %3253 = vmatpush1.xpose.msra.mxu0 0.0
    %3254 = vmatprep.subr.mxu0 0.0
    %3255 = vmatpush1.xpose.msra.mxu0 0.0
    %3256 = vmatprep.subr.mxu0 0.0
    %3257 = vmatpush1.xpose.msra.mxu0 0.0
    %3258 = vmatprep.subr.mxu0 0.0
    %3259 = vmatpush1.xpose.msra.mxu0 0.0
    %3260 = vmatprep.subr.mxu0 0.0
    %3261 = vmatpush1.xpose.msra.mxu0 0.0
    %3262 = vmatprep.subr.mxu0 0.0
    %3263 = vmatpush1.xpose.msra.mxu0 0.0
    %3264 = vmatprep.subr.mxu0 0.0
    %3265 = vmatpush1.xpose.msra.mxu0 0.0
    %3266 = vmatprep.subr.mxu0 0.0
    %3267 = vmatpush1.xpose.msra.mxu0 0.0
    %3268 = vmatprep.subr.mxu0 0.0
    %3269 = vmatpush1.xpose.msra.mxu0 0.0
    %3270 = vmatprep.subr.mxu0 0.0
    %3271 = vmatpush1.xpose.msra.mxu0 0.0
    %3272 = vmatprep.subr.mxu0 0.0
    %3273 = vmatpush1.xpose.msra.mxu0 0.0
    %3274 = vmatprep.subr.mxu0 0.0
    %3275 = vmatpush1.xpose.msra.mxu0 0.0
    %3276 = vmatprep.subr.mxu0 0.0
    %3277 = vmatpush1.xpose.msra.mxu0 0.0
    %3278 = vmatprep.subr.mxu0 0.0
    %3279 = vmatpush1.xpose.msra.mxu0 0.0
    %3280 = vmatprep.subr.mxu0 0.0
    %3281 = vmatpush1.xpose.msra.mxu0 0.0
    %3282 = vmatprep.subr.mxu0 0.0
    %3283 = vmatpush1.xpose.msra.mxu0 0.0
    %3284 = vmatprep.subr.mxu0 0.0
    %3285 = vmatpush1.xpose.msra.mxu0 0.0
    %3286 = vmatprep.mubr.f32.mxu0 0.0
    %3287 = vmatmul.mubr.f32.gmra.mrb[0].mxu0 %v3216
    %v3288 = vpop.f32.mrb[0].mxu0
    %v3289 = vadd.f32 0.0, %v3288
    %v3290 = vpop.f32.mrb[0].mxu0
    %3291 = vdwg.mxu0
    %3292 = vrot.lane.b32.xlu0 %v2241, 64
    %v3293 = vpop.permute.xlu0 %3292
    %3294 = vrot.lane.b32.xlu0 %v2108, 64
    %v3295 = vpop.permute.xlu0 %3294
    %3296 = vrot.lane.b32.xlu0 %v2113, 64
    %v3297 = vpop.permute.xlu0 %3296
    %v3298 = vsel %vm2242, %v3293, 0
    %v3300 = vsel %vm2242, %v3295, 0
    %v3302 = vsel %vm2242, %v3297, 0
    %3304 = vmatprep.subr.mxu0 0.0
    %3305 = vmatpush1.xpose.msra.mxu0 %v3300
    %3306 = vmatprep.subr.mxu0 0.0
    %3307 = vmatpush1.xpose.msra.mxu0 %v3302
    %3308 = vmatprep.subr.mxu0 0.0
    %3309 = vmatpush1.xpose.msra.mxu0 0.0
    %3310 = vmatprep.subr.mxu0 0.0
    %3311 = vmatpush1.xpose.msra.mxu0 0.0
    %3312 = vmatprep.subr.mxu0 0.0
    %3313 = vmatpush1.xpose.msra.mxu0 0.0
    %3314 = vmatprep.subr.mxu0 0.0
    %3315 = vmatpush1.xpose.msra.mxu0 0.0
    %3316 = vmatprep.subr.mxu0 0.0
    %3317 = vmatpush1.xpose.msra.mxu0 0.0
    %3318 = vmatprep.subr.mxu0 0.0
    %3319 = vmatpush1.xpose.msra.mxu0 0.0
    %3320 = vmatprep.subr.mxu0 0.0
    %3321 = vmatpush1.xpose.msra.mxu0 0.0
    %3322 = vmatprep.subr.mxu0 0.0
    %3323 = vmatpush1.xpose.msra.mxu0 0.0
    %3324 = vmatprep.subr.mxu0 0.0
    %3325 = vmatpush1.xpose.msra.mxu0 0.0
    %3326 = vmatprep.subr.mxu0 0.0
    %3327 = vmatpush1.xpose.msra.mxu0 0.0
    %3328 = vmatprep.subr.mxu0 0.0
    %3329 = vmatpush1.xpose.msra.mxu0 0.0
    %3330 = vmatprep.subr.mxu0 0.0
    %3331 = vmatpush1.xpose.msra.mxu0 0.0
    %3332 = vmatprep.subr.mxu0 0.0
    %3333 = vmatpush1.xpose.msra.mxu0 0.0
    %3334 = vmatprep.subr.mxu0 0.0
    %3335 = vmatpush1.xpose.msra.mxu0 0.0
    %3336 = vmatprep.subr.mxu0 0.0
    %3337 = vmatpush1.xpose.msra.mxu0 0.0
    %3338 = vmatprep.subr.mxu0 0.0
    %3339 = vmatpush1.xpose.msra.mxu0 0.0
    %3340 = vmatprep.subr.mxu0 0.0
    %3341 = vmatpush1.xpose.msra.mxu0 0.0
    %3342 = vmatprep.subr.mxu0 0.0
    %3343 = vmatpush1.xpose.msra.mxu0 0.0
    %3344 = vmatprep.subr.mxu0 0.0
    %3345 = vmatpush1.xpose.msra.mxu0 0.0
    %3346 = vmatprep.subr.mxu0 0.0
    %3347 = vmatpush1.xpose.msra.mxu0 0.0
    %3348 = vmatprep.subr.mxu0 0.0
    %3349 = vmatpush1.xpose.msra.mxu0 0.0
    %3350 = vmatprep.subr.mxu0 0.0
    %3351 = vmatpush1.xpose.msra.mxu0 0.0
    %3352 = vmatprep.subr.mxu0 0.0
    %3353 = vmatpush1.xpose.msra.mxu0 0.0
    %3354 = vmatprep.subr.mxu0 0.0
    %3355 = vmatpush1.xpose.msra.mxu0 0.0
    %3356 = vmatprep.subr.mxu0 0.0
    %3357 = vmatpush1.xpose.msra.mxu0 0.0
    %3358 = vmatprep.subr.mxu0 0.0
    %3359 = vmatpush1.xpose.msra.mxu0 0.0
    %3360 = vmatprep.subr.mxu0 0.0
    %3361 = vmatpush1.xpose.msra.mxu0 0.0
    %3362 = vmatprep.subr.mxu0 0.0
    %3363 = vmatpush1.xpose.msra.mxu0 0.0
    %3364 = vmatprep.subr.mxu0 0.0
    %3365 = vmatpush1.xpose.msra.mxu0 0.0
    %3366 = vmatprep.subr.mxu0 0.0
    %3367 = vmatpush1.xpose.msra.mxu0 0.0
    %3368 = vmatprep.mubr.f32.mxu0 0.0
    %3369 = vmatmul.mubr.f32.gmra.mrb[0].mxu0 %v3298
    %v3370 = vpop.f32.mrb[0].mxu0
    %v3371 = vadd.f32 0.0, %v3370
    %v3372 = vpop.f32.mrb[0].mxu0
    %3373 = vdwg.mxu0
    %v3374 = vsel %vm2401, %v3289, -inf
    %3375 = vmax.xlane.f32.xlu0 %v3374
    %v3376 = vpop.xlane.xlu0 %3375
    %v3377 = vsel %vm2401, %v3371, -inf
    %3378 = vmax.xlane.f32.xlu0 %v3377
    %v3379 = vpop.xlane.xlu0 %3378
    %v3380 = vsub.f32 %v3289, %v3376
    %v3381 = vsub.f32 %v3371, %v3379
    %v3382 = vmul.f32 %v3380, 1.442695
    %v3383 = vpow.pop %v3382
    %v3384 = vmul.f32 %v3381, 1.442695
    %v3385 = vpow.pop %v3384
    %v3386 = vsel %vm2401, %v3383, 0.0
    %3387 = vadd.xlane.f32.xlu0 %v3386
    %v3388 = vpop.xlane.xlu0 %3387
    %v3389 = vsel %vm2401, %v3385, 0.0
    %3390 = vadd.xlane.f32.xlu0 %v3389
    %v3391 = vpop.xlane.xlu0 %3390
    %v3392 = vrcp.pop %v3388
    %v3393 = vrcp.pop %v3391
    %v3394 = vmul.f32 %v3383, %v3392
    %v3395 = vmul.f32 %v3385, %v3393
    %3396 = vrot.lane.b32.xlu0 %v2206, 64
    %v3397 = vpop.permute.xlu0 %3396
    %3398 = vrot.lane.b32.xlu0 %v2211, 64
    %v3399 = vpop.permute.xlu0 %3398
    %v3403 = vsel %vm2401, %v3394, 0
    %3405 = vmatprep.subr.mxu0 0.0
    %3406 = vmatpush1.msra.mxu0 %v3397
    %3407 = vmatprep.subr.mxu0 0.0
    %3408 = vmatpush1.msra.mxu0 %v3399
    %3409 = vmatprep.subr.mxu0 0.0
    %3410 = vmatpush1.msra.mxu0 0.0
    %3411 = vmatprep.subr.mxu0 0.0
    %3412 = vmatpush1.msra.mxu0 0.0
    %3413 = vmatprep.subr.mxu0 0.0
    %3414 = vmatpush1.msra.mxu0 0.0
    %3415 = vmatprep.subr.mxu0 0.0
    %3416 = vmatpush1.msra.mxu0 0.0
    %3417 = vmatprep.subr.mxu0 0.0
    %3418 = vmatpush1.msra.mxu0 0.0
    %3419 = vmatprep.subr.mxu0 0.0
    %3420 = vmatpush1.msra.mxu0 0.0
    %3421 = vmatprep.subr.mxu0 0.0
    %3422 = vmatpush1.msra.mxu0 0.0
    %3423 = vmatprep.subr.mxu0 0.0
    %3424 = vmatpush1.msra.mxu0 0.0
    %3425 = vmatprep.subr.mxu0 0.0
    %3426 = vmatpush1.msra.mxu0 0.0
    %3427 = vmatprep.subr.mxu0 0.0
    %3428 = vmatpush1.msra.mxu0 0.0
    %3429 = vmatprep.subr.mxu0 0.0
    %3430 = vmatpush1.msra.mxu0 0.0
    %3431 = vmatprep.subr.mxu0 0.0
    %3432 = vmatpush1.msra.mxu0 0.0
    %3433 = vmatprep.subr.mxu0 0.0
    %3434 = vmatpush1.msra.mxu0 0.0
    %3435 = vmatprep.subr.mxu0 0.0
    %3436 = vmatpush1.msra.mxu0 0.0
    %3437 = vmatprep.subr.mxu0 0.0
    %3438 = vmatpush1.msra.mxu0 0.0
    %3439 = vmatprep.subr.mxu0 0.0
    %3440 = vmatpush1.msra.mxu0 0.0
    %3441 = vmatprep.subr.mxu0 0.0
    %3442 = vmatpush1.msra.mxu0 0.0
    %3443 = vmatprep.subr.mxu0 0.0
    %3444 = vmatpush1.msra.mxu0 0.0
    %3445 = vmatprep.subr.mxu0 0.0
    %3446 = vmatpush1.msra.mxu0 0.0
    %3447 = vmatprep.subr.mxu0 0.0
    %3448 = vmatpush1.msra.mxu0 0.0
    %3449 = vmatprep.subr.mxu0 0.0
    %3450 = vmatpush1.msra.mxu0 0.0
    %3451 = vmatprep.subr.mxu0 0.0
    %3452 = vmatpush1.msra.mxu0 0.0
    %3453 = vmatprep.subr.mxu0 0.0
    %3454 = vmatpush1.msra.mxu0 0.0
    %3455 = vmatprep.subr.mxu0 0.0
    %3456 = vmatpush1.msra.mxu0 0.0
    %3457 = vmatprep.subr.mxu0 0.0
    %3458 = vmatpush1.msra.mxu0 0.0
    %3459 = vmatprep.subr.mxu0 0.0
    %3460 = vmatpush1.msra.mxu0 0.0
    %3461 = vmatprep.subr.mxu0 0.0
    %3462 = vmatpush1.msra.mxu0 0.0
    %3463 = vmatprep.subr.mxu0 0.0
    %3464 = vmatpush1.msra.mxu0 0.0
    %3465 = vmatprep.subr.mxu0 0.0
    %3466 = vmatpush1.msra.mxu0 0.0
    %3467 = vmatprep.subr.mxu0 0.0
    %3468 = vmatpush1.msra.mxu0 0.0
    %3469 = vmatprep.mubr.f32.mxu0 0.0
    %3470 = vmatmul.mubr.f32.gmra.mrb[0].mxu0 %v3403
    %v3471 = vpop.f32.mrb[0].mxu0
    %v3472 = vadd.f32 0.0, %v3471
    %v3473 = vpop.f32.mrb[0].mxu0
    %3474 = vdwg.mxu0
    %3475 = vrot.lane.b32.xlu0 %v2216, 64
    %v3476 = vpop.permute.xlu0 %3475
    %3477 = vrot.lane.b32.xlu0 %v2221, 64
    %v3478 = vpop.permute.xlu0 %3477
    %v3482 = vsel %vm2401, %v3395, 0
    %3484 = vmatprep.subr.mxu0 0.0
    %3485 = vmatpush1.msra.mxu0 %v3476
    %3486 = vmatprep.subr.mxu0 0.0
    %3487 = vmatpush1.msra.mxu0 %v3478
    %3488 = vmatprep.subr.mxu0 0.0
    %3489 = vmatpush1.msra.mxu0 0.0
    %3490 = vmatprep.subr.mxu0 0.0
    %3491 = vmatpush1.msra.mxu0 0.0
    %3492 = vmatprep.subr.mxu0 0.0
    %3493 = vmatpush1.msra.mxu0 0.0
    %3494 = vmatprep.subr.mxu0 0.0
    %3495 = vmatpush1.msra.mxu0 0.0
    %3496 = vmatprep.subr.mxu0 0.0
    %3497 = vmatpush1.msra.mxu0 0.0
    %3498 = vmatprep.subr.mxu0 0.0
    %3499 = vmatpush1.msra.mxu0 0.0
    %3500 = vmatprep.subr.mxu0 0.0
    %3501 = vmatpush1.msra.mxu0 0.0
    %3502 = vmatprep.subr.mxu0 0.0
    %3503 = vmatpush1.msra.mxu0 0.0
    %3504 = vmatprep.subr.mxu0 0.0
    %3505 = vmatpush1.msra.mxu0 0.0
    %3506 = vmatprep.subr.mxu0 0.0
    %3507 = vmatpush1.msra.mxu0 0.0
    %3508 = vmatprep.subr.mxu0 0.0
    %3509 = vmatpush1.msra.mxu0 0.0
    %3510 = vmatprep.subr.mxu0 0.0
    %3511 = vmatpush1.msra.mxu0 0.0
    %3512 = vmatprep.subr.mxu0 0.0
    %3513 = vmatpush1.msra.mxu0 0.0
    %3514 = vmatprep.subr.mxu0 0.0
    %3515 = vmatpush1.msra.mxu0 0.0
    %3516 = vmatprep.subr.mxu0 0.0
    %3517 = vmatpush1.msra.mxu0 0.0
    %3518 = vmatprep.subr.mxu0 0.0
    %3519 = vmatpush1.msra.mxu0 0.0
    %3520 = vmatprep.subr.mxu0 0.0
    %3521 = vmatpush1.msra.mxu0 0.0
    %3522 = vmatprep.subr.mxu0 0.0
    %3523 = vmatpush1.msra.mxu0 0.0
    %3524 = vmatprep.subr.mxu0 0.0
    %3525 = vmatpush1.msra.mxu0 0.0
    %3526 = vmatprep.subr.mxu0 0.0
    %3527 = vmatpush1.msra.mxu0 0.0
    %3528 = vmatprep.subr.mxu0 0.0
    %3529 = vmatpush1.msra.mxu0 0.0
    %3530 = vmatprep.subr.mxu0 0.0
    %3531 = vmatpush1.msra.mxu0 0.0
    %3532 = vmatprep.subr.mxu0 0.0
    %3533 = vmatpush1.msra.mxu0 0.0
    %3534 = vmatprep.subr.mxu0 0.0
    %3535 = vmatpush1.msra.mxu0 0.0
    %3536 = vmatprep.subr.mxu0 0.0
    %3537 = vmatpush1.msra.mxu0 0.0
    %3538 = vmatprep.subr.mxu0 0.0
    %3539 = vmatpush1.msra.mxu0 0.0
    %3540 = vmatprep.subr.mxu0 0.0
    %3541 = vmatpush1.msra.mxu0 0.0
    %3542 = vmatprep.subr.mxu0 0.0
    %3543 = vmatpush1.msra.mxu0 0.0
    %3544 = vmatprep.subr.mxu0 0.0
    %3545 = vmatpush1.msra.mxu0 0.0
    %3546 = vmatprep.subr.mxu0 0.0
    %3547 = vmatpush1.msra.mxu0 0.0
    %3548 = vmatprep.mubr.f32.mxu0 0.0
    %3549 = vmatmul.mubr.f32.gmra.mrb[0].mxu0 %v3482
    %v3550 = vpop.f32.mrb[0].mxu0
    %v3551 = vadd.f32 0.0, %v3550
    %v3552 = vpop.f32.mrb[0].mxu0
    %3553 = vdwg.mxu0
    %v3555 = vsel %vm2242, %v3472, 0
    %3557 = vmatprep.subr.mxu0 0.0
    %3558 = vmatpush1.msra.mxu0 %v2232
    %3559 = vmatprep.subr.mxu0 0.0
    %3560 = vmatpush1.msra.mxu0 %v2233
    %3561 = vmatprep.subr.mxu0 0.0
    %3562 = vmatpush1.msra.mxu0 %v2234
    %3563 = vmatprep.subr.mxu0 0.0
    %3564 = vmatpush1.msra.mxu0 %v2235
    %3565 = vmatprep.subr.mxu0 0.0
    %3566 = vmatpush1.msra.mxu0 0.0
    %3567 = vmatprep.subr.mxu0 0.0
    %3568 = vmatpush1.msra.mxu0 0.0
    %3569 = vmatprep.subr.mxu0 0.0
    %3570 = vmatpush1.msra.mxu0 0.0
    %3571 = vmatprep.subr.mxu0 0.0
    %3572 = vmatpush1.msra.mxu0 0.0
    %3573 = vmatprep.subr.mxu0 0.0
    %3574 = vmatpush1.msra.mxu0 0.0
    %3575 = vmatprep.subr.mxu0 0.0
    %3576 = vmatpush1.msra.mxu0 0.0
    %3577 = vmatprep.subr.mxu0 0.0
    %3578 = vmatpush1.msra.mxu0 0.0
    %3579 = vmatprep.subr.mxu0 0.0
    %3580 = vmatpush1.msra.mxu0 0.0
    %3581 = vmatprep.subr.mxu0 0.0
    %3582 = vmatpush1.msra.mxu0 0.0
    %3583 = vmatprep.subr.mxu0 0.0
    %3584 = vmatpush1.msra.mxu0 0.0
    %3585 = vmatprep.subr.mxu0 0.0
    %3586 = vmatpush1.msra.mxu0 0.0
    %3587 = vmatprep.subr.mxu0 0.0
    %3588 = vmatpush1.msra.mxu0 0.0
    %3589 = vmatprep.subr.mxu0 0.0
    %3590 = vmatpush1.msra.mxu0 0.0
    %3591 = vmatprep.subr.mxu0 0.0
    %3592 = vmatpush1.msra.mxu0 0.0
    %3593 = vmatprep.subr.mxu0 0.0
    %3594 = vmatpush1.msra.mxu0 0.0
    %3595 = vmatprep.subr.mxu0 0.0
    %3596 = vmatpush1.msra.mxu0 0.0
    %3597 = vmatprep.subr.mxu0 0.0
    %3598 = vmatpush1.msra.mxu0 0.0
    %3599 = vmatprep.subr.mxu0 0.0
    %3600 = vmatpush1.msra.mxu0 0.0
    %3601 = vmatprep.subr.mxu0 0.0
    %3602 = vmatpush1.msra.mxu0 0.0
    %3603 = vmatprep.subr.mxu0 0.0
    %3604 = vmatpush1.msra.mxu0 0.0
    %3605 = vmatprep.subr.mxu0 0.0
    %3606 = vmatpush1.msra.mxu0 0.0
    %3607 = vmatprep.subr.mxu0 0.0
    %3608 = vmatpush1.msra.mxu0 0.0
    %3609 = vmatprep.subr.mxu0 0.0
    %3610 = vmatpush1.msra.mxu0 0.0
    %3611 = vmatprep.subr.mxu0 0.0
    %3612 = vmatpush1.msra.mxu0 0.0
    %3613 = vmatprep.subr.mxu0 0.0
    %3614 = vmatpush1.msra.mxu0 0.0
    %3615 = vmatprep.subr.mxu0 0.0
    %3616 = vmatpush1.msra.mxu0 0.0
    %3617 = vmatprep.subr.mxu0 0.0
    %3618 = vmatpush1.msra.mxu0 0.0
    %3619 = vmatprep.subr.mxu0 0.0
    %3620 = vmatpush1.msra.mxu0 0.0
    %3621 = vmatprep.mubr.f32.mxu0 0.0
    %3622 = vmatmul.mubr.f32.gmra.mrb[0].mxu0 %v3555
    %v3623 = vpop.f32.mrb[0].mxu0
    %v3624 = vadd.f32 0.0, %v3623
    %v3625 = vpop.f32.mrb[0].mxu0
    %3626 = vdwg.mxu0
    %v3628 = vsel %vm2242, %v3551, 0
    %3630 = vmatprep.subr.mxu0 0.0
    %3631 = vmatpush1.msra.mxu0 %v2232
    %3632 = vmatprep.subr.mxu0 0.0
    %3633 = vmatpush1.msra.mxu0 %v2233
    %3634 = vmatprep.subr.mxu0 0.0
    %3635 = vmatpush1.msra.mxu0 %v2234
    %3636 = vmatprep.subr.mxu0 0.0
    %3637 = vmatpush1.msra.mxu0 %v2235
    %3638 = vmatprep.subr.mxu0 0.0
    %3639 = vmatpush1.msra.mxu0 0.0
    %3640 = vmatprep.subr.mxu0 0.0
    %3641 = vmatpush1.msra.mxu0 0.0
    %3642 = vmatprep.subr.mxu0 0.0
    %3643 = vmatpush1.msra.mxu0 0.0
    %3644 = vmatprep.subr.mxu0 0.0
    %3645 = vmatpush1.msra.mxu0 0.0
    %3646 = vmatprep.subr.mxu0 0.0
    %3647 = vmatpush1.msra.mxu0 0.0
    %3648 = vmatprep.subr.mxu0 0.0
    %3649 = vmatpush1.msra.mxu0 0.0
    %3650 = vmatprep.subr.mxu0 0.0
    %3651 = vmatpush1.msra.mxu0 0.0
    %3652 = vmatprep.subr.mxu0 0.0
    %3653 = vmatpush1.msra.mxu0 0.0
    %3654 = vmatprep.subr.mxu0 0.0
    %3655 = vmatpush1.msra.mxu0 0.0
    %3656 = vmatprep.subr.mxu0 0.0
    %3657 = vmatpush1.msra.mxu0 0.0
    %3658 = vmatprep.subr.mxu0 0.0
    %3659 = vmatpush1.msra.mxu0 0.0
    %3660 = vmatprep.subr.mxu0 0.0
    %3661 = vmatpush1.msra.mxu0 0.0
    %3662 = vmatprep.subr.mxu0 0.0
    %3663 = vmatpush1.msra.mxu0 0.0
    %3664 = vmatprep.subr.mxu0 0.0
    %3665 = vmatpush1.msra.mxu0 0.0
    %3666 = vmatprep.subr.mxu0 0.0
    %3667 = vmatpush1.msra.mxu0 0.0
    %3668 = vmatprep.subr.mxu0 0.0
    %3669 = vmatpush1.msra.mxu0 0.0
    %3670 = vmatprep.subr.mxu0 0.0
    %3671 = vmatpush1.msra.mxu0 0.0
    %3672 = vmatprep.subr.mxu0 0.0
    %3673 = vmatpush1.msra.mxu0 0.0
    %3674 = vmatprep.subr.mxu0 0.0
    %3675 = vmatpush1.msra.mxu0 0.0
    %3676 = vmatprep.subr.mxu0 0.0
    %3677 = vmatpush1.msra.mxu0 0.0
    %3678 = vmatprep.subr.mxu0 0.0
    %3679 = vmatpush1.msra.mxu0 0.0
    %3680 = vmatprep.subr.mxu0 0.0
    %3681 = vmatpush1.msra.mxu0 0.0
    %3682 = vmatprep.subr.mxu0 0.0
    %3683 = vmatpush1.msra.mxu0 0.0
    %3684 = vmatprep.subr.mxu0 0.0
    %3685 = vmatpush1.msra.mxu0 0.0
    %3686 = vmatprep.subr.mxu0 0.0
    %3687 = vmatpush1.msra.mxu0 0.0
    %3688 = vmatprep.subr.mxu0 0.0
    %3689 = vmatpush1.msra.mxu0 0.0
    %3690 = vmatprep.subr.mxu0 0.0
    %3691 = vmatpush1.msra.mxu0 0.0
    %3692 = vmatprep.subr.mxu0 0.0
    %3693 = vmatpush1.msra.mxu0 0.0
    %3694 = vmatprep.mubr.f32.mxu0 0.0
    %3695 = vmatmul.mubr.f32.gmra.mrb[0].mxu0 %v3628
    %v3696 = vpop.f32.mrb[0].mxu0
    %v3697 = vadd.f32 0.0, %v3696
    %v3698 = vpop.f32.mrb[0].mxu0
    %3699 = vdwg.mxu0
    %v3700 = vadd.f32 %v3134, %v3624
    %v3701 = vadd.f32 %v3207, %v3697
    %3702 = vrot.lane.b32.xlu0 %v2240, 32
    %v3703 = vpop.permute.xlu0 %3702
    %3704 = vrot.lane.b32.xlu0 %v2098, 32
    %v3705 = vpop.permute.xlu0 %3704
    %3706 = vrot.lane.b32.xlu0 %v2103, 32
    %v3707 = vpop.permute.xlu0 %3706
    %v3708 = vsel %vm2242, %v3703, 0
    %v3710 = vsel %vm2242, %v3705, 0
    %v3712 = vsel %vm2242, %v3707, 0
    %3714 = vmatprep.subr.mxu0 0.0
    %3715 = vmatpush1.xpose.msra.mxu0 %v3710
    %3716 = vmatprep.subr.mxu0 0.0
    %3717 = vmatpush1.xpose.msra.mxu0 %v3712
    %3718 = vmatprep.subr.mxu0 0.0
    %3719 = vmatpush1.xpose.msra.mxu0 0.0
    %3720 = vmatprep.subr.mxu0 0.0
    %3721 = vmatpush1.xpose.msra.mxu0 0.0
    %3722 = vmatprep.subr.mxu0 0.0
    %3723 = vmatpush1.xpose.msra.mxu0 0.0
    %3724 = vmatprep.subr.mxu0 0.0
    %3725 = vmatpush1.xpose.msra.mxu0 0.0
    %3726 = vmatprep.subr.mxu0 0.0
    %3727 = vmatpush1.xpose.msra.mxu0 0.0
    %3728 = vmatprep.subr.mxu0 0.0
    %3729 = vmatpush1.xpose.msra.mxu0 0.0
    %3730 = vmatprep.subr.mxu0 0.0
    %3731 = vmatpush1.xpose.msra.mxu0 0.0
    %3732 = vmatprep.subr.mxu0 0.0
    %3733 = vmatpush1.xpose.msra.mxu0 0.0
    %3734 = vmatprep.subr.mxu0 0.0
    %3735 = vmatpush1.xpose.msra.mxu0 0.0
    %3736 = vmatprep.subr.mxu0 0.0
    %3737 = vmatpush1.xpose.msra.mxu0 0.0
    %3738 = vmatprep.subr.mxu0 0.0
    %3739 = vmatpush1.xpose.msra.mxu0 0.0
    %3740 = vmatprep.subr.mxu0 0.0
    %3741 = vmatpush1.xpose.msra.mxu0 0.0
    %3742 = vmatprep.subr.mxu0 0.0
    %3743 = vmatpush1.xpose.msra.mxu0 0.0
    %3744 = vmatprep.subr.mxu0 0.0
    %3745 = vmatpush1.xpose.msra.mxu0 0.0
    %3746 = vmatprep.subr.mxu0 0.0
    %3747 = vmatpush1.xpose.msra.mxu0 0.0
    %3748 = vmatprep.subr.mxu0 0.0
    %3749 = vmatpush1.xpose.msra.mxu0 0.0
    %3750 = vmatprep.subr.mxu0 0.0
    %3751 = vmatpush1.xpose.msra.mxu0 0.0
    %3752 = vmatprep.subr.mxu0 0.0
    %3753 = vmatpush1.xpose.msra.mxu0 0.0
    %3754 = vmatprep.subr.mxu0 0.0
    %3755 = vmatpush1.xpose.msra.mxu0 0.0
    %3756 = vmatprep.subr.mxu0 0.0
    %3757 = vmatpush1.xpose.msra.mxu0 0.0
    %3758 = vmatprep.subr.mxu0 0.0
    %3759 = vmatpush1.xpose.msra.mxu0 0.0
    %3760 = vmatprep.subr.mxu0 0.0
    %3761 = vmatpush1.xpose.msra.mxu0 0.0
    %3762 = vmatprep.subr.mxu0 0.0
    %3763 = vmatpush1.xpose.msra.mxu0 0.0
    %3764 = vmatprep.subr.mxu0 0.0
    %3765 = vmatpush1.xpose.msra.mxu0 0.0
    %3766 = vmatprep.subr.mxu0 0.0
    %3767 = vmatpush1.xpose.msra.mxu0 0.0
    %3768 = vmatprep.subr.mxu0 0.0
    %3769 = vmatpush1.xpose.msra.mxu0 0.0
    %3770 = vmatprep.subr.mxu0 0.0
    %3771 = vmatpush1.xpose.msra.mxu0 0.0
    %3772 = vmatprep.subr.mxu0 0.0
    %3773 = vmatpush1.xpose.msra.mxu0 0.0
    %3774 = vmatprep.subr.mxu0 0.0
    %3775 = vmatpush1.xpose.msra.mxu0 0.0
    %3776 = vmatprep.subr.mxu0 0.0
    %3777 = vmatpush1.xpose.msra.mxu0 0.0
    %3778 = vmatprep.mubr.f32.mxu0 0.0
    %3779 = vmatmul.mubr.f32.gmra.mrb[0].mxu0 %v3708
    %v3780 = vpop.f32.mrb[0].mxu0
    %v3781 = vadd.f32 0.0, %v3780
    %v3782 = vpop.f32.mrb[0].mxu0
    %3783 = vdwg.mxu0
    %3784 = vrot.lane.b32.xlu0 %v2241, 32
    %v3785 = vpop.permute.xlu0 %3784
    %3786 = vrot.lane.b32.xlu0 %v2108, 32
    %v3787 = vpop.permute.xlu0 %3786
    %3788 = vrot.lane.b32.xlu0 %v2113, 32
    %v3789 = vpop.permute.xlu0 %3788
    %v3790 = vsel %vm2242, %v3785, 0
    %v3792 = vsel %vm2242, %v3787, 0
    %v3794 = vsel %vm2242, %v3789, 0
    %3796 = vmatprep.subr.mxu0 0.0
    %3797 = vmatpush1.xpose.msra.mxu0 %v3792
    %3798 = vmatprep.subr.mxu0 0.0
    %3799 = vmatpush1.xpose.msra.mxu0 %v3794
    %3800 = vmatprep.subr.mxu0 0.0
    %3801 = vmatpush1.xpose.msra.mxu0 0.0
    %3802 = vmatprep.subr.mxu0 0.0
    %3803 = vmatpush1.xpose.msra.mxu0 0.0
    %3804 = vmatprep.subr.mxu0 0.0
    %3805 = vmatpush1.xpose.msra.mxu0 0.0
    %3806 = vmatprep.subr.mxu0 0.0
    %3807 = vmatpush1.xpose.msra.mxu0 0.0
    %3808 = vmatprep.subr.mxu0 0.0
    %3809 = vmatpush1.xpose.msra.mxu0 0.0
    %3810 = vmatprep.subr.mxu0 0.0
    %3811 = vmatpush1.xpose.msra.mxu0 0.0
    %3812 = vmatprep.subr.mxu0 0.0
    %3813 = vmatpush1.xpose.msra.mxu0 0.0
    %3814 = vmatprep.subr.mxu0 0.0
    %3815 = vmatpush1.xpose.msra.mxu0 0.0
    %3816 = vmatprep.subr.mxu0 0.0
    %3817 = vmatpush1.xpose.msra.mxu0 0.0
    %3818 = vmatprep.subr.mxu0 0.0
    %3819 = vmatpush1.xpose.msra.mxu0 0.0
    %3820 = vmatprep.subr.mxu0 0.0
    %3821 = vmatpush1.xpose.msra.mxu0 0.0
    %3822 = vmatprep.subr.mxu0 0.0
    %3823 = vmatpush1.xpose.msra.mxu0 0.0
    %3824 = vmatprep.subr.mxu0 0.0
    %3825 = vmatpush1.xpose.msra.mxu0 0.0
    %3826 = vmatprep.subr.mxu0 0.0
    %3827 = vmatpush1.xpose.msra.mxu0 0.0
    %3828 = vmatprep.subr.mxu0 0.0
    %3829 = vmatpush1.xpose.msra.mxu0 0.0
    %3830 = vmatprep.subr.mxu0 0.0
    %3831 = vmatpush1.xpose.msra.mxu0 0.0
    %3832 = vmatprep.subr.mxu0 0.0
    %3833 = vmatpush1.xpose.msra.mxu0 0.0
    %3834 = vmatprep.subr.mxu0 0.0
    %3835 = vmatpush1.xpose.msra.mxu0 0.0
    %3836 = vmatprep.subr.mxu0 0.0
    %3837 = vmatpush1.xpose.msra.mxu0 0.0
    %3838 = vmatprep.subr.mxu0 0.0
    %3839 = vmatpush1.xpose.msra.mxu0 0.0
    %3840 = vmatprep.subr.mxu0 0.0
    %3841 = vmatpush1.xpose.msra.mxu0 0.0
    %3842 = vmatprep.subr.mxu0 0.0
    %3843 = vmatpush1.xpose.msra.mxu0 0.0
    %3844 = vmatprep.subr.mxu0 0.0
    %3845 = vmatpush1.xpose.msra.mxu0 0.0
    %3846 = vmatprep.subr.mxu0 0.0
    %3847 = vmatpush1.xpose.msra.mxu0 0.0
    %3848 = vmatprep.subr.mxu0 0.0
    %3849 = vmatpush1.xpose.msra.mxu0 0.0
    %3850 = vmatprep.subr.mxu0 0.0
    %3851 = vmatpush1.xpose.msra.mxu0 0.0
    %3852 = vmatprep.subr.mxu0 0.0
    %3853 = vmatpush1.xpose.msra.mxu0 0.0
    %3854 = vmatprep.subr.mxu0 0.0
    %3855 = vmatpush1.xpose.msra.mxu0 0.0
    %3856 = vmatprep.subr.mxu0 0.0
    %3857 = vmatpush1.xpose.msra.mxu0 0.0
    %3858 = vmatprep.subr.mxu0 0.0
    %3859 = vmatpush1.xpose.msra.mxu0 0.0
    %3860 = vmatprep.mubr.f32.mxu0 0.0
    %3861 = vmatmul.mubr.f32.gmra.mrb[0].mxu0 %v3790
    %v3862 = vpop.f32.mrb[0].mxu0
    %v3863 = vadd.f32 0.0, %v3862
    %v3864 = vpop.f32.mrb[0].mxu0
    %3865 = vdwg.mxu0
    %v3866 = vsel %vm2401, %v3781, -inf
    %3867 = vmax.xlane.f32.xlu0 %v3866
    %v3868 = vpop.xlane.xlu0 %3867
    %v3869 = vsel %vm2401, %v3863, -inf
    %3870 = vmax.xlane.f32.xlu0 %v3869
    %v3871 = vpop.xlane.xlu0 %3870
    %v3872 = vsub.f32 %v3781, %v3868
    %v3873 = vsub.f32 %v3863, %v3871
    %v3874 = vmul.f32 %v3872, 1.442695
    %v3875 = vpow.pop %v3874
    %v3876 = vmul.f32 %v3873, 1.442695
    %v3877 = vpow.pop %v3876
    %v3878 = vsel %vm2401, %v3875, 0.0
    %3879 = vadd.xlane.f32.xlu0 %v3878
    %v3880 = vpop.xlane.xlu0 %3879
    %v3881 = vsel %vm2401, %v3877, 0.0
    %3882 = vadd.xlane.f32.xlu0 %v3881
    %v3883 = vpop.xlane.xlu0 %3882
    %v3884 = vrcp.pop %v3880
    %v3885 = vrcp.pop %v3883
    %v3886 = vmul.f32 %v3875, %v3884
    %v3887 = vmul.f32 %v3877, %v3885
    %3888 = vrot.lane.b32.xlu0 %v2206, 32
    %v3889 = vpop.permute.xlu0 %3888
    %3890 = vrot.lane.b32.xlu0 %v2211, 32
    %v3891 = vpop.permute.xlu0 %3890
    %v3895 = vsel %vm2401, %v3886, 0
    %3897 = vmatprep.subr.mxu0 0.0
    %3898 = vmatpush1.msra.mxu0 %v3889
    %3899 = vmatprep.subr.mxu0 0.0
    %3900 = vmatpush1.msra.mxu0 %v3891
    %3901 = vmatprep.subr.mxu0 0.0
    %3902 = vmatpush1.msra.mxu0 0.0
    %3903 = vmatprep.subr.mxu0 0.0
    %3904 = vmatpush1.msra.mxu0 0.0
    %3905 = vmatprep.subr.mxu0 0.0
    %3906 = vmatpush1.msra.mxu0 0.0
    %3907 = vmatprep.subr.mxu0 0.0
    %3908 = vmatpush1.msra.mxu0 0.0
    %3909 = vmatprep.subr.mxu0 0.0
    %3910 = vmatpush1.msra.mxu0 0.0
    %3911 = vmatprep.subr.mxu0 0.0
    %3912 = vmatpush1.msra.mxu0 0.0
    %3913 = vmatprep.subr.mxu0 0.0
    %3914 = vmatpush1.msra.mxu0 0.0
    %3915 = vmatprep.subr.mxu0 0.0
    %3916 = vmatpush1.msra.mxu0 0.0
    %3917 = vmatprep.subr.mxu0 0.0
    %3918 = vmatpush1.msra.mxu0 0.0
    %3919 = vmatprep.subr.mxu0 0.0
    %3920 = vmatpush1.msra.mxu0 0.0
    %3921 = vmatprep.subr.mxu0 0.0
    %3922 = vmatpush1.msra.mxu0 0.0
    %3923 = vmatprep.subr.mxu0 0.0
    %3924 = vmatpush1.msra.mxu0 0.0
    %3925 = vmatprep.subr.mxu0 0.0
    %3926 = vmatpush1.msra.mxu0 0.0
    %3927 = vmatprep.subr.mxu0 0.0
    %3928 = vmatpush1.msra.mxu0 0.0
    %3929 = vmatprep.subr.mxu0 0.0
    %3930 = vmatpush1.msra.mxu0 0.0
    %3931 = vmatprep.subr.mxu0 0.0
    %3932 = vmatpush1.msra.mxu0 0.0
    %3933 = vmatprep.subr.mxu0 0.0
    %3934 = vmatpush1.msra.mxu0 0.0
    %3935 = vmatprep.subr.mxu0 0.0
    %3936 = vmatpush1.msra.mxu0 0.0
    %3937 = vmatprep.subr.mxu0 0.0
    %3938 = vmatpush1.msra.mxu0 0.0
    %3939 = vmatprep.subr.mxu0 0.0
    %3940 = vmatpush1.msra.mxu0 0.0
    %3941 = vmatprep.subr.mxu0 0.0
    %3942 = vmatpush1.msra.mxu0 0.0
    %3943 = vmatprep.subr.mxu0 0.0
    %3944 = vmatpush1.msra.mxu0 0.0
    %3945 = vmatprep.subr.mxu0 0.0
    %3946 = vmatpush1.msra.mxu0 0.0
    %3947 = vmatprep.subr.mxu0 0.0
    %3948 = vmatpush1.msra.mxu0 0.0
    %3949 = vmatprep.subr.mxu0 0.0
    %3950 = vmatpush1.msra.mxu0 0.0
    %3951 = vmatprep.subr.mxu0 0.0
    %3952 = vmatpush1.msra.mxu0 0.0
    %3953 = vmatprep.subr.mxu0 0.0
    %3954 = vmatpush1.msra.mxu0 0.0
    %3955 = vmatprep.subr.mxu0 0.0
    %3956 = vmatpush1.msra.mxu0 0.0
    %3957 = vmatprep.subr.mxu0 0.0
    %3958 = vmatpush1.msra.mxu0 0.0
    %3959 = vmatprep.subr.mxu0 0.0
    %3960 = vmatpush1.msra.mxu0 0.0
    %3961 = vmatprep.mubr.f32.mxu0 0.0
    %3962 = vmatmul.mubr.f32.gmra.mrb[0].mxu0 %v3895
    %v3963 = vpop.f32.mrb[0].mxu0
    %v3964 = vadd.f32 0.0, %v3963
    %v3965 = vpop.f32.mrb[0].mxu0
    %3966 = vdwg.mxu0
    %3967 = vrot.lane.b32.xlu0 %v2216, 32
    %v3968 = vpop.permute.xlu0 %3967
    %3969 = vrot.lane.b32.xlu0 %v2221, 32
    %v3970 = vpop.permute.xlu0 %3969
    %v3974 = vsel %vm2401, %v3887, 0
    %3976 = vmatprep.subr.mxu0 0.0
    %3977 = vmatpush1.msra.mxu0 %v3968
    %3978 = vmatprep.subr.mxu0 0.0
    %3979 = vmatpush1.msra.mxu0 %v3970
    %3980 = vmatprep.subr.mxu0 0.0
    %3981 = vmatpush1.msra.mxu0 0.0
    %3982 = vmatprep.subr.mxu0 0.0
    %3983 = vmatpush1.msra.mxu0 0.0
    %3984 = vmatprep.subr.mxu0 0.0
    %3985 = vmatpush1.msra.mxu0 0.0
    %3986 = vmatprep.subr.mxu0 0.0
    %3987 = vmatpush1.msra.mxu0 0.0
    %3988 = vmatprep.subr.mxu0 0.0
    %3989 = vmatpush1.msra.mxu0 0.0
    %3990 = vmatprep.subr.mxu0 0.0
    %3991 = vmatpush1.msra.mxu0 0.0
    %3992 = vmatprep.subr.mxu0 0.0
    %3993 = vmatpush1.msra.mxu0 0.0
    %3994 = vmatprep.subr.mxu0 0.0
    %3995 = vmatpush1.msra.mxu0 0.0
    %3996 = vmatprep.subr.mxu0 0.0
    %3997 = vmatpush1.msra.mxu0 0.0
    %3998 = vmatprep.subr.mxu0 0.0
    %3999 = vmatpush1.msra.mxu0 0.0
    %4000 = vmatprep.subr.mxu0 0.0
    %4001 = vmatpush1.msra.mxu0 0.0
    %4002 = vmatprep.subr.mxu0 0.0
    %4003 = vmatpush1.msra.mxu0 0.0
    %4004 = vmatprep.subr.mxu0 0.0
    %4005 = vmatpush1.msra.mxu0 0.0
    %4006 = vmatprep.subr.mxu0 0.0
    %4007 = vmatpush1.msra.mxu0 0.0
    %4008 = vmatprep.subr.mxu0 0.0
    %4009 = vmatpush1.msra.mxu0 0.0
    %4010 = vmatprep.subr.mxu0 0.0
    %4011 = vmatpush1.msra.mxu0 0.0
    %4012 = vmatprep.subr.mxu0 0.0
    %4013 = vmatpush1.msra.mxu0 0.0
    %4014 = vmatprep.subr.mxu0 0.0
    %4015 = vmatpush1.msra.mxu0 0.0
    %4016 = vmatprep.subr.mxu0 0.0
    %4017 = vmatpush1.msra.mxu0 0.0
    %4018 = vmatprep.subr.mxu0 0.0
    %4019 = vmatpush1.msra.mxu0 0.0
    %4020 = vmatprep.subr.mxu0 0.0
    %4021 = vmatpush1.msra.mxu0 0.0
    %4022 = vmatprep.subr.mxu0 0.0
    %4023 = vmatpush1.msra.mxu0 0.0
    %4024 = vmatprep.subr.mxu0 0.0
    %4025 = vmatpush1.msra.mxu0 0.0
    %4026 = vmatprep.subr.mxu0 0.0
    %4027 = vmatpush1.msra.mxu0 0.0
    %4028 = vmatprep.subr.mxu0 0.0
    %4029 = vmatpush1.msra.mxu0 0.0
    %4030 = vmatprep.subr.mxu0 0.0
    %4031 = vmatpush1.msra.mxu0 0.0
    %4032 = vmatprep.subr.mxu0 0.0
    %4033 = vmatpush1.msra.mxu0 0.0
    %4034 = vmatprep.subr.mxu0 0.0
    %4035 = vmatpush1.msra.mxu0 0.0
    %4036 = vmatprep.subr.mxu0 0.0
    %4037 = vmatpush1.msra.mxu0 0.0
    %4038 = vmatprep.subr.mxu0 0.0
    %4039 = vmatpush1.msra.mxu0 0.0
    %4040 = vmatprep.mubr.f32.mxu0 0.0
    %4041 = vmatmul.mubr.f32.gmra.mrb[0].mxu0 %v3974
    %v4042 = vpop.f32.mrb[0].mxu0
    %v4043 = vadd.f32 0.0, %v4042
    %v4044 = vpop.f32.mrb[0].mxu0
    %4045 = vdwg.mxu0
    %v4047 = vsel %vm2242, %v3964, 0
    %4049 = vmatprep.subr.mxu0 0.0
    %4050 = vmatpush1.msra.mxu0 %v2236
    %4051 = vmatprep.subr.mxu0 0.0
    %4052 = vmatpush1.msra.mxu0 %v2237
    %4053 = vmatprep.subr.mxu0 0.0
    %4054 = vmatpush1.msra.mxu0 %v2238
    %4055 = vmatprep.subr.mxu0 0.0
    %4056 = vmatpush1.msra.mxu0 %v2239
    %4057 = vmatprep.subr.mxu0 0.0
    %4058 = vmatpush1.msra.mxu0 0.0
    %4059 = vmatprep.subr.mxu0 0.0
    %4060 = vmatpush1.msra.mxu0 0.0
    %4061 = vmatprep.subr.mxu0 0.0
    %4062 = vmatpush1.msra.mxu0 0.0
    %4063 = vmatprep.subr.mxu0 0.0
    %4064 = vmatpush1.msra.mxu0 0.0
    %4065 = vmatprep.subr.mxu0 0.0
    %4066 = vmatpush1.msra.mxu0 0.0
    %4067 = vmatprep.subr.mxu0 0.0
    %4068 = vmatpush1.msra.mxu0 0.0
    %4069 = vmatprep.subr.mxu0 0.0
    %4070 = vmatpush1.msra.mxu0 0.0
    %4071 = vmatprep.subr.mxu0 0.0
    %4072 = vmatpush1.msra.mxu0 0.0
    %4073 = vmatprep.subr.mxu0 0.0
    %4074 = vmatpush1.msra.mxu0 0.0
    %4075 = vmatprep.subr.mxu0 0.0
    %4076 = vmatpush1.msra.mxu0 0.0
    %4077 = vmatprep.subr.mxu0 0.0
    %4078 = vmatpush1.msra.mxu0 0.0
    %4079 = vmatprep.subr.mxu0 0.0
    %4080 = vmatpush1.msra.mxu0 0.0
    %4081 = vmatprep.subr.mxu0 0.0
    %4082 = vmatpush1.msra.mxu0 0.0
    %4083 = vmatprep.subr.mxu0 0.0
    %4084 = vmatpush1.msra.mxu0 0.0
    %4085 = vmatprep.subr.mxu0 0.0
    %4086 = vmatpush1.msra.mxu0 0.0
    %4087 = vmatprep.subr.mxu0 0.0
    %4088 = vmatpush1.msra.mxu0 0.0
    %4089 = vmatprep.subr.mxu0 0.0
    %4090 = vmatpush1.msra.mxu0 0.0
    %4091 = vmatprep.subr.mxu0 0.0
    %4092 = vmatpush1.msra.mxu0 0.0
    %4093 = vmatprep.subr.mxu0 0.0
    %4094 = vmatpush1.msra.mxu0 0.0
    %4095 = vmatprep.subr.mxu0 0.0
    %4096 = vmatpush1.msra.mxu0 0.0
    %4097 = vmatprep.subr.mxu0 0.0
    %4098 = vmatpush1.msra.mxu0 0.0
    %4099 = vmatprep.subr.mxu0 0.0
    %4100 = vmatpush1.msra.mxu0 0.0
    %4101 = vmatprep.subr.mxu0 0.0
    %4102 = vmatpush1.msra.mxu0 0.0
    %4103 = vmatprep.subr.mxu0 0.0
    %4104 = vmatpush1.msra.mxu0 0.0
    %4105 = vmatprep.subr.mxu0 0.0
    %4106 = vmatpush1.msra.mxu0 0.0
    %4107 = vmatprep.subr.mxu0 0.0
    %4108 = vmatpush1.msra.mxu0 0.0
    %4109 = vmatprep.subr.mxu0 0.0
    %4110 = vmatpush1.msra.mxu0 0.0
    %4111 = vmatprep.subr.mxu0 0.0
    %4112 = vmatpush1.msra.mxu0 0.0
    %4113 = vmatprep.mubr.f32.mxu0 0.0
    %4114 = vmatmul.mubr.f32.gmra.mrb[0].mxu0 %v4047
    %v4115 = vpop.f32.mrb[0].mxu0
    %v4116 = vadd.f32 0.0, %v4115
    %v4117 = vpop.f32.mrb[0].mxu0
    %4118 = vdwg.mxu0
    %v4120 = vsel %vm2242, %v4043, 0
    %4122 = vmatprep.subr.mxu0 0.0
    %4123 = vmatpush1.msra.mxu0 %v2236
    %4124 = vmatprep.subr.mxu0 0.0
    %4125 = vmatpush1.msra.mxu0 %v2237
    %4126 = vmatprep.subr.mxu0 0.0
    %4127 = vmatpush1.msra.mxu0 %v2238
    %4128 = vmatprep.subr.mxu0 0.0
    %4129 = vmatpush1.msra.mxu0 %v2239
    %4130 = vmatprep.subr.mxu0 0.0
    %4131 = vmatpush1.msra.mxu0 0.0
    %4132 = vmatprep.subr.mxu0 0.0
    %4133 = vmatpush1.msra.mxu0 0.0
    %4134 = vmatprep.subr.mxu0 0.0
    %4135 = vmatpush1.msra.mxu0 0.0
    %4136 = vmatprep.subr.mxu0 0.0
    %4137 = vmatpush1.msra.mxu0 0.0
    %4138 = vmatprep.subr.mxu0 0.0
    %4139 = vmatpush1.msra.mxu0 0.0
    %4140 = vmatprep.subr.mxu0 0.0
    %4141 = vmatpush1.msra.mxu0 0.0
    %4142 = vmatprep.subr.mxu0 0.0
    %4143 = vmatpush1.msra.mxu0 0.0
    %4144 = vmatprep.subr.mxu0 0.0
    %4145 = vmatpush1.msra.mxu0 0.0
    %4146 = vmatprep.subr.mxu0 0.0
    %4147 = vmatpush1.msra.mxu0 0.0
    %4148 = vmatprep.subr.mxu0 0.0
    %4149 = vmatpush1.msra.mxu0 0.0
    %4150 = vmatprep.subr.mxu0 0.0
    %4151 = vmatpush1.msra.mxu0 0.0
    %4152 = vmatprep.subr.mxu0 0.0
    %4153 = vmatpush1.msra.mxu0 0.0
    %4154 = vmatprep.subr.mxu0 0.0
    %4155 = vmatpush1.msra.mxu0 0.0
    %4156 = vmatprep.subr.mxu0 0.0
    %4157 = vmatpush1.msra.mxu0 0.0
    %4158 = vmatprep.subr.mxu0 0.0
    %4159 = vmatpush1.msra.mxu0 0.0
    %4160 = vmatprep.subr.mxu0 0.0
    %4161 = vmatpush1.msra.mxu0 0.0
    %4162 = vmatprep.subr.mxu0 0.0
    %4163 = vmatpush1.msra.mxu0 0.0
    %4164 = vmatprep.subr.mxu0 0.0
    %4165 = vmatpush1.msra.mxu0 0.0
    %4166 = vmatprep.subr.mxu0 0.0
    %4167 = vmatpush1.msra.mxu0 0.0
    %4168 = vmatprep.subr.mxu0 0.0
    %4169 = vmatpush1.msra.mxu0 0.0
    %4170 = vmatprep.subr.mxu0 0.0
    %4171 = vmatpush1.msra.mxu0 0.0
    %4172 = vmatprep.subr.mxu0 0.0
    %4173 = vmatpush1.msra.mxu0 0.0
    %4174 = vmatprep.subr.mxu0 0.0
    %4175 = vmatpush1.msra.mxu0 0.0
    %4176 = vmatprep.subr.mxu0 0.0
    %4177 = vmatpush1.msra.mxu0 0.0
    %4178 = vmatprep.subr.mxu0 0.0
    %4179 = vmatpush1.msra.mxu0 0.0
    %4180 = vmatprep.subr.mxu0 0.0
    %4181 = vmatpush1.msra.mxu0 0.0
    %4182 = vmatprep.subr.mxu0 0.0
    %4183 = vmatpush1.msra.mxu0 0.0
    %4184 = vmatprep.subr.mxu0 0.0
    %4185 = vmatpush1.msra.mxu0 0.0
    %4186 = vmatprep.mubr.f32.mxu0 0.0
    %4187 = vmatmul.mubr.f32.gmra.mrb[0].mxu0 %v4120
    %v4188 = vpop.f32.mrb[0].mxu0
    %v4189 = vadd.f32 0.0, %v4188
    %v4190 = vpop.f32.mrb[0].mxu0
    %4191 = vdwg.mxu0
    %v4192 = vadd.f32 %v3700, %v4116
    %v4193 = vadd.f32 %v3701, %v4189
    %v4194 = vld [vmem:[#allocation40] sm:$0x1]
    %v4196 = vlaneseq
    %v4197 = vshrl.u32 %v4196, 7
    %v4198 = vsub.s32 0, %v4197
    %v4199 = vrot.slane %v4194, %v4198
    %v4201 = vadd.f32 %v4192, %v4199
    %v4202 = vadd.f32 %v4193, %v4199
    %v4203 = vld [vmem:[#allocation41] sm:$0xff]
    %v4204 = vld [vmem:[#allocation41 + $0x8] sm:$0xff]
    %v4205 = vld [vmem:[#allocation41 + $0x10] sm:$0xff]
    %v4206 = vld [vmem:[#allocation41 + $0x18] sm:$0xff]
    %v4207 = vld [vmem:[#allocation41 + $0x20] sm:$0xff]
    %v4208 = vld [vmem:[#allocation41 + $0x28] sm:$0xff]
    %v4209 = vld [vmem:[#allocation41 + $0x30] sm:$0xff]
    %v4210 = vld [vmem:[#allocation41 + $0x38] sm:$0xff]
    %v4211 = vld [vmem:[#allocation41 + $0x40] sm:$0xff]
    %v4212 = vld [vmem:[#allocation41 + $0x48] sm:$0xff]
    %v4213 = vld [vmem:[#allocation41 + $0x50] sm:$0xff]
    %v4214 = vld [vmem:[#allocation41 + $0x58] sm:$0xff]
    %v4215 = vld [vmem:[#allocation41 + $0x60] sm:$0xff]
    %v4216 = vld [vmem:[#allocation41 + $0x68] sm:$0xff]
    %v4217 = vld [vmem:[#allocation41 + $0x70] sm:$0xff]
    %v4218 = vld [vmem:[#allocation41 + $0x78] sm:$0xff]
    %v4219 = vld [vmem:[#allocation43] sm:$0xff]
    %v4220 = vld [vmem:[#allocation43 + $0x8] sm:$0xff]
    %v4221 = vld [vmem:[#allocation43 + $0x10] sm:$0xff]
    %v4222 = vld [vmem:[#allocation43 + $0x18] sm:$0xff]
    %v4223 = vld [vmem:[#allocation43 + $0x20] sm:$0xff]
    %v4224 = vld [vmem:[#allocation43 + $0x28] sm:$0xff]
    %v4225 = vld [vmem:[#allocation43 + $0x30] sm:$0xff]
    %v4226 = vld [vmem:[#allocation43 + $0x38] sm:$0xff]
    %v4227 = vld [vmem:[#allocation43 + $0x40] sm:$0xff]
    %v4228 = vld [vmem:[#allocation43 + $0x48] sm:$0xff]
    %v4229 = vld [vmem:[#allocation43 + $0x50] sm:$0xff]
    %v4230 = vld [vmem:[#allocation43 + $0x58] sm:$0xff]
    %v4231 = vld [vmem:[#allocation43 + $0x60] sm:$0xff]
    %v4232 = vld [vmem:[#allocation43 + $0x68] sm:$0xff]
    %v4233 = vld [vmem:[#allocation43 + $0x70] sm:$0xff]
    %v4234 = vld [vmem:[#allocation43 + $0x78] sm:$0xff]
    %4235 = vmatprep.subr.mxu0 0.0
    %4236 = vmatpush1.msra.mxu0 %v4219
    %4237 = vmatprep.subr.mxu0 0.0
    %4238 = vmatpush1.msra.mxu0 %v4220
    %4239 = vmatprep.subr.mxu0 0.0
    %4240 = vmatpush1.msra.mxu0 %v4221
    %4241 = vmatprep.subr.mxu0 0.0
    %4242 = vmatpush1.msra.mxu0 %v4222
    %4243 = vmatprep.subr.mxu0 0.0
    %4244 = vmatpush1.msra.mxu0 %v4223
    %4245 = vmatprep.subr.mxu0 0.0
    %4246 = vmatpush1.msra.mxu0 %v4224
    %4247 = vmatprep.subr.mxu0 0.0
    %4248 = vmatpush1.msra.mxu0 %v4225
    %4249 = vmatprep.subr.mxu0 0.0
    %4250 = vmatpush1.msra.mxu0 %v4226
    %4251 = vmatprep.subr.mxu0 0.0
    %4252 = vmatpush1.msra.mxu0 %v4227
    %4253 = vmatprep.subr.mxu0 0.0
    %4254 = vmatpush1.msra.mxu0 %v4228
    %4255 = vmatprep.subr.mxu0 0.0
    %4256 = vmatpush1.msra.mxu0 %v4229
    %4257 = vmatprep.subr.mxu0 0.0
    %4258 = vmatpush1.msra.mxu0 %v4230
    %4259 = vmatprep.subr.mxu0 0.0
    %4260 = vmatpush1.msra.mxu0 %v4231
    %4261 = vmatprep.subr.mxu0 0.0
    %4262 = vmatpush1.msra.mxu0 %v4232
    %4263 = vmatprep.subr.mxu0 0.0
    %4264 = vmatpush1.msra.mxu0 %v4233
    %4265 = vmatprep.subr.mxu0 0.0
    %4266 = vmatpush1.msra.mxu0 %v4234
    %4267 = vmatprep.subr.mxu0 0.0
    %4268 = vmatpush1.msra.mxu0 0.0
    %4269 = vmatprep.subr.mxu0 0.0
    %4270 = vmatpush1.msra.mxu0 0.0
    %4271 = vmatprep.subr.mxu0 0.0
    %4272 = vmatpush1.msra.mxu0 0.0
    %4273 = vmatprep.subr.mxu0 0.0
    %4274 = vmatpush1.msra.mxu0 0.0
    %4275 = vmatprep.subr.mxu0 0.0
    %4276 = vmatpush1.msra.mxu0 0.0
    %4277 = vmatprep.subr.mxu0 0.0
    %4278 = vmatpush1.msra.mxu0 0.0
    %4279 = vmatprep.subr.mxu0 0.0
    %4280 = vmatpush1.msra.mxu0 0.0
    %4281 = vmatprep.subr.mxu0 0.0
    %4282 = vmatpush1.msra.mxu0 0.0
    %4283 = vmatprep.subr.mxu0 0.0
    %4284 = vmatpush1.msra.mxu0 0.0
    %4285 = vmatprep.subr.mxu0 0.0
    %4286 = vmatpush1.msra.mxu0 0.0
    %4287 = vmatprep.subr.mxu0 0.0
    %4288 = vmatpush1.msra.mxu0 0.0
    %4289 = vmatprep.subr.mxu0 0.0
    %4290 = vmatpush1.msra.mxu0 0.0
    %4291 = vmatprep.subr.mxu0 0.0
    %4292 = vmatpush1.msra.mxu0 0.0
    %4293 = vmatprep.subr.mxu0 0.0
    %4294 = vmatpush1.msra.mxu0 0.0
    %4295 = vmatprep.subr.mxu0 0.0
    %4296 = vmatpush1.msra.mxu0 0.0
    %4297 = vmatprep.subr.mxu0 0.0
    %4298 = vmatpush1.msra.mxu0 0.0
    %4299 = vmatprep.mubr.f32.mxu0 0.0
    %4300 = vmatmul.mubr.f32.gmra.mrb[0].mxu0 %v4201
    %v4301 = vpop.f32.mrb[0].mxu0
    %v4302 = vadd.f32 0.0, %v4301
    %v4303 = vpop.f32.mrb[0].mxu0
    %4304 = vmatprep.mubr.f32.mxu0 0.0
    %4305 = vmatmul.mubr.f32.gmra.mrb[0].mxu0 %v4202
    %v4306 = vpop.f32.mrb[0].mxu0
    %v4307 = vadd.f32 0.0, %v4306
    %v4308 = vpop.f32.mrb[0].mxu0
    %4309 = vdwg.mxu0
    %4310 = vmatprep.subr.mxu0 0.0
    %4311 = vmatpush1.msra.mxu0 %v4203
    %4312 = vmatprep.subr.mxu0 0.0
    %4313 = vmatpush1.msra.mxu0 %v4204
    %4314 = vmatprep.subr.mxu0 0.0
    %4315 = vmatpush1.msra.mxu0 %v4205
    %4316 = vmatprep.subr.mxu0 0.0
    %4317 = vmatpush1.msra.mxu0 %v4206
    %4318 = vmatprep.subr.mxu0 0.0
    %4319 = vmatpush1.msra.mxu0 %v4207
    %4320 = vmatprep.subr.mxu0 0.0
    %4321 = vmatpush1.msra.mxu0 %v4208
    %4322 = vmatprep.subr.mxu0 0.0
    %4323 = vmatpush1.msra.mxu0 %v4209
    %4324 = vmatprep.subr.mxu0 0.0
    %4325 = vmatpush1.msra.mxu0 %v4210
    %4326 = vmatprep.subr.mxu0 0.0
    %4327 = vmatpush1.msra.mxu0 %v4211
    %4328 = vmatprep.subr.mxu0 0.0
    %4329 = vmatpush1.msra.mxu0 %v4212
    %4330 = vmatprep.subr.mxu0 0.0
    %4331 = vmatpush1.msra.mxu0 %v4213
    %4332 = vmatprep.subr.mxu0 0.0
    %4333 = vmatpush1.msra.mxu0 %v4214
    %4334 = vmatprep.subr.mxu0 0.0
    %4335 = vmatpush1.msra.mxu0 %v4215
    %4336 = vmatprep.subr.mxu0 0.0
    %4337 = vmatpush1.msra.mxu0 %v4216
    %4338 = vmatprep.subr.mxu0 0.0
    %4339 = vmatpush1.msra.mxu0 %v4217
    %4340 = vmatprep.subr.mxu0 0.0
    %4341 = vmatpush1.msra.mxu0 %v4218
    %4342 = vmatprep.subr.mxu0 0.0
    %4343 = vmatpush1.msra.mxu0 0.0
    %4344 = vmatprep.subr.mxu0 0.0
    %4345 = vmatpush1.msra.mxu0 0.0
    %4346 = vmatprep.subr.mxu0 0.0
    %4347 = vmatpush1.msra.mxu0 0.0
    %4348 = vmatprep.subr.mxu0 0.0
    %4349 = vmatpush1.msra.mxu0 0.0
    %4350 = vmatprep.subr.mxu0 0.0
    %4351 = vmatpush1.msra.mxu0 0.0
    %4352 = vmatprep.subr.mxu0 0.0
    %4353 = vmatpush1.msra.mxu0 0.0
    %4354 = vmatprep.subr.mxu0 0.0
    %4355 = vmatpush1.msra.mxu0 0.0
    %4356 = vmatprep.subr.mxu0 0.0
    %4357 = vmatpush1.msra.mxu0 0.0
    %4358 = vmatprep.subr.mxu0 0.0
    %4359 = vmatpush1.msra.mxu0 0.0
    %4360 = vmatprep.subr.mxu0 0.0
    %4361 = vmatpush1.msra.mxu0 0.0
    %4362 = vmatprep.subr.mxu0 0.0
    %4363 = vmatpush1.msra.mxu0 0.0
    %4364 = vmatprep.subr.mxu0 0.0
    %4365 = vmatpush1.msra.mxu0 0.0
    %4366 = vmatprep.subr.mxu0 0.0
    %4367 = vmatpush1.msra.mxu0 0.0
    %4368 = vmatprep.subr.mxu0 0.0
    %4369 = vmatpush1.msra.mxu0 0.0
    %4370 = vmatprep.subr.mxu0 0.0
    %4371 = vmatpush1.msra.mxu0 0.0
    %4372 = vmatprep.subr.mxu0 0.0
    %4373 = vmatpush1.msra.mxu0 0.0
    %4374 = vmatprep.mubr.f32.mxu0 0.0
    %4375 = vmatmul.mubr.f32.gmra.mrb[0].mxu0 %v1463
    %v4376 = vpop.f32.mrb[0].mxu0
    %v4377 = vadd.f32 %v4302, %v4376
    %v4378 = vpop.f32.mrb[0].mxu0
    %4379 = vmatprep.mubr.f32.mxu0 0.0
    %4380 = vmatmul.mubr.f32.gmra.mrb[0].mxu0 %v1464
    %v4381 = vpop.f32.mrb[0].mxu0
    %v4382 = vadd.f32 %v4307, %v4381
    %v4383 = vpop.f32.mrb[0].mxu0
    %4384 = vdwg.mxu0
    %v4385 = vld [vmem:[#allocation44] sm:$0x1]
    %v4387 = vlaneseq
    %v4388 = vshrl.u32 %v4387, 7
    %v4389 = vsub.s32 0, %v4388
    %v4390 = vrot.slane %v4385, %v4389
    %v4392 = vadd.f32 %v4377, %v4390
    %v4393 = vadd.f32 %v4382, %v4390
    %4394 = vadd.xlane.f32.xlu0 %v4392
    %v4395 = vpop.xlane.xlu0 %4394
    %4396 = vadd.xlane.f32.xlu0 %v4393
    %v4397 = vpop.xlane.xlu0 %4396
    %v4398 = vmul.f32 %v4395, %v1428
    %v4399 = vmul.f32 %v4397, %v1428
    %v4400 = vsub.f32 %v4392, %v4398
    %v4401 = vsub.f32 %v4393, %v4399
    %v4402 = vmul.f32 %v4400, %v4400
    %v4403 = vmul.f32 %v4401, %v4401
    %4404 = vadd.xlane.f32.xlu0 %v4402
    %v4405 = vpop.xlane.xlu0 %4404
    %4406 = vadd.xlane.f32.xlu0 %v4403
    %v4407 = vpop.xlane.xlu0 %4406
    %v4408 = vmul.f32 %v4405, %v1428
    %v4409 = vmul.f32 %v4407, %v1428
    %v4410 = vadd.f32 %v4408, 1e-05
    %v4411 = vadd.f32 %v4409, 1e-05
    %v4412 = vrsqrt.pop %v4410
    %v4413 = vrsqrt.pop %v4411
    %v4414 = vmul.f32 %v4400, %v4412
    %v4415 = vmul.f32 %v4401, %v4413
    %v4416 = vld [vmem:[#allocation46] sm:$0x1]
    %v4418 = vlaneseq
    %v4419 = vshrl.u32 %v4418, 7
    %v4420 = vsub.s32 0, %v4419
    %v4421 = vrot.slane %v4416, %v4420
    %v4423 = vmul.f32 %v4414, %v4421
    %v4424 = vmul.f32 %v4415, %v4421
    %v4425 = vld [vmem:[#allocation47] sm:$0x1]
    %v4427 = vlaneseq
    %v4428 = vshrl.u32 %v4427, 7
    %v4429 = vsub.s32 0, %v4428
    %v4430 = vrot.slane %v4425, %v4429
    %v4432 = vadd.f32 %v4423, %v4430
    %v4433 = vadd.f32 %v4424, %v4430
    %v4434 = vmax.f32 %v4432, 0.0
    %v4435 = vmax.f32 %v4433, 0.0
    %4436 = vst [vmem:[#allocation65] sm:$0xff] %v4434
    %4437 = vst [vmem:[#allocation65 + $0x8] sm:$0xff] %v4435
    %v4438 = vld [vmem:[#allocation49] sm:$0xff]
    %v4439 = vld [vmem:[#allocation49 + $0x8] sm:$0xff]
    %v4440 = vld [vmem:[#allocation49 + $0x10] sm:$0xff]
    %v4441 = vld [vmem:[#allocation49 + $0x18] sm:$0xff]
    %v4442 = vld [vmem:[#allocation49 + $0x20] sm:$0xff]
    %v4443 = vld [vmem:[#allocation49 + $0x28] sm:$0xff]
    %v4444 = vld [vmem:[#allocation49 + $0x30] sm:$0xff]
    %v4445 = vld [vmem:[#allocation49 + $0x38] sm:$0xff]
    %v4446 = vld [vmem:[#allocation49 + $0x40] sm:$0xff]
    %v4447 = vld [vmem:[#allocation49 + $0x48] sm:$0xff]
    %v4448 = vld [vmem:[#allocation49 + $0x50] sm:$0xff]
    %v4449 = vld [vmem:[#allocation49 + $0x58] sm:$0xff]
    %v4450 = vld [vmem:[#allocation49 + $0x60] sm:$0xff]
    %v4451 = vld [vmem:[#allocation49 + $0x68] sm:$0xff]
    %v4452 = vld [vmem:[#allocation49 + $0x70] sm:$0xff]
    %v4453 = vld [vmem:[#allocation49 + $0x78] sm:$0xff]
    %v4454 = vld [vmem:[#allocation49 + $0x80] sm:$0xff]
    %v4455 = vld [vmem:[#allocation49 + $0x88] sm:$0xff]
    %v4456 = vld [vmem:[#allocation49 + $0x90] sm:$0xff]
    %v4457 = vld [vmem:[#allocation49 + $0x98] sm:$0xff]
    %v4458 = vld [vmem:[#allocation49 + $0xa0] sm:$0xff]
    %v4459 = vld [vmem:[#allocation49 + $0xa8] sm:$0xff]
    %v4460 = vld [vmem:[#allocation49 + $0xb0] sm:$0xff]
    %v4461 = vld [vmem:[#allocation49 + $0xb8] sm:$0xff]
    %v4462 = vld [vmem:[#allocation49 + $0xc0] sm:$0xff]
    %v4463 = vld [vmem:[#allocation49 + $0xc8] sm:$0xff]
    %v4464 = vld [vmem:[#allocation49 + $0xd0] sm:$0xff]
    %v4465 = vld [vmem:[#allocation49 + $0xd8] sm:$0xff]
    %v4466 = vld [vmem:[#allocation49 + $0xe0] sm:$0xff]
    %v4467 = vld [vmem:[#allocation49 + $0xe8] sm:$0xff]
    %v4468 = vld [vmem:[#allocation49 + $0xf0] sm:$0xff]
    %v4469 = vld [vmem:[#allocation49 + $0xf8] sm:$0xff]
    %v4470 = vld [vmem:[#allocation50] sm:$0x3]
    %v4472 = vlaneseq
    %v4473 = vshrl.u32 %v4472, 7
    %v4474 = vsub.s32 0, %v4473
    %v4475 = vrot.slane %v4470, %v4474
    %v4476 = vlaneseq
    %v4477 = vshrl.u32 %v4476, 7
    %v4478 = vsub.s32 1, %v4477
    %v4479 = vrot.slane %v4470, %v4478
    %4482 = vmatprep.subr.mxu0 %v4439
    %4483 = vmatpush1.msra.mxu0 %v4438
    %4484 = vmatprep.subr.mxu0 %v4441
    %4485 = vmatpush1.msra.mxu0 %v4440
    %4486 = vmatprep.subr.mxu0 %v4443
    %4487 = vmatpush1.msra.mxu0 %v4442
    %4488 = vmatprep.subr.mxu0 %v4445
    %4489 = vmatpush1.msra.mxu0 %v4444
    %4490 = vmatprep.subr.mxu0 %v4447
    %4491 = vmatpush1.msra.mxu0 %v4446
    %4492 = vmatprep.subr.mxu0 %v4449
    %4493 = vmatpush1.msra.mxu0 %v4448
    %4494 = vmatprep.subr.mxu0 %v4451
    %4495 = vmatpush1.msra.mxu0 %v4450
    %4496 = vmatprep.subr.mxu0 %v4453
    %4497 = vmatpush1.msra.mxu0 %v4452
    %4498 = vmatprep.subr.mxu0 %v4455
    %4499 = vmatpush1.msra.mxu0 %v4454
    %4500 = vmatprep.subr.mxu0 %v4457
    %4501 = vmatpush1.msra.mxu0 %v4456
    %4502 = vmatprep.subr.mxu0 %v4459
    %4503 = vmatpush1.msra.mxu0 %v4458
    %4504 = vmatprep.subr.mxu0 %v4461
    %4505 = vmatpush1.msra.mxu0 %v4460
    %4506 = vmatprep.subr.mxu0 %v4463
    %4507 = vmatpush1.msra.mxu0 %v4462
    %4508 = vmatprep.subr.mxu0 %v4465
    %4509 = vmatpush1.msra.mxu0 %v4464
    %4510 = vmatprep.subr.mxu0 %v4467
    %4511 = vmatpush1.msra.mxu0 %v4466
    %4512 = vmatprep.subr.mxu0 %v4469
    %4513 = vmatpush1.msra.mxu0 %v4468
    %4514 = vmatprep.subr.mxu0 0.0
    %4515 = vmatpush1.msra.mxu0 0.0
    %4516 = vmatprep.subr.mxu0 0.0
    %4517 = vmatpush1.msra.mxu0 0.0
    %4518 = vmatprep.subr.mxu0 0.0
    %4519 = vmatpush1.msra.mxu0 0.0
    %4520 = vmatprep.subr.mxu0 0.0
    %4521 = vmatpush1.msra.mxu0 0.0
    %4522 = vmatprep.subr.mxu0 0.0
    %4523 = vmatpush1.msra.mxu0 0.0
    %4524 = vmatprep.subr.mxu0 0.0
    %4525 = vmatpush1.msra.mxu0 0.0
    %4526 = vmatprep.subr.mxu0 0.0
    %4527 = vmatpush1.msra.mxu0 0.0
    %4528 = vmatprep.subr.mxu0 0.0
    %4529 = vmatpush1.msra.mxu0 0.0
    %4530 = vmatprep.subr.mxu0 0.0
    %4531 = vmatpush1.msra.mxu0 0.0
    %4532 = vmatprep.subr.mxu0 0.0
    %4533 = vmatpush1.msra.mxu0 0.0
    %4534 = vmatprep.subr.mxu0 0.0
    %4535 = vmatpush1.msra.mxu0 0.0
    %4536 = vmatprep.subr.mxu0 0.0
    %4537 = vmatpush1.msra.mxu0 0.0
    %4538 = vmatprep.subr.mxu0 0.0
    %4539 = vmatpush1.msra.mxu0 0.0
    %4540 = vmatprep.subr.mxu0 0.0
    %4541 = vmatpush1.msra.mxu0 0.0
    %4542 = vmatprep.subr.mxu0 0.0
    %4543 = vmatpush1.msra.mxu0 0.0
    %4544 = vmatprep.subr.mxu0 0.0
    %4545 = vmatpush1.msra.mxu0 0.0
    %4546 = vmatprep.mubr.f32.mxu0 0.0
    %4547 = vmatmul.mubr.f32.gmra.mrb[0].mxu0 %v1463
    %v4548 = vpop.f32.mrb[0].mxu0
    %v4549 = vadd.f32 %v4475, %v4548
    %v4550 = vpop.f32.mrb[0].mxu0
    %v4551 = vadd.f32 %v4479, %v4550
    %4552 = vmatprep.mubr.f32.mxu0 0.0
    %4553 = vmatmul.mubr.f32.gmra.mrb[0].mxu0 %v1464
    %v4554 = vpop.f32.mrb[0].mxu0
    %v4555 = vadd.f32 %v4475, %v4554
    %v4556 = vpop.f32.mrb[0].mxu0
    %v4557 = vadd.f32 %v4479, %v4556
    %4558 = vdwg.mxu0
    %v4559 = vmax.f32 %v4549, 0.0
    %v4560 = vmax.f32 %v4551, 0.0
    %v4561 = vmax.f32 %v4555, 0.0
    %v4562 = vmax.f32 %v4557, 0.0
    %v4563 = vld [vmem:[#allocation52] sm:$0x3]
    %v4565 = vlaneseq
    %v4566 = vshrl.u32 %v4565, 7
    %v4567 = vsub.s32 0, %v4566
    %v4568 = vrot.slane %v4563, %v4567
    %v4569 = vlaneseq
    %v4570 = vshrl.u32 %v4569, 7
    %v4571 = vsub.s32 1, %v4570
    %v4572 = vrot.slane %v4563, %v4571
    %v4575 = vmul.f32 %v4559, %v4568
    %v4576 = vmul.f32 %v4560, %v4572
    %v4577 = vmul.f32 %v4561, %v4568
    %v4578 = vmul.f32 %v4562, %v4572
    %v4579 = vadd.f32 %v4575, %v4576
    %4580 = vadd.xlane.f32.xlu0 %v4579
    %v4581 = vpop.xlane.xlu0 %4580
    %v4582 = vadd.f32 %v4577, %v4578
    %4583 = vadd.xlane.f32.xlu0 %v4582
    %v4584 = vpop.xlane.xlu0 %4583
    %v4585 = vld [vmem:[#allocation2] sm:$0x1]
    %v4587 = vlaneseq
    %v4588 = vshrl.u32 %v4587, 7
    %v4589 = vsub.s32 0, %v4588
    %v4590 = vrot.slane %v4585, %v4589
    %v4592 = vadd.f32 %v4581, %v4590
    %v4593 = vadd.f32 %v4584, %v4590
    %vm4594 = vcmask 7168
    %4595 = vst.msk [vmem:[%s93] sm:$0xff] %vm4594, %v4592
    %4596 = vst.msk [vmem:[%s93 + $0x8] sm:$0xff] %vm4594, %v4593
    %v4597 = vld [vmem:[#allocation53] sm:$0xff]
    %v4598 = vld [vmem:[#allocation53 + $0x8] sm:$0xff]
    %v4599 = vld [vmem:[#allocation53 + $0x10] sm:$0xff]
    %v4600 = vld [vmem:[#allocation53 + $0x18] sm:$0xff]
    %v4601 = vld [vmem:[#allocation53 + $0x20] sm:$0xff]
    %v4602 = vld [vmem:[#allocation53 + $0x28] sm:$0xff]
    %v4603 = vld [vmem:[#allocation53 + $0x30] sm:$0xff]
    %v4604 = vld [vmem:[#allocation53 + $0x38] sm:$0xff]
    %v4605 = vld [vmem:[#allocation53 + $0x40] sm:$0xff]
    %v4606 = vld [vmem:[#allocation53 + $0x48] sm:$0xff]
    %v4607 = vld [vmem:[#allocation53 + $0x50] sm:$0xff]
    %v4608 = vld [vmem:[#allocation53 + $0x58] sm:$0xff]
    %v4609 = vld [vmem:[#allocation53 + $0x60] sm:$0xff]
    %v4610 = vld [vmem:[#allocation53 + $0x68] sm:$0xff]
    %v4611 = vld [vmem:[#allocation53 + $0x70] sm:$0xff]
    %v4612 = vld [vmem:[#allocation53 + $0x78] sm:$0xff]
    %v4613 = vld [vmem:[#allocation53 + $0x80] sm:$0xff]
    %v4614 = vld [vmem:[#allocation53 + $0x88] sm:$0xff]
    %v4615 = vld [vmem:[#allocation53 + $0x90] sm:$0xff]
    %v4616 = vld [vmem:[#allocation53 + $0x98] sm:$0xff]
    %v4617 = vld [vmem:[#allocation53 + $0xa0] sm:$0xff]
    %v4618 = vld [vmem:[#allocation53 + $0xa8] sm:$0xff]
    %v4619 = vld [vmem:[#allocation53 + $0xb0] sm:$0xff]
    %v4620 = vld [vmem:[#allocation53 + $0xb8] sm:$0xff]
    %v4621 = vld [vmem:[#allocation53 + $0xc0] sm:$0xff]
    %v4622 = vld [vmem:[#allocation53 + $0xc8] sm:$0xff]
    %v4623 = vld [vmem:[#allocation53 + $0xd0] sm:$0xff]
    %v4624 = vld [vmem:[#allocation53 + $0xd8] sm:$0xff]
    %v4625 = vld [vmem:[#allocation53 + $0xe0] sm:$0xff]
    %v4626 = vld [vmem:[#allocation53 + $0xe8] sm:$0xff]
    %v4627 = vld [vmem:[#allocation53 + $0xf0] sm:$0xff]
    %v4628 = vld [vmem:[#allocation53 + $0xf8] sm:$0xff]
    %v4629 = vld [vmem:[#allocation55] sm:$0x3]
    %v4631 = vlaneseq
    %v4632 = vshrl.u32 %v4631, 7
    %v4633 = vsub.s32 0, %v4632
    %v4634 = vrot.slane %v4629, %v4633
    %v4635 = vlaneseq
    %v4636 = vshrl.u32 %v4635, 7
    %v4637 = vsub.s32 1, %v4636
    %v4638 = vrot.slane %v4629, %v4637
    %4641 = vmatprep.subr.mxu0 %v4598
    %4642 = vmatpush1.msra.mxu0 %v4597
    %4643 = vmatprep.subr.mxu0 %v4600
    %4644 = vmatpush1.msra.mxu0 %v4599
    %4645 = vmatprep.subr.mxu0 %v4602
    %4646 = vmatpush1.msra.mxu0 %v4601
    %4647 = vmatprep.subr.mxu0 %v4604
    %4648 = vmatpush1.msra.mxu0 %v4603
    %4649 = vmatprep.subr.mxu0 %v4606
    %4650 = vmatpush1.msra.mxu0 %v4605
    %4651 = vmatprep.subr.mxu0 %v4608
    %4652 = vmatpush1.msra.mxu0 %v4607
    %4653 = vmatprep.subr.mxu0 %v4610
    %4654 = vmatpush1.msra.mxu0 %v4609
    %4655 = vmatprep.subr.mxu0 %v4612
    %4656 = vmatpush1.msra.mxu0 %v4611
    %4657 = vmatprep.subr.mxu0 %v4614
    %4658 = vmatpush1.msra.mxu0 %v4613
    %4659 = vmatprep.subr.mxu0 %v4616
    %4660 = vmatpush1.msra.mxu0 %v4615
    %4661 = vmatprep.subr.mxu0 %v4618
    %4662 = vmatpush1.msra.mxu0 %v4617
    %4663 = vmatprep.subr.mxu0 %v4620
    %4664 = vmatpush1.msra.mxu0 %v4619
    %4665 = vmatprep.subr.mxu0 %v4622
    %4666 = vmatpush1.msra.mxu0 %v4621
    %4667 = vmatprep.subr.mxu0 %v4624
    %4668 = vmatpush1.msra.mxu0 %v4623
    %4669 = vmatprep.subr.mxu0 %v4626
    %4670 = vmatpush1.msra.mxu0 %v4625
    %4671 = vmatprep.subr.mxu0 %v4628
    %4672 = vmatpush1.msra.mxu0 %v4627
    %4673 = vmatprep.subr.mxu0 0.0
    %4674 = vmatpush1.msra.mxu0 0.0
    %4675 = vmatprep.subr.mxu0 0.0
    %4676 = vmatpush1.msra.mxu0 0.0
    %4677 = vmatprep.subr.mxu0 0.0
    %4678 = vmatpush1.msra.mxu0 0.0
    %4679 = vmatprep.subr.mxu0 0.0
    %4680 = vmatpush1.msra.mxu0 0.0
    %4681 = vmatprep.subr.mxu0 0.0
    %4682 = vmatpush1.msra.mxu0 0.0
    %4683 = vmatprep.subr.mxu0 0.0
    %4684 = vmatpush1.msra.mxu0 0.0
    %4685 = vmatprep.subr.mxu0 0.0
    %4686 = vmatpush1.msra.mxu0 0.0
    %4687 = vmatprep.subr.mxu0 0.0
    %4688 = vmatpush1.msra.mxu0 0.0
    %4689 = vmatprep.subr.mxu0 0.0
    %4690 = vmatpush1.msra.mxu0 0.0
    %4691 = vmatprep.subr.mxu0 0.0
    %4692 = vmatpush1.msra.mxu0 0.0
    %4693 = vmatprep.subr.mxu0 0.0
    %4694 = vmatpush1.msra.mxu0 0.0
    %4695 = vmatprep.subr.mxu0 0.0
    %4696 = vmatpush1.msra.mxu0 0.0
    %4697 = vmatprep.subr.mxu0 0.0
    %4698 = vmatpush1.msra.mxu0 0.0
    %4699 = vmatprep.subr.mxu0 0.0
    %4700 = vmatpush1.msra.mxu0 0.0
    %4701 = vmatprep.subr.mxu0 0.0
    %4702 = vmatpush1.msra.mxu0 0.0
    %4703 = vmatprep.subr.mxu0 0.0
    %4704 = vmatpush1.msra.mxu0 0.0
    %4705 = vmatprep.mubr.f32.mxu0 0.0
    %4706 = vmatmul.mubr.f32.gmra.mrb[0].mxu0 %v1900
    %v4707 = vpop.f32.mrb[0].mxu0
    %v4708 = vadd.f32 %v4634, %v4707
    %v4709 = vpop.f32.mrb[0].mxu0
    %v4710 = vadd.f32 %v4638, %v4709
    %4711 = vmatprep.mubr.f32.mxu0 0.0
    %4712 = vmatmul.mubr.f32.gmra.mrb[0].mxu0 %v1901
    %v4713 = vpop.f32.mrb[0].mxu0
    %v4714 = vadd.f32 %v4634, %v4713
    %v4715 = vpop.f32.mrb[0].mxu0
    %v4716 = vadd.f32 %v4638, %v4715
    %4717 = vmatprep.mubr.f32.mxu0 0.0
    %4718 = vmatmul.mubr.f32.gmra.mrb[0].mxu0 %v1902
    %v4719 = vpop.f32.mrb[0].mxu0
    %v4720 = vadd.f32 %v4634, %v4719
    %v4721 = vpop.f32.mrb[0].mxu0
    %v4722 = vadd.f32 %v4638, %v4721
    %4723 = vmatprep.mubr.f32.mxu0 0.0
    %4724 = vmatmul.mubr.f32.gmra.mrb[0].mxu0 %v1903
    %v4725 = vpop.f32.mrb[0].mxu0
    %v4726 = vadd.f32 %v4634, %v4725
    %v4727 = vpop.f32.mrb[0].mxu0
    %v4728 = vadd.f32 %v4638, %v4727
    %4729 = vdwg.mxu0
    %v4730 = vmax.f32 %v4708, 0.0
    %v4731 = vmax.f32 %v4710, 0.0
    %v4732 = vmax.f32 %v4714, 0.0
    %v4733 = vmax.f32 %v4716, 0.0
    %v4734 = vmax.f32 %v4720, 0.0
    %v4735 = vmax.f32 %v4722, 0.0
    %v4736 = vmax.f32 %v4726, 0.0
    %v4737 = vmax.f32 %v4728, 0.0
    %v4738 = vld [vmem:[#allocation56] sm:$0x3]
    %v4740 = vlaneseq
    %v4741 = vshrl.u32 %v4740, 7
    %v4742 = vsub.s32 0, %v4741
    %v4743 = vrot.slane %v4738, %v4742
    %v4744 = vlaneseq
    %v4745 = vshrl.u32 %v4744, 7
    %v4746 = vsub.s32 1, %v4745
    %v4747 = vrot.slane %v4738, %v4746
    %v4750 = vmul.f32 %v4730, %v4743
    %v4751 = vmul.f32 %v4731, %v4747
    %v4752 = vmul.f32 %v4732, %v4743
    %v4753 = vmul.f32 %v4733, %v4747
    %v4754 = vmul.f32 %v4734, %v4743
    %v4755 = vmul.f32 %v4735, %v4747
    %v4756 = vmul.f32 %v4736, %v4743
    %v4757 = vmul.f32 %v4737, %v4747
    %v4758 = vadd.f32 %v4750, %v4751
    %4759 = vadd.xlane.f32.xlu0 %v4758
    %v4760 = vpop.xlane.xlu0 %4759
    %v4761 = vadd.f32 %v4752, %v4753
    %4762 = vadd.xlane.f32.xlu0 %v4761
    %v4763 = vpop.xlane.xlu0 %4762
    %v4764 = vadd.f32 %v4754, %v4755
    %4765 = vadd.xlane.f32.xlu0 %v4764
    %v4766 = vpop.xlane.xlu0 %4765
    %v4767 = vadd.f32 %v4756, %v4757
    %4768 = vadd.xlane.f32.xlu0 %v4767
    %v4769 = vpop.xlane.xlu0 %4768
    %v4770 = vld [vmem:[#allocation3] sm:$0x1]
    %v4772 = vlaneseq
    %v4773 = vshrl.u32 %v4772, 7
    %v4774 = vsub.s32 0, %v4773
    %v4775 = vrot.slane %v4770, %v4774
    %v4777 = vadd.f32 %v4760, %v4775
    %v4778 = vadd.f32 %v4763, %v4775
    %v4779 = vadd.f32 %v4766, %v4775
    %v4780 = vadd.f32 %v4769, %v4775
    %4781 = vst.msk [vmem:[%s95] sm:$0xff] %vm4594, %v4777
    %4782 = vst.msk [vmem:[%s95 + $0x8] sm:$0xff] %vm4594, %v4778
    %4783 = vst.msk [vmem:[%s95 + $0x10] sm:$0xff] %vm4594, %v4779
    %4784 = vst.msk [vmem:[%s95 + $0x18] sm:$0xff] %vm4594, %v4780
    %v4785 = vld [vmem:[#allocation58] sm:$0xff]
    %v4786 = vld [vmem:[#allocation58 + $0x8] sm:$0xff]
    %v4787 = vld [vmem:[#allocation58 + $0x10] sm:$0xff]
    %v4788 = vld [vmem:[#allocation58 + $0x18] sm:$0xff]
    %v4789 = vld [vmem:[#allocation58 + $0x20] sm:$0xff]
    %v4790 = vld [vmem:[#allocation58 + $0x28] sm:$0xff]
    %v4791 = vld [vmem:[#allocation58 + $0x30] sm:$0xff]
    %v4792 = vld [vmem:[#allocation58 + $0x38] sm:$0xff]
    %v4793 = vld [vmem:[#allocation58 + $0x40] sm:$0xff]
    %v4794 = vld [vmem:[#allocation58 + $0x48] sm:$0xff]
    %v4795 = vld [vmem:[#allocation58 + $0x50] sm:$0xff]
    %v4796 = vld [vmem:[#allocation58 + $0x58] sm:$0xff]
    %v4797 = vld [vmem:[#allocation58 + $0x60] sm:$0xff]
    %v4798 = vld [vmem:[#allocation58 + $0x68] sm:$0xff]
    %v4799 = vld [vmem:[#allocation58 + $0x70] sm:$0xff]
    %v4800 = vld [vmem:[#allocation58 + $0x78] sm:$0xff]
    %v4801 = vld [vmem:[#allocation58 + $0x80] sm:$0xff]
    %v4802 = vld [vmem:[#allocation58 + $0x88] sm:$0xff]
    %v4803 = vld [vmem:[#allocation58 + $0x90] sm:$0xff]
    %v4804 = vld [vmem:[#allocation58 + $0x98] sm:$0xff]
    %v4805 = vld [vmem:[#allocation58 + $0xa0] sm:$0xff]
    %v4806 = vld [vmem:[#allocation58 + $0xa8] sm:$0xff]
    %v4807 = vld [vmem:[#allocation58 + $0xb0] sm:$0xff]
    %v4808 = vld [vmem:[#allocation58 + $0xb8] sm:$0xff]
    %v4809 = vld [vmem:[#allocation58 + $0xc0] sm:$0xff]
    %v4810 = vld [vmem:[#allocation58 + $0xc8] sm:$0xff]
    %v4811 = vld [vmem:[#allocation58 + $0xd0] sm:$0xff]
    %v4812 = vld [vmem:[#allocation58 + $0xd8] sm:$0xff]
    %v4813 = vld [vmem:[#allocation58 + $0xe0] sm:$0xff]
    %v4814 = vld [vmem:[#allocation58 + $0xe8] sm:$0xff]
    %v4815 = vld [vmem:[#allocation58 + $0xf0] sm:$0xff]
    %v4816 = vld [vmem:[#allocation58 + $0xf8] sm:$0xff]
    %v4817 = vld [vmem:[#allocation59] sm:$0x3]
    %v4819 = vlaneseq
    %v4820 = vshrl.u32 %v4819, 7
    %v4821 = vsub.s32 0, %v4820
    %v4822 = vrot.slane %v4817, %v4821
    %v4823 = vlaneseq
    %v4824 = vshrl.u32 %v4823, 7
    %v4825 = vsub.s32 1, %v4824
    %v4826 = vrot.slane %v4817, %v4825
    %4829 = vmatprep.subr.mxu0 %v4786
    %4830 = vmatpush1.msra.mxu0 %v4785
    %4831 = vmatprep.subr.mxu0 %v4788
    %4832 = vmatpush1.msra.mxu0 %v4787
    %4833 = vmatprep.subr.mxu0 %v4790
    %4834 = vmatpush1.msra.mxu0 %v4789
    %4835 = vmatprep.subr.mxu0 %v4792
    %4836 = vmatpush1.msra.mxu0 %v4791
    %4837 = vmatprep.subr.mxu0 %v4794
    %4838 = vmatpush1.msra.mxu0 %v4793
    %4839 = vmatprep.subr.mxu0 %v4796
    %4840 = vmatpush1.msra.mxu0 %v4795
    %4841 = vmatprep.subr.mxu0 %v4798
    %4842 = vmatpush1.msra.mxu0 %v4797
    %4843 = vmatprep.subr.mxu0 %v4800
    %4844 = vmatpush1.msra.mxu0 %v4799
    %4845 = vmatprep.subr.mxu0 %v4802
    %4846 = vmatpush1.msra.mxu0 %v4801
    %4847 = vmatprep.subr.mxu0 %v4804
    %4848 = vmatpush1.msra.mxu0 %v4803
    %4849 = vmatprep.subr.mxu0 %v4806
    %4850 = vmatpush1.msra.mxu0 %v4805
    %4851 = vmatprep.subr.mxu0 %v4808
    %4852 = vmatpush1.msra.mxu0 %v4807
    %4853 = vmatprep.subr.mxu0 %v4810
    %4854 = vmatpush1.msra.mxu0 %v4809
    %4855 = vmatprep.subr.mxu0 %v4812
    %4856 = vmatpush1.msra.mxu0 %v4811
    %4857 = vmatprep.subr.mxu0 %v4814
    %4858 = vmatpush1.msra.mxu0 %v4813
    %4859 = vmatprep.subr.mxu0 %v4816
    %4860 = vmatpush1.msra.mxu0 %v4815
    %4861 = vmatprep.subr.mxu0 0.0
    %4862 = vmatpush1.msra.mxu0 0.0
    %4863 = vmatprep.subr.mxu0 0.0
    %4864 = vmatpush1.msra.mxu0 0.0
    %4865 = vmatprep.subr.mxu0 0.0
    %4866 = vmatpush1.msra.mxu0 0.0
    %4867 = vmatprep.subr.mxu0 0.0
    %4868 = vmatpush1.msra.mxu0 0.0
    %4869 = vmatprep.subr.mxu0 0.0
    %4870 = vmatpush1.msra.mxu0 0.0
    %4871 = vmatprep.subr.mxu0 0.0
    %4872 = vmatpush1.msra.mxu0 0.0
    %4873 = vmatprep.subr.mxu0 0.0
    %4874 = vmatpush1.msra.mxu0 0.0
    %4875 = vmatprep.subr.mxu0 0.0
    %4876 = vmatpush1.msra.mxu0 0.0
    %4877 = vmatprep.subr.mxu0 0.0
    %4878 = vmatpush1.msra.mxu0 0.0
    %4879 = vmatprep.subr.mxu0 0.0
    %4880 = vmatpush1.msra.mxu0 0.0
    %4881 = vmatprep.subr.mxu0 0.0
    %4882 = vmatpush1.msra.mxu0 0.0
    %4883 = vmatprep.subr.mxu0 0.0
    %4884 = vmatpush1.msra.mxu0 0.0
    %4885 = vmatprep.subr.mxu0 0.0
    %4886 = vmatpush1.msra.mxu0 0.0
    %4887 = vmatprep.subr.mxu0 0.0
    %4888 = vmatpush1.msra.mxu0 0.0
    %4889 = vmatprep.subr.mxu0 0.0
    %4890 = vmatpush1.msra.mxu0 0.0
    %4891 = vmatprep.subr.mxu0 0.0
    %4892 = vmatpush1.msra.mxu0 0.0
    %4893 = vmatprep.mubr.f32.mxu0 0.0
    %4894 = vmatmul.mubr.f32.gmra.mrb[0].mxu0 %v4434
    %v4895 = vpop.f32.mrb[0].mxu0
    %v4896 = vadd.f32 %v4822, %v4895
    %v4897 = vpop.f32.mrb[0].mxu0
    %v4898 = vadd.f32 %v4826, %v4897
    %4899 = vmatprep.mubr.f32.mxu0 0.0
    %4900 = vmatmul.mubr.f32.gmra.mrb[0].mxu0 %v4435
    %v4901 = vpop.f32.mrb[0].mxu0
    %v4902 = vadd.f32 %v4822, %v4901
    %v4903 = vpop.f32.mrb[0].mxu0
    %v4904 = vadd.f32 %v4826, %v4903
    %4905 = vdwg.mxu0
    %v4906 = vmax.f32 %v4896, 0.0
    %v4907 = vmax.f32 %v4898, 0.0
    %v4908 = vmax.f32 %v4902, 0.0
    %v4909 = vmax.f32 %v4904, 0.0
    %v4910 = vld [vmem:[#allocation61] sm:$0x3]
    %v4912 = vlaneseq
    %v4913 = vshrl.u32 %v4912, 7
    %v4914 = vsub.s32 0, %v4913
    %v4915 = vrot.slane %v4910, %v4914
    %v4916 = vlaneseq
    %v4917 = vshrl.u32 %v4916, 7
    %v4918 = vsub.s32 1, %v4917
    %v4919 = vrot.slane %v4910, %v4918
    %v4922 = vmul.f32 %v4906, %v4915
    %v4923 = vmul.f32 %v4907, %v4919
    %v4924 = vmul.f32 %v4908, %v4915
    %v4925 = vmul.f32 %v4909, %v4919
    %v4926 = vadd.f32 %v4922, %v4923
    %4927 = vadd.xlane.f32.xlu0 %v4926
    %v4928 = vpop.xlane.xlu0 %4927
    %v4929 = vadd.f32 %v4924, %v4925
    %4930 = vadd.xlane.f32.xlu0 %v4929
    %v4931 = vpop.xlane.xlu0 %4930
    %v4932 = vld [vmem:[#allocation4] sm:$0x1]
    %v4934 = vlaneseq
    %v4935 = vshrl.u32 %v4934, 7
    %v4936 = vsub.s32 0, %v4935
    %v4937 = vrot.slane %v4932, %v4936
    %v4939 = vadd.f32 %v4928, %v4937
    %v4940 = vadd.f32 %v4931, %v4937
    %4941 = vst.msk [vmem:[%s97] sm:$0xff] %vm4594, %v4939
    %4942 = vst.msk [vmem:[%s97 + $0x8] sm:$0xff] %vm4594, %v4940
    // Predicated region
    $region322: #{forward.1} parent=1 // pred_check
      _
    $region323: #{forward.1} parent=1 // pred_check_branch
      %4944 = sbr.rel (0) target = $region325
    $region324: #{forward.1} parent=1 // pred_region
      %s4946 = ssub.s32 256, 256
      %4947 = vsyncadd [#allocation7], %s4946
      %s4948 = sshll.u32 [#allocation62], 4
      %s4949 = int_to_ptr.vmem [resolvable:$true] %s4948
      %4954 = dma.vmem_to_hbm [thread:$0]  %s4949, 256, %s87, [#allocation7], 128, 128, 8
    $region325: #{forward.1} parent=1 // pred_fallthru
      _
    // Predicated region
    $region326: #{forward.1} parent=1 // pred_check
      _
    $region327: #{forward.1} parent=1 // pred_check_branch
      %4956 = sbr.rel (0) target = $region329
    $region328: #{forward.1} parent=1 // pred_region
      %s4958 = ssub.s32 512, 512
      %4959 = vsyncadd [#allocation64], %s4958
      %s4960 = sshll.u32 [#allocation63], 4
      %s4961 = int_to_ptr.vmem [resolvable:$true] %s4960
      %4966 = dma.vmem_to_hbm [thread:$0]  %s4961, 512, %s89, [#allocation64], 128, 128, 8
    $region329: #{forward.1} parent=1 // pred_fallthru
      _
    // Predicated region
    $region330: #{forward.1} parent=1 // pred_check
      _
    $region331: #{forward.1} parent=1 // pred_check_branch
      %4968 = sbr.rel (0) target = $region333
    $region332: #{forward.1} parent=1 // pred_region
      %s4970 = ssub.s32 256, 256
      %4971 = vsyncadd [#allocation64], %s4970
      %s4972 = sshll.u32 [#allocation65], 4
      %s4973 = int_to_ptr.vmem [resolvable:$true] %s4972
      %4978 = dma.vmem_to_hbm [thread:$0]  %s4973, 256, %s91, [#allocation64], 128, 128, 8
    $region333: #{forward.1} parent=1 // pred_fallthru
      _
    // Predicated region
    $region334: #{forward.1} parent=1 // pred_check
      _
    $region335: #{forward.1} parent=1 // pred_check_branch
      %4980 = sbr.rel (0) target = $region337
    $region336: #{forward.1} parent=1 // pred_region
      _
    $region337: #{forward.1} parent=1 // pred_fallthru
      _
    // Predicated region
    $region338: #{forward.1} parent=1 // pred_check
      _
    $region339: #{forward.1} parent=1 // pred_check_branch
      %4982 = sbr.rel (0) target = $region341
    $region340: #{forward.1} parent=1 // pred_region
      _
    $region341: #{forward.1} parent=1 // pred_fallthru
      _
    // Predicated region
    $region342: #{forward.1} parent=1 // pred_check
      _
    $region343: #{forward.1} parent=1 // pred_check_branch
      %4984 = sbr.rel (0) target = $region345
    $region344: #{forward.1} parent=1 // pred_region
      _
    $region345: #{forward.1} parent=1 // pred_fallthru
      _
    // Predicated region
    $region346: #{forward.1} parent=1 // pred_check
      _
    $region347: #{forward.1} parent=1 // pred_check_branch
      %4986 = sbr.rel (0) target = $region349
    $region348: #{forward.1} parent=1 // pred_region
      %4987 = dma.done [#allocation7], 256
    $region349: #{forward.1} parent=1 // pred_fallthru
      _
    // Predicated region
    $region350: #{forward.1} parent=1 // pred_check
      _
    $region351: #{forward.1} parent=1 // pred_check_branch
      %4989 = sbr.rel (0) target = $region353
    $region352: #{forward.1} parent=1 // pred_region
      %4990 = dma.done [#allocation64], 512
    $region353: #{forward.1} parent=1 // pred_fallthru
      _
    // Predicated region
    $region354: #{forward.1} parent=1 // pred_check
      _
    $region355: #{forward.1} parent=1 // pred_check_branch
      %4992 = sbr.rel (0) target = $region357
    $region356: #{forward.1} parent=1 // pred_region
      %4993 = dma.done [#allocation64], 256
    $region357: #{forward.1} parent=1 // pred_fallthru
      _
    // Predicated region
    $region358: #{forward.1} parent=1 // pred_check
      _
    $region359: #{forward.1} parent=1 // pred_check_branch
      %4995 = sbr.rel (0) target = $region361
    $region360: #{forward.1} parent=1 // pred_region
      _
    $region361: #{forward.1} parent=1 // pred_fallthru
      _
    // Predicated region
    $region362: #{forward.1} parent=1 // pred_check
      _
    $region363: #{forward.1} parent=1 // pred_check_branch
      %4997 = sbr.rel (0) target = $region365
    $region364: #{forward.1} parent=1 // pred_region
      _
    $region365: #{forward.1} parent=1 // pred_fallthru
      _
    // Predicated region
    $region366: #{forward.1} parent=1 // pred_check
      _
    $region367: #{forward.1} parent=1 // pred_check_branch
      %4999 = sbr.rel (0) target = $region369
    $region368: #{forward.1} parent=1 // pred_region
      _
    $region369: #{forward.1} parent=1 // pred_fallthru
      _
    %5000 = vsyncpa [#allocation6], 1
    %5001 = vsyncpa [#allocation9], 1
    %5002 = vsyncpa [#allocation12], 1
    %5003 = vsyncpa [#allocation15], 1
    %5004 = vsyncpa [#allocation18], 1
    %5005 = vsyncpa [#allocation21], 1
    %5006 = vsyncpa [#allocation24], 1
    %5007 = vsyncpa [#allocation27], 1
    %5008 = vsyncpa [#allocation30], 1
    %5009 = vsyncpa [#allocation33], 1
    %5010 = vsyncpa [#allocation36], 1
    %5011 = vsyncpa [#allocation39], 1
    %5012 = vsyncpa [#allocation42], 1
    %5013 = vsyncpa [#allocation45], 1
    %5014 = vsyncpa [#allocation48], 1
    %5015 = vsyncpa [#allocation51], 1
    %5016 = vsyncpa [#allocation54], 1
    %5017 = vsyncpa [#allocation57], 1
    %5018 = vsyncpa [#allocation60], 1
    %5019 = vsyncpa [#allocation7], 1
    %5020 = vsyncpa [#allocation64], 1

</llo_original>
